<compile_context>
chip_gen: v7x
topology: tpu7x:2x2x1
jax: 0.10.0
libtpu: 0.0.40
codegen_flags: <defaults>
</compile_context>

<pallas_src>
import functools

import numpy as np
import jax
import jax.numpy as jnp
from jax.experimental import pallas as pl
from jax.experimental.pallas import tpu as pltpu

NEG_SLOPE = 0.2
KSIZE = 4
STRIDE = 2
PAD = 1
OUT_LANES = 128       # lane-dense classifier head (pad cout=1 -> 128 columns)
B_TILE = 16           # images per grid step; (B_TILE, 128) = one native bf16 tile


# ---------------------------------------------------------------------------
# Fused Pallas kernel: whole conv stack for B_TILE images, VMEM-resident.
#
# Activation layout (input of layer l), flattened even/odd padded rows:
#   buf[0, e*B + b, w*C + c] = x_pad[2*e    , w, c] of image b  ("even" rows;
#                              e = 0 is the top zero border)
#   buf[1, o*B + b, w*C + c] = x_pad[2*o + 1, w, c] of image b  ("odd" rows;
#                              o = H/2 is the bottom zero border)
# where x_pad is only height-padded (width padding is folded into the weights).
# The 4 kernel-row taps of a 4x4/stride-2 conv become 4 CONTIGUOUS slices:
#   ki -> buf[ki % 2, (ki // 2)*B : (ki // 2 + Ho)*B, :]
# and GEMM output rows (m = ho*B + b) scatter back into the next layer's
# buffers as contiguous (B,128) blocks, i.e. whole bf16 tiles.
# ---------------------------------------------------------------------------
def _fused_disc_kernel(*refs, layer_dims, b_tile):
    n_layers = len(layer_dims)
    B = b_tile
    x_ref = refs[0]                                  # (2, (Ho0+1)*B, 128) bf16
    w_refs = refs[1:1 + n_layers]                    # (4, 128, 128) bf16 each
    b_refs = refs[1 + n_layers:1 + 2 * n_layers]     # (1, ncols) f32 each
    out_ref = refs[1 + 2 * n_layers]                 # (Ho_last*B, 128) f32
    act_refs = refs[2 + 2 * n_layers:]               # (2, (Ho_l+1)*B, 128) bf16

    # Zero ONLY the 1-row top/bottom borders of every intermediate scratch,
    # every grid step (no program_id guard: wrong under megacore "parallel").
    # Interiors are fully overwritten below.
    for a in act_refs:
        z = jnp.zeros((B, a.shape[2]), a.dtype)
        a[0, 0:B, :] = z                             # even buffer, e = 0 (top)
        a[1, a.shape[1] - B:a.shape[1], :] = z       # odd buffer, o = H/2 (bottom)

    src = x_ref
    for l, (H, W, C, Ho, Wo, Co) in enumerate(layer_dims):
        ncols = w_refs[l].shape[2]                   # Wo*Co (last layer padded to 128)
        M = Ho * B
        # Bias folded into the accumulator init (no trailing bias add).
        acc = jnp.broadcast_to(b_refs[l][...], (M, ncols)).astype(jnp.float32)
        # 4x4/s2/p1 conv == 4 accumulated lane-dense (M,128)@(128,128) matmuls,
        # one per kernel row ki.  Width padding is inside the Toeplitz weights,
        # so every read below is a full, contiguous, tile-aligned slice.
        for ki in range(KSIZE):
            off = (ki // 2) * B
            rows = src[ki % 2, off:off + M, :]       # (M, 128) bf16, contiguous
            acc = acc + jnp.dot(rows, w_refs[l][ki],
                                preferred_element_type=jnp.float32)
        if l < n_layers - 1:
            act = jnp.where(acc >= 0.0, acc, acc * NEG_SLOPE)   # LeakyReLU(0.2)
            act = act.astype(jnp.bfloat16)           # cast once; scratch is bf16
            nxt = act_refs[l]
            # Output row ho of this layer is input row ho of the next layer:
            #   ho even -> next ODD  buffer index ho//2
            #   ho odd  -> next EVEN buffer index (ho+1)//2
            # Each block is one (B,128) native bf16 tile, fully aligned.
            for j in range(Ho // 2):
                nxt[1, j * B:(j + 1) * B, :] = act[(2 * j) * B:(2 * j + 1) * B, :]
                nxt[0, (j + 1) * B:(j + 2) * B, :] = \
                    act[(2 * j + 1) * B:(2 * j + 2) * B, :]
            src = nxt
        else:
            out_ref[...] = acc.astype(out_ref.dtype)  # classifier, no activation


# ---------------------------------------------------------------------------
# Parameter construction / hoisted packing
# ---------------------------------------------------------------------------
def spectral_normalize(w, key, n_power_iterations=1, eps=1e-12):
    """torch.nn.utils.spectral_norm (1 power iteration per forward).
    TODO(synk): torch persists u across forwards (stateful buffer); here u is a
    fixed deterministic draw, so sigma matches a fresh-u single-iteration
    estimate rather than the converged persistent one."""
    cout = w.shape[0]
    w_mat = w.reshape(cout, -1)
    u = jax.random.normal(key, (cout,), dtype=w.dtype)
    u = u / jnp.maximum(jnp.linalg.norm(u), eps)
    v = None
    for _ in range(n_power_iterations):
        v = w_mat.T @ u
        v = v / jnp.maximum(jnp.linalg.norm(v), eps)
        u = w_mat @ v
        u = u / jnp.maximum(jnp.linalg.norm(u), eps)
    sigma = u @ (w_mat @ v)
    return w / sigma


def init_params(key, num_classes, ndf):
    chans = [num_classes, ndf, ndf * 2, ndf * 4, ndf * 8, 1]
    params = []
    for i in range(5):
        cin, cout = chans[i], chans[i + 1]
        key, kw_, kb_, ku_ = jax.random.split(key, 4)
        fan_in = cin * KSIZE * KSIZE
        bound = 1.0 / np.sqrt(fan_in)
        w = jax.random.uniform(kw_, (cout, cin, KSIZE, KSIZE),
                               minval=-bound, maxval=bound, dtype=jnp.float32)
        b = jax.random.uniform(kb_, (cout,),
                               minval=-bound, maxval=bound, dtype=jnp.float32)
        params.append((spectral_normalize(w, ku_), b))
    return params


def _build_toeplitz_weight(w_sn, in_w, out_w):
    """(Cout,Cin,4,4) -> (4, in_w*Cin, out_w*Cout) block-Toeplitz bf16, with the
    width zero-padding folded in (taps that would read the boundary pixel are
    dropped), so the GEMM K dim is exactly in_w*Cin (128 in this config)."""
    w = np.asarray(w_sn, dtype=np.float32)
    co, ci, kh, kw = w.shape
    big = np.zeros((kh, in_w * ci, out_w * co), np.float32)
    for ki in range(kh):
        for kj in range(kw):
            wk = w[:, :, ki, kj].T                      # (Cin, Cout)
            for ow in range(out_w):
                iw = STRIDE * ow + kj - PAD             # input col; OOB taps dropped
                if 0 <= iw < in_w:
                    big[ki, iw * ci:(iw + 1) * ci, ow * co:(ow + 1) * co] = wk
    return jnp.asarray(big, dtype=jnp.bfloat16)


def prepare_params(params, in_hw):
    """Hoisted (once-per-model) packing: bf16 block-Toeplitz weights with width
    padding folded in, pre-tiled f32 bias rows, and static per-layer geometry."""
    h, w = in_hw
    layer_dims, toeplitz_ws, bias_rows = [], [], []
    for (w_sn, b) in params:
        cout, cin, _, _ = w_sn.shape
        ho, wo = h // 2, w // 2
        layer_dims.append((h, w, cin, ho, wo, cout))
        toeplitz_ws.append(_build_toeplitz_weight(w_sn, w, wo))
        bias_rows.append(jnp.tile(b.astype(jnp.float32), wo).reshape(1, wo * cout))
        h, w = ho, wo
    # Lane-dense classifier head: pad the final GEMM output columns to 128 so
    # the kernel's only HBM store is a full-lane (unmasked) store.
    n_last = toeplitz_ws[-1].shape[2]
    if n_last < OUT_LANES:
        pad = OUT_LANES - n_last
        toeplitz_ws[-1] = jnp.pad(toeplitz_ws[-1], ((0, 0), (0, 0), (0, pad)))
        bias_rows[-1] = jnp.pad(bias_rows[-1], ((0, 0), (0, pad)))
    return tuple(layer_dims), toeplitz_ws, bias_rows


# ---------------------------------------------------------------------------
# Forward pass wrapper
# ---------------------------------------------------------------------------
def fc_discriminator_norm(x_nchw, prepped, b_tile=B_TILE):
    """x_nchw: (N, num_classes, H, W) -> (N, 1, H/32, W/32) logits (f32)."""
    layer_dims, ws, bs = prepped
    N = x_nchw.shape[0]
    H0, W0, C0, Ho0, _, _ = layer_dims[0]
    _, _, _, Ho_l, Wo_l, Co_l = layer_dims[-1]
    n_last = ws[-1].shape[2]
    K0 = W0 * C0

    # Pad the batch up to a multiple of the batch tile.
    Np = ((N + b_tile - 1) // b_tile) * b_tile
    if Np != N:
        x_nchw = jnp.pad(x_nchw, ((0, Np - N), (0, 0), (0, 0), (0, 0)))
    G = Np // b_tile

    # One-time boundary LAYOUT plumbing (no compute hoisted here): NCHW ->
    # lane-dense rows (H, N, W*C) bf16, split into even/odd height-padded rows,
    # group the batch into tiles and flatten to the kernel's activation layout.
    x_rows = (jnp.transpose(x_nchw, (2, 0, 3, 1))          # (H, N, W, C)
              .reshape(H0, Np, K0).astype(jnp.bfloat16))
    zrow = jnp.zeros((1, Np, K0), jnp.bfloat16)
    even = jnp.concatenate([zrow, x_rows[1::2]], axis=0)   # padded rows 0,2,..,H
    odd = jnp.concatenate([x_rows[0::2], zrow], axis=0)    # padded rows 1,3,..,H+1
    xp = jnp.stack([even, odd], axis=0)                    # (2, H/2+1, Np, K0)
    xp = xp.reshape(2, Ho0 + 1, G, b_tile, K0)
    xp = jnp.transpose(xp, (2, 0, 1, 3, 4)).reshape(G, 2, (Ho0 + 1) * b_tile, K0)

    in_specs = [pl.BlockSpec((None, 2, (Ho0 + 1) * b_tile, K0),
                             lambda i: (i, 0, 0, 0))]
    # Weights/biases: full-array blocks with constant index maps -> fetched once
    # and kept VMEM-resident across the whole batch grid.
    for w in ws:
        in_specs.append(pl.BlockSpec(w.shape, lambda i: (0, 0, 0)))
    for b in bs:
        in_specs.append(pl.BlockSpec(b.shape, lambda i: (0, 0)))

    # Activation scratch for layers 2..5 (even/odd padded rows, bf16; every
    # (b_tile, 128) block is one native bf16 tile).
    scratch = [pltpu.VMEM((2, (H // 2 + 1) * b_tile, W * C), jnp.bfloat16)
               for (H, W, C, _, _, _) in layer_dims[1:]]

    kernel = functools.partial(_fused_disc_kernel, layer_dims=layer_dims,
                               b_tile=b_tile)
    out = pl.pallas_call(
        kernel,
        out_shape=jax.ShapeDtypeStruct((G, Ho_l * b_tile, n_last), jnp.float32),
        grid=(G,),
        in_specs=in_specs,
        out_specs=pl.BlockSpec((None, Ho_l * b_tile, n_last),
                               lambda i: (i, 0, 0)),
        scratch_shapes=scratch,
        compiler_params=pltpu.CompilerParams(
            # batch-tile axis is embarrassingly parallel -> megacore sharding
            dimension_semantics=("parallel",),
            vmem_limit_bytes=32 * 1024 * 1024),
    )(xp, *ws, *bs)

    # (G, Ho*B, 128-lane-padded) -> NCHW, drop batch / lane padding.
    out = out.reshape(G, Ho_l, b_tile, n_last)
    out = jnp.transpose(out, (0, 2, 1, 3)).reshape(Np, Ho_l, n_last)
    out = out[:N, :, :Wo_l * Co_l].reshape(N, Ho_l, Wo_l, Co_l)
    return jnp.transpose(out, (0, 3, 1, 2))


# ---------------------------------------------------------------------------
# Plain-JAX f32 reference (kernel uses bf16 operands/activations on purpose,
# so it is checked at a loose tolerance).
# ---------------------------------------------------------------------------
def reference_forward(x_nchw, params):
    y = x_nchw.astype(jnp.float32)
    n = len(params)
    for idx, (w, b) in enumerate(params):
        y = jax.lax.conv_general_dilated(
            y, w, window_strides=(STRIDE, STRIDE),
            padding=((PAD, PAD), (PAD, PAD)),
            dimension_numbers=("NCHW", "OIHW", "NCHW"))
        y = y + b.reshape(1, -1, 1, 1)
        if idx < n - 1:
            y = jnp.where(y >= 0.0, y, y * NEG_SLOPE)
    return y


if __name__ == "__main__":
    num_classes = 4
    ndf = 8
    batch, spatial = 32, 32        # 32 -> 16 -> 8 -> 4 -> 2 -> 1; W*C = 128 per layer
                                   # batch = 2 grid blocks of B_TILE=16 images

    root = jax.random.PRNGKey(0)
    kx, kp = jax.random.split(root)
    x = jax.random.normal(kx, (batch, num_classes, spatial, spatial),
                          dtype=jnp.float32)
    params = init_params(kp, num_classes, ndf)
    prepped = prepare_params(params, (spatial, spatial))

    out = jax.block_until_ready(fc_discriminator_norm(x, prepped))
    assert out.shape == (batch, 1, 1, 1), out.shape

    ref = jax.block_until_ready(reference_forward(x, params))
    # Intentional precision choice: bf16 MXU operands + bf16 VMEM activations.
    assert jnp.allclose(out, ref, atol=1e-1, rtol=1e-1), (
        "mismatch", float(jnp.max(jnp.abs(out - ref))))

    print("KERNEL_OK")
</pallas_src>

<mosaic_0001>
module attributes {stable_mosaic.version = 11 : i64} {
  func.func @_fused_disc_kernel(%arg0: i32, %arg1: memref<1x2x272x128xbf16, #tpu.memory_space<vmem>>, %arg2: memref<4x128x128xbf16, #tpu.memory_space<vmem>>, %arg3: memref<4x128x128xbf16, #tpu.memory_space<vmem>>, %arg4: memref<4x128x128xbf16, #tpu.memory_space<vmem>>, %arg5: memref<4x128x128xbf16, #tpu.memory_space<vmem>>, %arg6: memref<4x128x128xbf16, #tpu.memory_space<vmem>>, %arg7: memref<1x128xf32, #tpu.memory_space<vmem>>, %arg8: memref<1x128xf32, #tpu.memory_space<vmem>>, %arg9: memref<1x128xf32, #tpu.memory_space<vmem>>, %arg10: memref<1x128xf32, #tpu.memory_space<vmem>>, %arg11: memref<1x128xf32, #tpu.memory_space<vmem>>, %arg12: memref<1x16x128xf32, #tpu.memory_space<vmem>>, %arg13: memref<2x144x128xbf16, #tpu.memory_space<vmem>>, %arg14: memref<2x80x128xbf16, #tpu.memory_space<vmem>>, %arg15: memref<2x48x128xbf16, #tpu.memory_space<vmem>>, %arg16: memref<2x32x128xbf16, #tpu.memory_space<vmem>>) attributes {dimension_semantics = [#tpu.dimension_semantics<parallel>], iteration_bounds = array<i64: 2>, scalar_prefetch = 0 : i64, scratch_operands = 4 : i64, tpu.core_type = #tpu.core_type<tc>, window_params = [{transform_indices = @transform_0, window_bounds = array<i64: 1, 2, 272, 128>}, {pipeline_mode = #tpu.pipeline_mode<synchronous>, transform_indices = @transform_1, window_bounds = array<i64: 4, 128, 128>}, {pipeline_mode = #tpu.pipeline_mode<synchronous>, transform_indices = @transform_2, window_bounds = array<i64: 4, 128, 128>}, {pipeline_mode = #tpu.pipeline_mode<synchronous>, transform_indices = @transform_3, window_bounds = array<i64: 4, 128, 128>}, {pipeline_mode = #tpu.pipeline_mode<synchronous>, transform_indices = @transform_4, window_bounds = array<i64: 4, 128, 128>}, {pipeline_mode = #tpu.pipeline_mode<synchronous>, transform_indices = @transform_5, window_bounds = array<i64: 4, 128, 128>}, {pipeline_mode = #tpu.pipeline_mode<synchronous>, transform_indices = @transform_6, window_bounds = array<i64: 1, 128>}, {pipeline_mode = #tpu.pipeline_mode<synchronous>, transform_indices = @transform_7, window_bounds = array<i64: 1, 128>}, {pipeline_mode = #tpu.pipeline_mode<synchronous>, transform_indices = @transform_8, window_bounds = array<i64: 1, 128>}, {pipeline_mode = #tpu.pipeline_mode<synchronous>, transform_indices = @transform_9, window_bounds = array<i64: 1, 128>}, {pipeline_mode = #tpu.pipeline_mode<synchronous>, transform_indices = @transform_10, window_bounds = array<i64: 1, 128>}, {transform_indices = @transform_11, window_bounds = array<i64: 1, 16, 128>}]} {
    %cst = arith.constant 0.000000e+00 : bf16
    %0 = vector.broadcast %cst : bf16 to vector<16x128xbf16>
    %c0 = arith.constant 0 : index
    %c0_0 = arith.constant 0 : index
    %c0_1 = arith.constant 0 : index
    %1 = vector.load %arg13[%c0, %c0_0, %c0_1] : memref<2x144x128xbf16, #tpu.memory_space<vmem>>, vector<1x16x128xbf16>
    %2 = vector.shape_cast %1 : vector<1x16x128xbf16> to vector<16x128xbf16>
    %3 = vector.shape_cast %0 : vector<16x128xbf16> to vector<1x16x128xbf16>
    tpu.vector_store %arg13[%c0, %c0_0, %c0_1], %3 {strides = array<i32>} : memref<2x144x128xbf16, #tpu.memory_space<vmem>>, vector<1x16x128xbf16>,
    %c1 = arith.constant 1 : index
    %c128 = arith.constant 128 : index
    %c0_2 = arith.constant 0 : index
    %4 = vector.load %arg13[%c1, %c128, %c0_2] : memref<2x144x128xbf16, #tpu.memory_space<vmem>>, vector<1x16x128xbf16>
    %5 = vector.shape_cast %4 : vector<1x16x128xbf16> to vector<16x128xbf16>
    %6 = vector.shape_cast %0 : vector<16x128xbf16> to vector<1x16x128xbf16>
    tpu.vector_store %arg13[%c1, %c128, %c0_2], %6 {strides = array<i32>} : memref<2x144x128xbf16, #tpu.memory_space<vmem>>, vector<1x16x128xbf16>,
    %cst_3 = arith.constant 0.000000e+00 : bf16
    %7 = vector.broadcast %cst_3 : bf16 to vector<16x128xbf16>
    %c0_4 = arith.constant 0 : index
    %c0_5 = arith.constant 0 : index
    %c0_6 = arith.constant 0 : index
    %8 = vector.load %arg14[%c0_4, %c0_5, %c0_6] : memref<2x80x128xbf16, #tpu.memory_space<vmem>>, vector<1x16x128xbf16>
    %9 = vector.shape_cast %8 : vector<1x16x128xbf16> to vector<16x128xbf16>
    %10 = vector.shape_cast %7 : vector<16x128xbf16> to vector<1x16x128xbf16>
    tpu.vector_store %arg14[%c0_4, %c0_5, %c0_6], %10 {strides = array<i32>} : memref<2x80x128xbf16, #tpu.memory_space<vmem>>, vector<1x16x128xbf16>,
    %c1_7 = arith.constant 1 : index
    %c64 = arith.constant 64 : index
    %c0_8 = arith.constant 0 : index
    %11 = vector.load %arg14[%c1_7, %c64, %c0_8] : memref<2x80x128xbf16, #tpu.memory_space<vmem>>, vector<1x16x128xbf16>
    %12 = vector.shape_cast %11 : vector<1x16x128xbf16> to vector<16x128xbf16>
    %13 = vector.shape_cast %7 : vector<16x128xbf16> to vector<1x16x128xbf16>
    tpu.vector_store %arg14[%c1_7, %c64, %c0_8], %13 {strides = array<i32>} : memref<2x80x128xbf16, #tpu.memory_space<vmem>>, vector<1x16x128xbf16>,
    %cst_9 = arith.constant 0.000000e+00 : bf16
    %14 = vector.broadcast %cst_9 : bf16 to vector<16x128xbf16>
    %c0_10 = arith.constant 0 : index
    %c0_11 = arith.constant 0 : index
    %c0_12 = arith.constant 0 : index
    %15 = vector.load %arg15[%c0_10, %c0_11, %c0_12] : memref<2x48x128xbf16, #tpu.memory_space<vmem>>, vector<1x16x128xbf16>
    %16 = vector.shape_cast %15 : vector<1x16x128xbf16> to vector<16x128xbf16>
    %17 = vector.shape_cast %14 : vector<16x128xbf16> to vector<1x16x128xbf16>
    tpu.vector_store %arg15[%c0_10, %c0_11, %c0_12], %17 {strides = array<i32>} : memref<2x48x128xbf16, #tpu.memory_space<vmem>>, vector<1x16x128xbf16>,
    %c1_13 = arith.constant 1 : index
    %c32 = arith.constant 32 : index
    %c0_14 = arith.constant 0 : index
    %18 = vector.load %arg15[%c1_13, %c32, %c0_14] : memref<2x48x128xbf16, #tpu.memory_space<vmem>>, vector<1x16x128xbf16>
    %19 = vector.shape_cast %18 : vector<1x16x128xbf16> to vector<16x128xbf16>
    %20 = vector.shape_cast %14 : vector<16x128xbf16> to vector<1x16x128xbf16>
    tpu.vector_store %arg15[%c1_13, %c32, %c0_14], %20 {strides = array<i32>} : memref<2x48x128xbf16, #tpu.memory_space<vmem>>, vector<1x16x128xbf16>,
    %cst_15 = arith.constant 0.000000e+00 : bf16
    %21 = vector.broadcast %cst_15 : bf16 to vector<16x128xbf16>
    %c0_16 = arith.constant 0 : index
    %c0_17 = arith.constant 0 : index
    %c0_18 = arith.constant 0 : index
    %22 = vector.load %arg16[%c0_16, %c0_17, %c0_18] : memref<2x32x128xbf16, #tpu.memory_space<vmem>>, vector<1x16x128xbf16>
    %23 = vector.shape_cast %22 : vector<1x16x128xbf16> to vector<16x128xbf16>
    %24 = vector.shape_cast %21 : vector<16x128xbf16> to vector<1x16x128xbf16>
    tpu.vector_store %arg16[%c0_16, %c0_17, %c0_18], %24 {strides = array<i32>} : memref<2x32x128xbf16, #tpu.memory_space<vmem>>, vector<1x16x128xbf16>,
    %c1_19 = arith.constant 1 : index
    %c16 = arith.constant 16 : index
    %c0_20 = arith.constant 0 : index
    %25 = vector.load %arg16[%c1_19, %c16, %c0_20] : memref<2x32x128xbf16, #tpu.memory_space<vmem>>, vector<1x16x128xbf16>
    %26 = vector.shape_cast %25 : vector<1x16x128xbf16> to vector<16x128xbf16>
    %27 = vector.shape_cast %21 : vector<16x128xbf16> to vector<1x16x128xbf16>
    tpu.vector_store %arg16[%c1_19, %c16, %c0_20], %27 {strides = array<i32>} : memref<2x32x128xbf16, #tpu.memory_space<vmem>>, vector<1x16x128xbf16>,
    %c0_21 = arith.constant 0 : index
    %c0_22 = arith.constant 0 : index
    %28 = vector.load %arg7[%c0_21, %c0_22] : memref<1x128xf32, #tpu.memory_space<vmem>>, vector<1x128xf32>
    %29 = vector.shape_cast %28 : vector<1x128xf32> to vector<1x128xf32>
    %30 = vector.broadcast %29 : vector<1x128xf32> to vector<256x128xf32>
    %c0_23 = arith.constant 0 : index
    %c0_24 = arith.constant 0 : index
    %c0_25 = arith.constant 0 : index
    %c0_26 = arith.constant 0 : index
    %31 = vector.load %arg1[%c0_23, %c0_24, %c0_25, %c0_26] : memref<1x2x272x128xbf16, #tpu.memory_space<vmem>>, vector<1x1x256x128xbf16>
    %32 = vector.shape_cast %31 : vector<1x1x256x128xbf16> to vector<256x128xbf16>
    %c0_27 = arith.constant 0 : index
    %c0_28 = arith.constant 0 : index
    %c0_29 = arith.constant 0 : index
    %33 = vector.load %arg2[%c0_27, %c0_28, %c0_29] : memref<4x128x128xbf16, #tpu.memory_space<vmem>>, vector<1x128x128xbf16>
    %34 = vector.shape_cast %33 : vector<1x128x128xbf16> to vector<128x128xbf16>
    %cst_30 = arith.constant dense<0.000000e+00> : vector<256x128xf32>
    %35 = tpu.matmul %32, %34, %cst_30 {dimension_numbers = #tpu.dot_dimension_numbers<[1], [0], [0], [1], [0, 0, 1, 1], [], []>} : vector<256x128xbf16>, vector<128x128xbf16>, vector<256x128xf32> -> vector<256x128xf32>
    %36 = arith.addf %30, %35 : vector<256x128xf32>
    %c0_31 = arith.constant 0 : index
    %c1_32 = arith.constant 1 : index
    %c0_33 = arith.constant 0 : index
    %c0_34 = arith.constant 0 : index
    %37 = vector.load %arg1[%c0_31, %c1_32, %c0_33, %c0_34] : memref<1x2x272x128xbf16, #tpu.memory_space<vmem>>, vector<1x1x256x128xbf16>
    %38 = vector.shape_cast %37 : vector<1x1x256x128xbf16> to vector<256x128xbf16>
    %c1_35 = arith.constant 1 : index
    %c0_36 = arith.constant 0 : index
    %c0_37 = arith.constant 0 : index
    %39 = vector.load %arg2[%c1_35, %c0_36, %c0_37] : memref<4x128x128xbf16, #tpu.memory_space<vmem>>, vector<1x128x128xbf16>
    %40 = vector.shape_cast %39 : vector<1x128x128xbf16> to vector<128x128xbf16>
    %cst_38 = arith.constant dense<0.000000e+00> : vector<256x128xf32>
    %41 = tpu.matmul %38, %40, %cst_38 {dimension_numbers = #tpu.dot_dimension_numbers<[1], [0], [0], [1], [0, 0, 1, 1], [], []>} : vector<256x128xbf16>, vector<128x128xbf16>, vector<256x128xf32> -> vector<256x128xf32>
    %42 = arith.addf %36, %41 : vector<256x128xf32>
    %c0_39 = arith.constant 0 : index
    %c0_40 = arith.constant 0 : index
    %c16_41 = arith.constant 16 : index
    %c0_42 = arith.constant 0 : index
    %43 = vector.load %arg1[%c0_39, %c0_40, %c16_41, %c0_42] : memref<1x2x272x128xbf16, #tpu.memory_space<vmem>>, vector<1x1x256x128xbf16>
    %44 = vector.shape_cast %43 : vector<1x1x256x128xbf16> to vector<256x128xbf16>
    %c2 = arith.constant 2 : index
    %c0_43 = arith.constant 0 : index
    %c0_44 = arith.constant 0 : index
    %45 = vector.load %arg2[%c2, %c0_43, %c0_44] : memref<4x128x128xbf16, #tpu.memory_space<vmem>>, vector<1x128x128xbf16>
    %46 = vector.shape_cast %45 : vector<1x128x128xbf16> to vector<128x128xbf16>
    %cst_45 = arith.constant dense<0.000000e+00> : vector<256x128xf32>
    %47 = tpu.matmul %44, %46, %cst_45 {dimension_numbers = #tpu.dot_dimension_numbers<[1], [0], [0], [1], [0, 0, 1, 1], [], []>} : vector<256x128xbf16>, vector<128x128xbf16>, vector<256x128xf32> -> vector<256x128xf32>
    %48 = arith.addf %42, %47 : vector<256x128xf32>
    %c0_46 = arith.constant 0 : index
    %c1_47 = arith.constant 1 : index
    %c16_48 = arith.constant 16 : index
    %c0_49 = arith.constant 0 : index
    %49 = vector.load %arg1[%c0_46, %c1_47, %c16_48, %c0_49] : memref<1x2x272x128xbf16, #tpu.memory_space<vmem>>, vector<1x1x256x128xbf16>
    %50 = vector.shape_cast %49 : vector<1x1x256x128xbf16> to vector<256x128xbf16>
    %c3 = arith.constant 3 : index
    %c0_50 = arith.constant 0 : index
    %c0_51 = arith.constant 0 : index
    %51 = vector.load %arg2[%c3, %c0_50, %c0_51] : memref<4x128x128xbf16, #tpu.memory_space<vmem>>, vector<1x128x128xbf16>
    %52 = vector.shape_cast %51 : vector<1x128x128xbf16> to vector<128x128xbf16>
    %cst_52 = arith.constant dense<0.000000e+00> : vector<256x128xf32>
    %53 = tpu.matmul %50, %52, %cst_52 {dimension_numbers = #tpu.dot_dimension_numbers<[1], [0], [0], [1], [0, 0, 1, 1], [], []>} : vector<256x128xbf16>, vector<128x128xbf16>, vector<256x128xf32> -> vector<256x128xf32>
    %54 = arith.addf %48, %53 : vector<256x128xf32>
    %cst_53 = arith.constant 0.000000e+00 : f32
    %55 = vector.broadcast %cst_53 : f32 to vector<256x128xf32>
    %56 = arith.cmpf oge, %54, %55 : vector<256x128xf32>
    %cst_54 = arith.constant 2.000000e-01 : f32
    %57 = vector.broadcast %cst_54 : f32 to vector<256x128xf32>
    %58 = arith.mulf %54, %57 : vector<256x128xf32>
    %59 = arith.select %56, %54, %58 : vector<256x128xi1>, vector<256x128xf32>
    %60 = arith.truncf %59 : vector<256x128xf32> to vector<256x128xbf16>
    %61 = vector.extract_strided_slice %60 {offsets = [0, 0], sizes = [16, 128], strides = [1, 1]} : vector<256x128xbf16> to vector<16x128xbf16>
    %c1_55 = arith.constant 1 : index
    %c0_56 = arith.constant 0 : index
    %c0_57 = arith.constant 0 : index
    %62 = vector.load %arg13[%c1_55, %c0_56, %c0_57] : memref<2x144x128xbf16, #tpu.memory_space<vmem>>, vector<1x16x128xbf16>
    %63 = vector.shape_cast %62 : vector<1x16x128xbf16> to vector<16x128xbf16>
    %64 = vector.shape_cast %61 : vector<16x128xbf16> to vector<1x16x128xbf16>
    tpu.vector_store %arg13[%c1_55, %c0_56, %c0_57], %64 {strides = array<i32>} : memref<2x144x128xbf16, #tpu.memory_space<vmem>>, vector<1x16x128xbf16>,
    %65 = vector.extract_strided_slice %60 {offsets = [16, 0], sizes = [16, 128], strides = [1, 1]} : vector<256x128xbf16> to vector<16x128xbf16>
    %c0_58 = arith.constant 0 : index
    %c16_59 = arith.constant 16 : index
    %c0_60 = arith.constant 0 : index
    %66 = vector.load %arg13[%c0_58, %c16_59, %c0_60] : memref<2x144x128xbf16, #tpu.memory_space<vmem>>, vector<1x16x128xbf16>
    %67 = vector.shape_cast %66 : vector<1x16x128xbf16> to vector<16x128xbf16>
    %68 = vector.shape_cast %65 : vector<16x128xbf16> to vector<1x16x128xbf16>
    tpu.vector_store %arg13[%c0_58, %c16_59, %c0_60], %68 {strides = array<i32>} : memref<2x144x128xbf16, #tpu.memory_space<vmem>>, vector<1x16x128xbf16>,
    %69 = vector.extract_strided_slice %60 {offsets = [32, 0], sizes = [16, 128], strides = [1, 1]} : vector<256x128xbf16> to vector<16x128xbf16>
    %c1_61 = arith.constant 1 : index
    %c16_62 = arith.constant 16 : index
    %c0_63 = arith.constant 0 : index
    %70 = vector.load %arg13[%c1_61, %c16_62, %c0_63] : memref<2x144x128xbf16, #tpu.memory_space<vmem>>, vector<1x16x128xbf16>
    %71 = vector.shape_cast %70 : vector<1x16x128xbf16> to vector<16x128xbf16>
    %72 = vector.shape_cast %69 : vector<16x128xbf16> to vector<1x16x128xbf16>
    tpu.vector_store %arg13[%c1_61, %c16_62, %c0_63], %72 {strides = array<i32>} : memref<2x144x128xbf16, #tpu.memory_space<vmem>>, vector<1x16x128xbf16>,
    %73 = vector.extract_strided_slice %60 {offsets = [48, 0], sizes = [16, 128], strides = [1, 1]} : vector<256x128xbf16> to vector<16x128xbf16>
    %c0_64 = arith.constant 0 : index
    %c32_65 = arith.constant 32 : index
    %c0_66 = arith.constant 0 : index
    %74 = vector.load %arg13[%c0_64, %c32_65, %c0_66] : memref<2x144x128xbf16, #tpu.memory_space<vmem>>, vector<1x16x128xbf16>
    %75 = vector.shape_cast %74 : vector<1x16x128xbf16> to vector<16x128xbf16>
    %76 = vector.shape_cast %73 : vector<16x128xbf16> to vector<1x16x128xbf16>
    tpu.vector_store %arg13[%c0_64, %c32_65, %c0_66], %76 {strides = array<i32>} : memref<2x144x128xbf16, #tpu.memory_space<vmem>>, vector<1x16x128xbf16>,
    %77 = vector.extract_strided_slice %60 {offsets = [64, 0], sizes = [16, 128], strides = [1, 1]} : vector<256x128xbf16> to vector<16x128xbf16>
    %c1_67 = arith.constant 1 : index
    %c32_68 = arith.constant 32 : index
    %c0_69 = arith.constant 0 : index
    %78 = vector.load %arg13[%c1_67, %c32_68, %c0_69] : memref<2x144x128xbf16, #tpu.memory_space<vmem>>, vector<1x16x128xbf16>
    %79 = vector.shape_cast %78 : vector<1x16x128xbf16> to vector<16x128xbf16>
    %80 = vector.shape_cast %77 : vector<16x128xbf16> to vector<1x16x128xbf16>
    tpu.vector_store %arg13[%c1_67, %c32_68, %c0_69], %80 {strides = array<i32>} : memref<2x144x128xbf16, #tpu.memory_space<vmem>>, vector<1x16x128xbf16>,
    %81 = vector.extract_strided_slice %60 {offsets = [80, 0], sizes = [16, 128], strides = [1, 1]} : vector<256x128xbf16> to vector<16x128xbf16>
    %c0_70 = arith.constant 0 : index
    %c48 = arith.constant 48 : index
    %c0_71 = arith.constant 0 : index
    %82 = vector.load %arg13[%c0_70, %c48, %c0_71] : memref<2x144x128xbf16, #tpu.memory_space<vmem>>, vector<1x16x128xbf16>
    %83 = vector.shape_cast %82 : vector<1x16x128xbf16> to vector<16x128xbf16>
    %84 = vector.shape_cast %81 : vector<16x128xbf16> to vector<1x16x128xbf16>
    tpu.vector_store %arg13[%c0_70, %c48, %c0_71], %84 {strides = array<i32>} : memref<2x144x128xbf16, #tpu.memory_space<vmem>>, vector<1x16x128xbf16>,
    %85 = vector.extract_strided_slice %60 {offsets = [96, 0], sizes = [16, 128], strides = [1, 1]} : vector<256x128xbf16> to vector<16x128xbf16>
    %c1_72 = arith.constant 1 : index
    %c48_73 = arith.constant 48 : index
    %c0_74 = arith.constant 0 : index
    %86 = vector.load %arg13[%c1_72, %c48_73, %c0_74] : memref<2x144x128xbf16, #tpu.memory_space<vmem>>, vector<1x16x128xbf16>
    %87 = vector.shape_cast %86 : vector<1x16x128xbf16> to vector<16x128xbf16>
    %88 = vector.shape_cast %85 : vector<16x128xbf16> to vector<1x16x128xbf16>
    tpu.vector_store %arg13[%c1_72, %c48_73, %c0_74], %88 {strides = array<i32>} : memref<2x144x128xbf16, #tpu.memory_space<vmem>>, vector<1x16x128xbf16>,
    %89 = vector.extract_strided_slice %60 {offsets = [112, 0], sizes = [16, 128], strides = [1, 1]} : vector<256x128xbf16> to vector<16x128xbf16>
    %c0_75 = arith.constant 0 : index
    %c64_76 = arith.constant 64 : index
    %c0_77 = arith.constant 0 : index
    %90 = vector.load %arg13[%c0_75, %c64_76, %c0_77] : memref<2x144x128xbf16, #tpu.memory_space<vmem>>, vector<1x16x128xbf16>
    %91 = vector.shape_cast %90 : vector<1x16x128xbf16> to vector<16x128xbf16>
    %92 = vector.shape_cast %89 : vector<16x128xbf16> to vector<1x16x128xbf16>
    tpu.vector_store %arg13[%c0_75, %c64_76, %c0_77], %92 {strides = array<i32>} : memref<2x144x128xbf16, #tpu.memory_space<vmem>>, vector<1x16x128xbf16>,
    %93 = vector.extract_strided_slice %60 {offsets = [128, 0], sizes = [16, 128], strides = [1, 1]} : vector<256x128xbf16> to vector<16x128xbf16>
    %c1_78 = arith.constant 1 : index
    %c64_79 = arith.constant 64 : index
    %c0_80 = arith.constant 0 : index
    %94 = vector.load %arg13[%c1_78, %c64_79, %c0_80] : memref<2x144x128xbf16, #tpu.memory_space<vmem>>, vector<1x16x128xbf16>
    %95 = vector.shape_cast %94 : vector<1x16x128xbf16> to vector<16x128xbf16>
    %96 = vector.shape_cast %93 : vector<16x128xbf16> to vector<1x16x128xbf16>
    tpu.vector_store %arg13[%c1_78, %c64_79, %c0_80], %96 {strides = array<i32>} : memref<2x144x128xbf16, #tpu.memory_space<vmem>>, vector<1x16x128xbf16>,
    %97 = vector.extract_strided_slice %60 {offsets = [144, 0], sizes = [16, 128], strides = [1, 1]} : vector<256x128xbf16> to vector<16x128xbf16>
    %c0_81 = arith.constant 0 : index
    %c80 = arith.constant 80 : index
    %c0_82 = arith.constant 0 : index
    %98 = vector.load %arg13[%c0_81, %c80, %c0_82] : memref<2x144x128xbf16, #tpu.memory_space<vmem>>, vector<1x16x128xbf16>
    %99 = vector.shape_cast %98 : vector<1x16x128xbf16> to vector<16x128xbf16>
    %100 = vector.shape_cast %97 : vector<16x128xbf16> to vector<1x16x128xbf16>
    tpu.vector_store %arg13[%c0_81, %c80, %c0_82], %100 {strides = array<i32>} : memref<2x144x128xbf16, #tpu.memory_space<vmem>>, vector<1x16x128xbf16>,
    %101 = vector.extract_strided_slice %60 {offsets = [160, 0], sizes = [16, 128], strides = [1, 1]} : vector<256x128xbf16> to vector<16x128xbf16>
    %c1_83 = arith.constant 1 : index
    %c80_84 = arith.constant 80 : index
    %c0_85 = arith.constant 0 : index
    %102 = vector.load %arg13[%c1_83, %c80_84, %c0_85] : memref<2x144x128xbf16, #tpu.memory_space<vmem>>, vector<1x16x128xbf16>
    %103 = vector.shape_cast %102 : vector<1x16x128xbf16> to vector<16x128xbf16>
    %104 = vector.shape_cast %101 : vector<16x128xbf16> to vector<1x16x128xbf16>
    tpu.vector_store %arg13[%c1_83, %c80_84, %c0_85], %104 {strides = array<i32>} : memref<2x144x128xbf16, #tpu.memory_space<vmem>>, vector<1x16x128xbf16>,
    %105 = vector.extract_strided_slice %60 {offsets = [176, 0], sizes = [16, 128], strides = [1, 1]} : vector<256x128xbf16> to vector<16x128xbf16>
    %c0_86 = arith.constant 0 : index
    %c96 = arith.constant 96 : index
    %c0_87 = arith.constant 0 : index
    %106 = vector.load %arg13[%c0_86, %c96, %c0_87] : memref<2x144x128xbf16, #tpu.memory_space<vmem>>, vector<1x16x128xbf16>
    %107 = vector.shape_cast %106 : vector<1x16x128xbf16> to vector<16x128xbf16>
    %108 = vector.shape_cast %105 : vector<16x128xbf16> to vector<1x16x128xbf16>
    tpu.vector_store %arg13[%c0_86, %c96, %c0_87], %108 {strides = array<i32>} : memref<2x144x128xbf16, #tpu.memory_space<vmem>>, vector<1x16x128xbf16>,
    %109 = vector.extract_strided_slice %60 {offsets = [192, 0], sizes = [16, 128], strides = [1, 1]} : vector<256x128xbf16> to vector<16x128xbf16>
    %c1_88 = arith.constant 1 : index
    %c96_89 = arith.constant 96 : index
    %c0_90 = arith.constant 0 : index
    %110 = vector.load %arg13[%c1_88, %c96_89, %c0_90] : memref<2x144x128xbf16, #tpu.memory_space<vmem>>, vector<1x16x128xbf16>
    %111 = vector.shape_cast %110 : vector<1x16x128xbf16> to vector<16x128xbf16>
    %112 = vector.shape_cast %109 : vector<16x128xbf16> to vector<1x16x128xbf16>
    tpu.vector_store %arg13[%c1_88, %c96_89, %c0_90], %112 {strides = array<i32>} : memref<2x144x128xbf16, #tpu.memory_space<vmem>>, vector<1x16x128xbf16>,
    %113 = vector.extract_strided_slice %60 {offsets = [208, 0], sizes = [16, 128], strides = [1, 1]} : vector<256x128xbf16> to vector<16x128xbf16>
    %c0_91 = arith.constant 0 : index
    %c112 = arith.constant 112 : index
    %c0_92 = arith.constant 0 : index
    %114 = vector.load %arg13[%c0_91, %c112, %c0_92] : memref<2x144x128xbf16, #tpu.memory_space<vmem>>, vector<1x16x128xbf16>
    %115 = vector.shape_cast %114 : vector<1x16x128xbf16> to vector<16x128xbf16>
    %116 = vector.shape_cast %113 : vector<16x128xbf16> to vector<1x16x128xbf16>
    tpu.vector_store %arg13[%c0_91, %c112, %c0_92], %116 {strides = array<i32>} : memref<2x144x128xbf16, #tpu.memory_space<vmem>>, vector<1x16x128xbf16>,
    %117 = vector.extract_strided_slice %60 {offsets = [224, 0], sizes = [16, 128], strides = [1, 1]} : vector<256x128xbf16> to vector<16x128xbf16>
    %c1_93 = arith.constant 1 : index
    %c112_94 = arith.constant 112 : index
    %c0_95 = arith.constant 0 : index
    %118 = vector.load %arg13[%c1_93, %c112_94, %c0_95] : memref<2x144x128xbf16, #tpu.memory_space<vmem>>, vector<1x16x128xbf16>
    %119 = vector.shape_cast %118 : vector<1x16x128xbf16> to vector<16x128xbf16>
    %120 = vector.shape_cast %117 : vector<16x128xbf16> to vector<1x16x128xbf16>
    tpu.vector_store %arg13[%c1_93, %c112_94, %c0_95], %120 {strides = array<i32>} : memref<2x144x128xbf16, #tpu.memory_space<vmem>>, vector<1x16x128xbf16>,
    %121 = vector.extract_strided_slice %60 {offsets = [240, 0], sizes = [16, 128], strides = [1, 1]} : vector<256x128xbf16> to vector<16x128xbf16>
    %c0_96 = arith.constant 0 : index
    %c128_97 = arith.constant 128 : index
    %c0_98 = arith.constant 0 : index
    %122 = vector.load %arg13[%c0_96, %c128_97, %c0_98] : memref<2x144x128xbf16, #tpu.memory_space<vmem>>, vector<1x16x128xbf16>
    %123 = vector.shape_cast %122 : vector<1x16x128xbf16> to vector<16x128xbf16>
    %124 = vector.shape_cast %121 : vector<16x128xbf16> to vector<1x16x128xbf16>
    tpu.vector_store %arg13[%c0_96, %c128_97, %c0_98], %124 {strides = array<i32>} : memref<2x144x128xbf16, #tpu.memory_space<vmem>>, vector<1x16x128xbf16>,
    %c0_99 = arith.constant 0 : index
    %c0_100 = arith.constant 0 : index
    %125 = vector.load %arg8[%c0_99, %c0_100] : memref<1x128xf32, #tpu.memory_space<vmem>>, vector<1x128xf32>
    %126 = vector.shape_cast %125 : vector<1x128xf32> to vector<1x128xf32>
    %127 = vector.broadcast %126 : vector<1x128xf32> to vector<128x128xf32>
    %c0_101 = arith.constant 0 : index
    %c0_102 = arith.constant 0 : index
    %c0_103 = arith.constant 0 : index
    %128 = vector.load %arg13[%c0_101, %c0_102, %c0_103] : memref<2x144x128xbf16, #tpu.memory_space<vmem>>, vector<1x128x128xbf16>
    %129 = vector.shape_cast %128 : vector<1x128x128xbf16> to vector<128x128xbf16>
    %c0_104 = arith.constant 0 : index
    %c0_105 = arith.constant 0 : index
    %c0_106 = arith.constant 0 : index
    %130 = vector.load %arg3[%c0_104, %c0_105, %c0_106] : memref<4x128x128xbf16, #tpu.memory_space<vmem>>, vector<1x128x128xbf16>
    %131 = vector.shape_cast %130 : vector<1x128x128xbf16> to vector<128x128xbf16>
    %cst_107 = arith.constant dense<0.000000e+00> : vector<128x128xf32>
    %132 = tpu.matmul %129, %131, %cst_107 {dimension_numbers = #tpu.dot_dimension_numbers<[1], [0], [0], [1], [0, 0, 1, 1], [], []>} : vector<128x128xbf16>, vector<128x128xbf16>, vector<128x128xf32> -> vector<128x128xf32>
    %133 = arith.addf %127, %132 : vector<128x128xf32>
    %c1_108 = arith.constant 1 : index
    %c0_109 = arith.constant 0 : index
    %c0_110 = arith.constant 0 : index
    %134 = vector.load %arg13[%c1_108, %c0_109, %c0_110] : memref<2x144x128xbf16, #tpu.memory_space<vmem>>, vector<1x128x128xbf16>
    %135 = vector.shape_cast %134 : vector<1x128x128xbf16> to vector<128x128xbf16>
    %c1_111 = arith.constant 1 : index
    %c0_112 = arith.constant 0 : index
    %c0_113 = arith.constant 0 : index
    %136 = vector.load %arg3[%c1_111, %c0_112, %c0_113] : memref<4x128x128xbf16, #tpu.memory_space<vmem>>, vector<1x128x128xbf16>
    %137 = vector.shape_cast %136 : vector<1x128x128xbf16> to vector<128x128xbf16>
    %cst_114 = arith.constant dense<0.000000e+00> : vector<128x128xf32>
    %138 = tpu.matmul %135, %137, %cst_114 {dimension_numbers = #tpu.dot_dimension_numbers<[1], [0], [0], [1], [0, 0, 1, 1], [], []>} : vector<128x128xbf16>, vector<128x128xbf16>, vector<128x128xf32> -> vector<128x128xf32>
    %139 = arith.addf %133, %138 : vector<128x128xf32>
    %c0_115 = arith.constant 0 : index
    %c16_116 = arith.constant 16 : index
    %c0_117 = arith.constant 0 : index
    %140 = vector.load %arg13[%c0_115, %c16_116, %c0_117] : memref<2x144x128xbf16, #tpu.memory_space<vmem>>, vector<1x128x128xbf16>
    %141 = vector.shape_cast %140 : vector<1x128x128xbf16> to vector<128x128xbf16>
    %c2_118 = arith.constant 2 : index
    %c0_119 = arith.constant 0 : index
    %c0_120 = arith.constant 0 : index
    %142 = vector.load %arg3[%c2_118, %c0_119, %c0_120] : memref<4x128x128xbf16, #tpu.memory_space<vmem>>, vector<1x128x128xbf16>
    %143 = vector.shape_cast %142 : vector<1x128x128xbf16> to vector<128x128xbf16>
    %cst_121 = arith.constant dense<0.000000e+00> : vector<128x128xf32>
    %144 = tpu.matmul %141, %143, %cst_121 {dimension_numbers = #tpu.dot_dimension_numbers<[1], [0], [0], [1], [0, 0, 1, 1], [], []>} : vector<128x128xbf16>, vector<128x128xbf16>, vector<128x128xf32> -> vector<128x128xf32>
    %145 = arith.addf %139, %144 : vector<128x128xf32>
    %c1_122 = arith.constant 1 : index
    %c16_123 = arith.constant 16 : index
    %c0_124 = arith.constant 0 : index
    %146 = vector.load %arg13[%c1_122, %c16_123, %c0_124] : memref<2x144x128xbf16, #tpu.memory_space<vmem>>, vector<1x128x128xbf16>
    %147 = vector.shape_cast %146 : vector<1x128x128xbf16> to vector<128x128xbf16>
    %c3_125 = arith.constant 3 : index
    %c0_126 = arith.constant 0 : index
    %c0_127 = arith.constant 0 : index
    %148 = vector.load %arg3[%c3_125, %c0_126, %c0_127] : memref<4x128x128xbf16, #tpu.memory_space<vmem>>, vector<1x128x128xbf16>
    %149 = vector.shape_cast %148 : vector<1x128x128xbf16> to vector<128x128xbf16>
    %cst_128 = arith.constant dense<0.000000e+00> : vector<128x128xf32>
    %150 = tpu.matmul %147, %149, %cst_128 {dimension_numbers = #tpu.dot_dimension_numbers<[1], [0], [0], [1], [0, 0, 1, 1], [], []>} : vector<128x128xbf16>, vector<128x128xbf16>, vector<128x128xf32> -> vector<128x128xf32>
    %151 = arith.addf %145, %150 : vector<128x128xf32>
    %cst_129 = arith.constant 0.000000e+00 : f32
    %152 = vector.broadcast %cst_129 : f32 to vector<128x128xf32>
    %153 = arith.cmpf oge, %151, %152 : vector<128x128xf32>
    %cst_130 = arith.constant 2.000000e-01 : f32
    %154 = vector.broadcast %cst_130 : f32 to vector<128x128xf32>
    %155 = arith.mulf %151, %154 : vector<128x128xf32>
    %156 = arith.select %153, %151, %155 : vector<128x128xi1>, vector<128x128xf32>
    %157 = arith.truncf %156 : vector<128x128xf32> to vector<128x128xbf16>
    %158 = vector.extract_strided_slice %157 {offsets = [0, 0], sizes = [16, 128], strides = [1, 1]} : vector<128x128xbf16> to vector<16x128xbf16>
    %c1_131 = arith.constant 1 : index
    %c0_132 = arith.constant 0 : index
    %c0_133 = arith.constant 0 : index
    %159 = vector.load %arg14[%c1_131, %c0_132, %c0_133] : memref<2x80x128xbf16, #tpu.memory_space<vmem>>, vector<1x16x128xbf16>
    %160 = vector.shape_cast %159 : vector<1x16x128xbf16> to vector<16x128xbf16>
    %161 = vector.shape_cast %158 : vector<16x128xbf16> to vector<1x16x128xbf16>
    tpu.vector_store %arg14[%c1_131, %c0_132, %c0_133], %161 {strides = array<i32>} : memref<2x80x128xbf16, #tpu.memory_space<vmem>>, vector<1x16x128xbf16>,
    %162 = vector.extract_strided_slice %157 {offsets = [16, 0], sizes = [16, 128], strides = [1, 1]} : vector<128x128xbf16> to vector<16x128xbf16>
    %c0_134 = arith.constant 0 : index
    %c16_135 = arith.constant 16 : index
    %c0_136 = arith.constant 0 : index
    %163 = vector.load %arg14[%c0_134, %c16_135, %c0_136] : memref<2x80x128xbf16, #tpu.memory_space<vmem>>, vector<1x16x128xbf16>
    %164 = vector.shape_cast %163 : vector<1x16x128xbf16> to vector<16x128xbf16>
    %165 = vector.shape_cast %162 : vector<16x128xbf16> to vector<1x16x128xbf16>
    tpu.vector_store %arg14[%c0_134, %c16_135, %c0_136], %165 {strides = array<i32>} : memref<2x80x128xbf16, #tpu.memory_space<vmem>>, vector<1x16x128xbf16>,
    %166 = vector.extract_strided_slice %157 {offsets = [32, 0], sizes = [16, 128], strides = [1, 1]} : vector<128x128xbf16> to vector<16x128xbf16>
    %c1_137 = arith.constant 1 : index
    %c16_138 = arith.constant 16 : index
    %c0_139 = arith.constant 0 : index
    %167 = vector.load %arg14[%c1_137, %c16_138, %c0_139] : memref<2x80x128xbf16, #tpu.memory_space<vmem>>, vector<1x16x128xbf16>
    %168 = vector.shape_cast %167 : vector<1x16x128xbf16> to vector<16x128xbf16>
    %169 = vector.shape_cast %166 : vector<16x128xbf16> to vector<1x16x128xbf16>
    tpu.vector_store %arg14[%c1_137, %c16_138, %c0_139], %169 {strides = array<i32>} : memref<2x80x128xbf16, #tpu.memory_space<vmem>>, vector<1x16x128xbf16>,
    %170 = vector.extract_strided_slice %157 {offsets = [48, 0], sizes = [16, 128], strides = [1, 1]} : vector<128x128xbf16> to vector<16x128xbf16>
    %c0_140 = arith.constant 0 : index
    %c32_141 = arith.constant 32 : index
    %c0_142 = arith.constant 0 : index
    %171 = vector.load %arg14[%c0_140, %c32_141, %c0_142] : memref<2x80x128xbf16, #tpu.memory_space<vmem>>, vector<1x16x128xbf16>
    %172 = vector.shape_cast %171 : vector<1x16x128xbf16> to vector<16x128xbf16>
    %173 = vector.shape_cast %170 : vector<16x128xbf16> to vector<1x16x128xbf16>
    tpu.vector_store %arg14[%c0_140, %c32_141, %c0_142], %173 {strides = array<i32>} : memref<2x80x128xbf16, #tpu.memory_space<vmem>>, vector<1x16x128xbf16>,
    %174 = vector.extract_strided_slice %157 {offsets = [64, 0], sizes = [16, 128], strides = [1, 1]} : vector<128x128xbf16> to vector<16x128xbf16>
    %c1_143 = arith.constant 1 : index
    %c32_144 = arith.constant 32 : index
    %c0_145 = arith.constant 0 : index
    %175 = vector.load %arg14[%c1_143, %c32_144, %c0_145] : memref<2x80x128xbf16, #tpu.memory_space<vmem>>, vector<1x16x128xbf16>
    %176 = vector.shape_cast %175 : vector<1x16x128xbf16> to vector<16x128xbf16>
    %177 = vector.shape_cast %174 : vector<16x128xbf16> to vector<1x16x128xbf16>
    tpu.vector_store %arg14[%c1_143, %c32_144, %c0_145], %177 {strides = array<i32>} : memref<2x80x128xbf16, #tpu.memory_space<vmem>>, vector<1x16x128xbf16>,
    %178 = vector.extract_strided_slice %157 {offsets = [80, 0], sizes = [16, 128], strides = [1, 1]} : vector<128x128xbf16> to vector<16x128xbf16>
    %c0_146 = arith.constant 0 : index
    %c48_147 = arith.constant 48 : index
    %c0_148 = arith.constant 0 : index
    %179 = vector.load %arg14[%c0_146, %c48_147, %c0_148] : memref<2x80x128xbf16, #tpu.memory_space<vmem>>, vector<1x16x128xbf16>
    %180 = vector.shape_cast %179 : vector<1x16x128xbf16> to vector<16x128xbf16>
    %181 = vector.shape_cast %178 : vector<16x128xbf16> to vector<1x16x128xbf16>
    tpu.vector_store %arg14[%c0_146, %c48_147, %c0_148], %181 {strides = array<i32>} : memref<2x80x128xbf16, #tpu.memory_space<vmem>>, vector<1x16x128xbf16>,
    %182 = vector.extract_strided_slice %157 {offsets = [96, 0], sizes = [16, 128], strides = [1, 1]} : vector<128x128xbf16> to vector<16x128xbf16>
    %c1_149 = arith.constant 1 : index
    %c48_150 = arith.constant 48 : index
    %c0_151 = arith.constant 0 : index
    %183 = vector.load %arg14[%c1_149, %c48_150, %c0_151] : memref<2x80x128xbf16, #tpu.memory_space<vmem>>, vector<1x16x128xbf16>
    %184 = vector.shape_cast %183 : vector<1x16x128xbf16> to vector<16x128xbf16>
    %185 = vector.shape_cast %182 : vector<16x128xbf16> to vector<1x16x128xbf16>
    tpu.vector_store %arg14[%c1_149, %c48_150, %c0_151], %185 {strides = array<i32>} : memref<2x80x128xbf16, #tpu.memory_space<vmem>>, vector<1x16x128xbf16>,
    %186 = vector.extract_strided_slice %157 {offsets = [112, 0], sizes = [16, 128], strides = [1, 1]} : vector<128x128xbf16> to vector<16x128xbf16>
    %c0_152 = arith.constant 0 : index
    %c64_153 = arith.constant 64 : index
    %c0_154 = arith.constant 0 : index
    %187 = vector.load %arg14[%c0_152, %c64_153, %c0_154] : memref<2x80x128xbf16, #tpu.memory_space<vmem>>, vector<1x16x128xbf16>
    %188 = vector.shape_cast %187 : vector<1x16x128xbf16> to vector<16x128xbf16>
    %189 = vector.shape_cast %186 : vector<16x128xbf16> to vector<1x16x128xbf16>
    tpu.vector_store %arg14[%c0_152, %c64_153, %c0_154], %189 {strides = array<i32>} : memref<2x80x128xbf16, #tpu.memory_space<vmem>>, vector<1x16x128xbf16>,
    %c0_155 = arith.constant 0 : index
    %c0_156 = arith.constant 0 : index
    %190 = vector.load %arg9[%c0_155, %c0_156] : memref<1x128xf32, #tpu.memory_space<vmem>>, vector<1x128xf32>
    %191 = vector.shape_cast %190 : vector<1x128xf32> to vector<1x128xf32>
    %192 = vector.broadcast %191 : vector<1x128xf32> to vector<64x128xf32>
    %c0_157 = arith.constant 0 : index
    %c0_158 = arith.constant 0 : index
    %c0_159 = arith.constant 0 : index
    %193 = vector.load %arg14[%c0_157, %c0_158, %c0_159] : memref<2x80x128xbf16, #tpu.memory_space<vmem>>, vector<1x64x128xbf16>
    %194 = vector.shape_cast %193 : vector<1x64x128xbf16> to vector<64x128xbf16>
    %c0_160 = arith.constant 0 : index
    %c0_161 = arith.constant 0 : index
    %c0_162 = arith.constant 0 : index
    %195 = vector.load %arg4[%c0_160, %c0_161, %c0_162] : memref<4x128x128xbf16, #tpu.memory_space<vmem>>, vector<1x128x128xbf16>
    %196 = vector.shape_cast %195 : vector<1x128x128xbf16> to vector<128x128xbf16>
    %cst_163 = arith.constant dense<0.000000e+00> : vector<64x128xf32>
    %197 = tpu.matmul %194, %196, %cst_163 {dimension_numbers = #tpu.dot_dimension_numbers<[1], [0], [0], [1], [0, 0, 1, 1], [], []>} : vector<64x128xbf16>, vector<128x128xbf16>, vector<64x128xf32> -> vector<64x128xf32>
    %198 = arith.addf %192, %197 : vector<64x128xf32>
    %c1_164 = arith.constant 1 : index
    %c0_165 = arith.constant 0 : index
    %c0_166 = arith.constant 0 : index
    %199 = vector.load %arg14[%c1_164, %c0_165, %c0_166] : memref<2x80x128xbf16, #tpu.memory_space<vmem>>, vector<1x64x128xbf16>
    %200 = vector.shape_cast %199 : vector<1x64x128xbf16> to vector<64x128xbf16>
    %c1_167 = arith.constant 1 : index
    %c0_168 = arith.constant 0 : index
    %c0_169 = arith.constant 0 : index
    %201 = vector.load %arg4[%c1_167, %c0_168, %c0_169] : memref<4x128x128xbf16, #tpu.memory_space<vmem>>, vector<1x128x128xbf16>
    %202 = vector.shape_cast %201 : vector<1x128x128xbf16> to vector<128x128xbf16>
    %cst_170 = arith.constant dense<0.000000e+00> : vector<64x128xf32>
    %203 = tpu.matmul %200, %202, %cst_170 {dimension_numbers = #tpu.dot_dimension_numbers<[1], [0], [0], [1], [0, 0, 1, 1], [], []>} : vector<64x128xbf16>, vector<128x128xbf16>, vector<64x128xf32> -> vector<64x128xf32>
    %204 = arith.addf %198, %203 : vector<64x128xf32>
    %c0_171 = arith.constant 0 : index
    %c16_172 = arith.constant 16 : index
    %c0_173 = arith.constant 0 : index
    %205 = vector.load %arg14[%c0_171, %c16_172, %c0_173] : memref<2x80x128xbf16, #tpu.memory_space<vmem>>, vector<1x64x128xbf16>
    %206 = vector.shape_cast %205 : vector<1x64x128xbf16> to vector<64x128xbf16>
    %c2_174 = arith.constant 2 : index
    %c0_175 = arith.constant 0 : index
    %c0_176 = arith.constant 0 : index
    %207 = vector.load %arg4[%c2_174, %c0_175, %c0_176] : memref<4x128x128xbf16, #tpu.memory_space<vmem>>, vector<1x128x128xbf16>
    %208 = vector.shape_cast %207 : vector<1x128x128xbf16> to vector<128x128xbf16>
    %cst_177 = arith.constant dense<0.000000e+00> : vector<64x128xf32>
    %209 = tpu.matmul %206, %208, %cst_177 {dimension_numbers = #tpu.dot_dimension_numbers<[1], [0], [0], [1], [0, 0, 1, 1], [], []>} : vector<64x128xbf16>, vector<128x128xbf16>, vector<64x128xf32> -> vector<64x128xf32>
    %210 = arith.addf %204, %209 : vector<64x128xf32>
    %c1_178 = arith.constant 1 : index
    %c16_179 = arith.constant 16 : index
    %c0_180 = arith.constant 0 : index
    %211 = vector.load %arg14[%c1_178, %c16_179, %c0_180] : memref<2x80x128xbf16, #tpu.memory_space<vmem>>, vector<1x64x128xbf16>
    %212 = vector.shape_cast %211 : vector<1x64x128xbf16> to vector<64x128xbf16>
    %c3_181 = arith.constant 3 : index
    %c0_182 = arith.constant 0 : index
    %c0_183 = arith.constant 0 : index
    %213 = vector.load %arg4[%c3_181, %c0_182, %c0_183] : memref<4x128x128xbf16, #tpu.memory_space<vmem>>, vector<1x128x128xbf16>
    %214 = vector.shape_cast %213 : vector<1x128x128xbf16> to vector<128x128xbf16>
    %cst_184 = arith.constant dense<0.000000e+00> : vector<64x128xf32>
    %215 = tpu.matmul %212, %214, %cst_184 {dimension_numbers = #tpu.dot_dimension_numbers<[1], [0], [0], [1], [0, 0, 1, 1], [], []>} : vector<64x128xbf16>, vector<128x128xbf16>, vector<64x128xf32> -> vector<64x128xf32>
    %216 = arith.addf %210, %215 : vector<64x128xf32>
    %cst_185 = arith.constant 0.000000e+00 : f32
    %217 = vector.broadcast %cst_185 : f32 to vector<64x128xf32>
    %218 = arith.cmpf oge, %216, %217 : vector<64x128xf32>
    %cst_186 = arith.constant 2.000000e-01 : f32
    %219 = vector.broadcast %cst_186 : f32 to vector<64x128xf32>
    %220 = arith.mulf %216, %219 : vector<64x128xf32>
    %221 = arith.select %218, %216, %220 : vector<64x128xi1>, vector<64x128xf32>
    %222 = arith.truncf %221 : vector<64x128xf32> to vector<64x128xbf16>
    %223 = vector.extract_strided_slice %222 {offsets = [0, 0], sizes = [16, 128], strides = [1, 1]} : vector<64x128xbf16> to vector<16x128xbf16>
    %c1_187 = arith.constant 1 : index
    %c0_188 = arith.constant 0 : index
    %c0_189 = arith.constant 0 : index
    %224 = vector.load %arg15[%c1_187, %c0_188, %c0_189] : memref<2x48x128xbf16, #tpu.memory_space<vmem>>, vector<1x16x128xbf16>
    %225 = vector.shape_cast %224 : vector<1x16x128xbf16> to vector<16x128xbf16>
    %226 = vector.shape_cast %223 : vector<16x128xbf16> to vector<1x16x128xbf16>
    tpu.vector_store %arg15[%c1_187, %c0_188, %c0_189], %226 {strides = array<i32>} : memref<2x48x128xbf16, #tpu.memory_space<vmem>>, vector<1x16x128xbf16>,
    %227 = vector.extract_strided_slice %222 {offsets = [16, 0], sizes = [16, 128], strides = [1, 1]} : vector<64x128xbf16> to vector<16x128xbf16>
    %c0_190 = arith.constant 0 : index
    %c16_191 = arith.constant 16 : index
    %c0_192 = arith.constant 0 : index
    %228 = vector.load %arg15[%c0_190, %c16_191, %c0_192] : memref<2x48x128xbf16, #tpu.memory_space<vmem>>, vector<1x16x128xbf16>
    %229 = vector.shape_cast %228 : vector<1x16x128xbf16> to vector<16x128xbf16>
    %230 = vector.shape_cast %227 : vector<16x128xbf16> to vector<1x16x128xbf16>
    tpu.vector_store %arg15[%c0_190, %c16_191, %c0_192], %230 {strides = array<i32>} : memref<2x48x128xbf16, #tpu.memory_space<vmem>>, vector<1x16x128xbf16>,
    %231 = vector.extract_strided_slice %222 {offsets = [32, 0], sizes = [16, 128], strides = [1, 1]} : vector<64x128xbf16> to vector<16x128xbf16>
    %c1_193 = arith.constant 1 : index
    %c16_194 = arith.constant 16 : index
    %c0_195 = arith.constant 0 : index
    %232 = vector.load %arg15[%c1_193, %c16_194, %c0_195] : memref<2x48x128xbf16, #tpu.memory_space<vmem>>, vector<1x16x128xbf16>
    %233 = vector.shape_cast %232 : vector<1x16x128xbf16> to vector<16x128xbf16>
    %234 = vector.shape_cast %231 : vector<16x128xbf16> to vector<1x16x128xbf16>
    tpu.vector_store %arg15[%c1_193, %c16_194, %c0_195], %234 {strides = array<i32>} : memref<2x48x128xbf16, #tpu.memory_space<vmem>>, vector<1x16x128xbf16>,
    %235 = vector.extract_strided_slice %222 {offsets = [48, 0], sizes = [16, 128], strides = [1, 1]} : vector<64x128xbf16> to vector<16x128xbf16>
    %c0_196 = arith.constant 0 : index
    %c32_197 = arith.constant 32 : index
    %c0_198 = arith.constant 0 : index
    %236 = vector.load %arg15[%c0_196, %c32_197, %c0_198] : memref<2x48x128xbf16, #tpu.memory_space<vmem>>, vector<1x16x128xbf16>
    %237 = vector.shape_cast %236 : vector<1x16x128xbf16> to vector<16x128xbf16>
    %238 = vector.shape_cast %235 : vector<16x128xbf16> to vector<1x16x128xbf16>
    tpu.vector_store %arg15[%c0_196, %c32_197, %c0_198], %238 {strides = array<i32>} : memref<2x48x128xbf16, #tpu.memory_space<vmem>>, vector<1x16x128xbf16>,
    %c0_199 = arith.constant 0 : index
    %c0_200 = arith.constant 0 : index
    %239 = vector.load %arg10[%c0_199, %c0_200] : memref<1x128xf32, #tpu.memory_space<vmem>>, vector<1x128xf32>
    %240 = vector.shape_cast %239 : vector<1x128xf32> to vector<1x128xf32>
    %241 = vector.broadcast %240 : vector<1x128xf32> to vector<32x128xf32>
    %c0_201 = arith.constant 0 : index
    %c0_202 = arith.constant 0 : index
    %c0_203 = arith.constant 0 : index
    %242 = vector.load %arg15[%c0_201, %c0_202, %c0_203] : memref<2x48x128xbf16, #tpu.memory_space<vmem>>, vector<1x32x128xbf16>
    %243 = vector.shape_cast %242 : vector<1x32x128xbf16> to vector<32x128xbf16>
    %c0_204 = arith.constant 0 : index
    %c0_205 = arith.constant 0 : index
    %c0_206 = arith.constant 0 : index
    %244 = vector.load %arg5[%c0_204, %c0_205, %c0_206] : memref<4x128x128xbf16, #tpu.memory_space<vmem>>, vector<1x128x128xbf16>
    %245 = vector.shape_cast %244 : vector<1x128x128xbf16> to vector<128x128xbf16>
    %cst_207 = arith.constant dense<0.000000e+00> : vector<32x128xf32>
    %246 = tpu.matmul %243, %245, %cst_207 {dimension_numbers = #tpu.dot_dimension_numbers<[1], [0], [0], [1], [0, 0, 1, 1], [], []>} : vector<32x128xbf16>, vector<128x128xbf16>, vector<32x128xf32> -> vector<32x128xf32>
    %247 = arith.addf %241, %246 : vector<32x128xf32>
    %c1_208 = arith.constant 1 : index
    %c0_209 = arith.constant 0 : index
    %c0_210 = arith.constant 0 : index
    %248 = vector.load %arg15[%c1_208, %c0_209, %c0_210] : memref<2x48x128xbf16, #tpu.memory_space<vmem>>, vector<1x32x128xbf16>
    %249 = vector.shape_cast %248 : vector<1x32x128xbf16> to vector<32x128xbf16>
    %c1_211 = arith.constant 1 : index
    %c0_212 = arith.constant 0 : index
    %c0_213 = arith.constant 0 : index
    %250 = vector.load %arg5[%c1_211, %c0_212, %c0_213] : memref<4x128x128xbf16, #tpu.memory_space<vmem>>, vector<1x128x128xbf16>
    %251 = vector.shape_cast %250 : vector<1x128x128xbf16> to vector<128x128xbf16>
    %cst_214 = arith.constant dense<0.000000e+00> : vector<32x128xf32>
    %252 = tpu.matmul %249, %251, %cst_214 {dimension_numbers = #tpu.dot_dimension_numbers<[1], [0], [0], [1], [0, 0, 1, 1], [], []>} : vector<32x128xbf16>, vector<128x128xbf16>, vector<32x128xf32> -> vector<32x128xf32>
    %253 = arith.addf %247, %252 : vector<32x128xf32>
    %c0_215 = arith.constant 0 : index
    %c16_216 = arith.constant 16 : index
    %c0_217 = arith.constant 0 : index
    %254 = vector.load %arg15[%c0_215, %c16_216, %c0_217] : memref<2x48x128xbf16, #tpu.memory_space<vmem>>, vector<1x32x128xbf16>
    %255 = vector.shape_cast %254 : vector<1x32x128xbf16> to vector<32x128xbf16>
    %c2_218 = arith.constant 2 : index
    %c0_219 = arith.constant 0 : index
    %c0_220 = arith.constant 0 : index
    %256 = vector.load %arg5[%c2_218, %c0_219, %c0_220] : memref<4x128x128xbf16, #tpu.memory_space<vmem>>, vector<1x128x128xbf16>
    %257 = vector.shape_cast %256 : vector<1x128x128xbf16> to vector<128x128xbf16>
    %cst_221 = arith.constant dense<0.000000e+00> : vector<32x128xf32>
    %258 = tpu.matmul %255, %257, %cst_221 {dimension_numbers = #tpu.dot_dimension_numbers<[1], [0], [0], [1], [0, 0, 1, 1], [], []>} : vector<32x128xbf16>, vector<128x128xbf16>, vector<32x128xf32> -> vector<32x128xf32>
    %259 = arith.addf %253, %258 : vector<32x128xf32>
    %c1_222 = arith.constant 1 : index
    %c16_223 = arith.constant 16 : index
    %c0_224 = arith.constant 0 : index
    %260 = vector.load %arg15[%c1_222, %c16_223, %c0_224] : memref<2x48x128xbf16, #tpu.memory_space<vmem>>, vector<1x32x128xbf16>
    %261 = vector.shape_cast %260 : vector<1x32x128xbf16> to vector<32x128xbf16>
    %c3_225 = arith.constant 3 : index
    %c0_226 = arith.constant 0 : index
    %c0_227 = arith.constant 0 : index
    %262 = vector.load %arg5[%c3_225, %c0_226, %c0_227] : memref<4x128x128xbf16, #tpu.memory_space<vmem>>, vector<1x128x128xbf16>
    %263 = vector.shape_cast %262 : vector<1x128x128xbf16> to vector<128x128xbf16>
    %cst_228 = arith.constant dense<0.000000e+00> : vector<32x128xf32>
    %264 = tpu.matmul %261, %263, %cst_228 {dimension_numbers = #tpu.dot_dimension_numbers<[1], [0], [0], [1], [0, 0, 1, 1], [], []>} : vector<32x128xbf16>, vector<128x128xbf16>, vector<32x128xf32> -> vector<32x128xf32>
    %265 = arith.addf %259, %264 : vector<32x128xf32>
    %cst_229 = arith.constant 0.000000e+00 : f32
    %266 = vector.broadcast %cst_229 : f32 to vector<32x128xf32>
    %267 = arith.cmpf oge, %265, %266 : vector<32x128xf32>
    %cst_230 = arith.constant 2.000000e-01 : f32
    %268 = vector.broadcast %cst_230 : f32 to vector<32x128xf32>
    %269 = arith.mulf %265, %268 : vector<32x128xf32>
    %270 = arith.select %267, %265, %269 : vector<32x128xi1>, vector<32x128xf32>
    %271 = arith.truncf %270 : vector<32x128xf32> to vector<32x128xbf16>
    %272 = vector.extract_strided_slice %271 {offsets = [0, 0], sizes = [16, 128], strides = [1, 1]} : vector<32x128xbf16> to vector<16x128xbf16>
    %c1_231 = arith.constant 1 : index
    %c0_232 = arith.constant 0 : index
    %c0_233 = arith.constant 0 : index
    %273 = vector.load %arg16[%c1_231, %c0_232, %c0_233] : memref<2x32x128xbf16, #tpu.memory_space<vmem>>, vector<1x16x128xbf16>
    %274 = vector.shape_cast %273 : vector<1x16x128xbf16> to vector<16x128xbf16>
    %275 = vector.shape_cast %272 : vector<16x128xbf16> to vector<1x16x128xbf16>
    tpu.vector_store %arg16[%c1_231, %c0_232, %c0_233], %275 {strides = array<i32>} : memref<2x32x128xbf16, #tpu.memory_space<vmem>>, vector<1x16x128xbf16>,
    %276 = vector.extract_strided_slice %271 {offsets = [16, 0], sizes = [16, 128], strides = [1, 1]} : vector<32x128xbf16> to vector<16x128xbf16>
    %c0_234 = arith.constant 0 : index
    %c16_235 = arith.constant 16 : index
    %c0_236 = arith.constant 0 : index
    %277 = vector.load %arg16[%c0_234, %c16_235, %c0_236] : memref<2x32x128xbf16, #tpu.memory_space<vmem>>, vector<1x16x128xbf16>
    %278 = vector.shape_cast %277 : vector<1x16x128xbf16> to vector<16x128xbf16>
    %279 = vector.shape_cast %276 : vector<16x128xbf16> to vector<1x16x128xbf16>
    tpu.vector_store %arg16[%c0_234, %c16_235, %c0_236], %279 {strides = array<i32>} : memref<2x32x128xbf16, #tpu.memory_space<vmem>>, vector<1x16x128xbf16>,
    %c0_237 = arith.constant 0 : index
    %c0_238 = arith.constant 0 : index
    %280 = vector.load %arg11[%c0_237, %c0_238] : memref<1x128xf32, #tpu.memory_space<vmem>>, vector<1x128xf32>
    %281 = vector.shape_cast %280 : vector<1x128xf32> to vector<1x128xf32>
    %282 = vector.broadcast %281 : vector<1x128xf32> to vector<16x128xf32>
    %c0_239 = arith.constant 0 : index
    %c0_240 = arith.constant 0 : index
    %c0_241 = arith.constant 0 : index
    %283 = vector.load %arg16[%c0_239, %c0_240, %c0_241] : memref<2x32x128xbf16, #tpu.memory_space<vmem>>, vector<1x16x128xbf16>
    %284 = vector.shape_cast %283 : vector<1x16x128xbf16> to vector<16x128xbf16>
    %c0_242 = arith.constant 0 : index
    %c0_243 = arith.constant 0 : index
    %c0_244 = arith.constant 0 : index
    %285 = vector.load %arg6[%c0_242, %c0_243, %c0_244] : memref<4x128x128xbf16, #tpu.memory_space<vmem>>, vector<1x128x128xbf16>
    %286 = vector.shape_cast %285 : vector<1x128x128xbf16> to vector<128x128xbf16>
    %cst_245 = arith.constant dense<0.000000e+00> : vector<16x128xf32>
    %287 = tpu.matmul %284, %286, %cst_245 {dimension_numbers = #tpu.dot_dimension_numbers<[1], [0], [0], [1], [0, 0, 1, 1], [], []>} : vector<16x128xbf16>, vector<128x128xbf16>, vector<16x128xf32> -> vector<16x128xf32>
    %288 = arith.addf %282, %287 : vector<16x128xf32>
    %c1_246 = arith.constant 1 : index
    %c0_247 = arith.constant 0 : index
    %c0_248 = arith.constant 0 : index
    %289 = vector.load %arg16[%c1_246, %c0_247, %c0_248] : memref<2x32x128xbf16, #tpu.memory_space<vmem>>, vector<1x16x128xbf16>
    %290 = vector.shape_cast %289 : vector<1x16x128xbf16> to vector<16x128xbf16>
    %c1_249 = arith.constant 1 : index
    %c0_250 = arith.constant 0 : index
    %c0_251 = arith.constant 0 : index
    %291 = vector.load %arg6[%c1_249, %c0_250, %c0_251] : memref<4x128x128xbf16, #tpu.memory_space<vmem>>, vector<1x128x128xbf16>
    %292 = vector.shape_cast %291 : vector<1x128x128xbf16> to vector<128x128xbf16>
    %cst_252 = arith.constant dense<0.000000e+00> : vector<16x128xf32>
    %293 = tpu.matmul %290, %292, %cst_252 {dimension_numbers = #tpu.dot_dimension_numbers<[1], [0], [0], [1], [0, 0, 1, 1], [], []>} : vector<16x128xbf16>, vector<128x128xbf16>, vector<16x128xf32> -> vector<16x128xf32>
    %294 = arith.addf %288, %293 : vector<16x128xf32>
    %c0_253 = arith.constant 0 : index
    %c16_254 = arith.constant 16 : index
    %c0_255 = arith.constant 0 : index
    %295 = vector.load %arg16[%c0_253, %c16_254, %c0_255] : memref<2x32x128xbf16, #tpu.memory_space<vmem>>, vector<1x16x128xbf16>
    %296 = vector.shape_cast %295 : vector<1x16x128xbf16> to vector<16x128xbf16>
    %c2_256 = arith.constant 2 : index
    %c0_257 = arith.constant 0 : index
    %c0_258 = arith.constant 0 : index
    %297 = vector.load %arg6[%c2_256, %c0_257, %c0_258] : memref<4x128x128xbf16, #tpu.memory_space<vmem>>, vector<1x128x128xbf16>
    %298 = vector.shape_cast %297 : vector<1x128x128xbf16> to vector<128x128xbf16>
    %cst_259 = arith.constant dense<0.000000e+00> : vector<16x128xf32>
    %299 = tpu.matmul %296, %298, %cst_259 {dimension_numbers = #tpu.dot_dimension_numbers<[1], [0], [0], [1], [0, 0, 1, 1], [], []>} : vector<16x128xbf16>, vector<128x128xbf16>, vector<16x128xf32> -> vector<16x128xf32>
    %300 = arith.addf %294, %299 : vector<16x128xf32>
    %c1_260 = arith.constant 1 : index
    %c16_261 = arith.constant 16 : index
    %c0_262 = arith.constant 0 : index
    %301 = vector.load %arg16[%c1_260, %c16_261, %c0_262] : memref<2x32x128xbf16, #tpu.memory_space<vmem>>, vector<1x16x128xbf16>
    %302 = vector.shape_cast %301 : vector<1x16x128xbf16> to vector<16x128xbf16>
    %c3_263 = arith.constant 3 : index
    %c0_264 = arith.constant 0 : index
    %c0_265 = arith.constant 0 : index
    %303 = vector.load %arg6[%c3_263, %c0_264, %c0_265] : memref<4x128x128xbf16, #tpu.memory_space<vmem>>, vector<1x128x128xbf16>
    %304 = vector.shape_cast %303 : vector<1x128x128xbf16> to vector<128x128xbf16>
    %cst_266 = arith.constant dense<0.000000e+00> : vector<16x128xf32>
    %305 = tpu.matmul %302, %304, %cst_266 {dimension_numbers = #tpu.dot_dimension_numbers<[1], [0], [0], [1], [0, 0, 1, 1], [], []>} : vector<16x128xbf16>, vector<128x128xbf16>, vector<16x128xf32> -> vector<16x128xf32>
    %306 = arith.addf %300, %305 : vector<16x128xf32>
    %c0_267 = arith.constant 0 : index
    %c0_268 = arith.constant 0 : index
    %c0_269 = arith.constant 0 : index
    %307 = vector.load %arg12[%c0_267, %c0_268, %c0_269] : memref<1x16x128xf32, #tpu.memory_space<vmem>>, vector<1x16x128xf32>
    %308 = vector.shape_cast %307 : vector<1x16x128xf32> to vector<16x128xf32>
    %309 = vector.shape_cast %306 : vector<16x128xf32> to vector<1x16x128xf32>
    tpu.vector_store %arg12[%c0_267, %c0_268, %c0_269], %309 {strides = array<i32>} : memref<1x16x128xf32, #tpu.memory_space<vmem>>, vector<1x16x128xf32>,
    return
  }
  func.func @transform_0(%arg0: i32) -> (i32, i32, i32, i32) {
    %c0_i32 = arith.constant 0 : i32
    %c0_i32_0 = arith.constant 0 : i32
    %c0_i32_1 = arith.constant 0 : i32
    %c0_i32_2 = arith.constant 0 : i32
    return %arg0, %c0_i32, %c0_i32_0, %c0_i32_1 : i32, i32, i32, i32
  }
  func.func @transform_1(%arg0: i32) -> (i32, i32, i32) {
    %c0_i32 = arith.constant 0 : i32
    %c0_i32_0 = arith.constant 0 : i32
    %c0_i32_1 = arith.constant 0 : i32
    %c0_i32_2 = arith.constant 0 : i32
    return %c0_i32, %c0_i32_0, %c0_i32_1 : i32, i32, i32
  }
  func.func @transform_2(%arg0: i32) -> (i32, i32, i32) {
    %c0_i32 = arith.constant 0 : i32
    %c0_i32_0 = arith.constant 0 : i32
    %c0_i32_1 = arith.constant 0 : i32
    %c0_i32_2 = arith.constant 0 : i32
    return %c0_i32, %c0_i32_0, %c0_i32_1 : i32, i32, i32
  }
  func.func @transform_3(%arg0: i32) -> (i32, i32, i32) {
    %c0_i32 = arith.constant 0 : i32
    %c0_i32_0 = arith.constant 0 : i32
    %c0_i32_1 = arith.constant 0 : i32
    %c0_i32_2 = arith.constant 0 : i32
    return %c0_i32, %c0_i32_0, %c0_i32_1 : i32, i32, i32
  }
  func.func @transform_4(%arg0: i32) -> (i32, i32, i32) {
    %c0_i32 = arith.constant 0 : i32
    %c0_i32_0 = arith.constant 0 : i32
    %c0_i32_1 = arith.constant 0 : i32
    %c0_i32_2 = arith.constant 0 : i32
    return %c0_i32, %c0_i32_0, %c0_i32_1 : i32, i32, i32
  }
  func.func @transform_5(%arg0: i32) -> (i32, i32, i32) {
    %c0_i32 = arith.constant 0 : i32
    %c0_i32_0 = arith.constant 0 : i32
    %c0_i32_1 = arith.constant 0 : i32
    %c0_i32_2 = arith.constant 0 : i32
    return %c0_i32, %c0_i32_0, %c0_i32_1 : i32, i32, i32
  }
  func.func @transform_6(%arg0: i32) -> (i32, i32) {
    %c0_i32 = arith.constant 0 : i32
    %c0_i32_0 = arith.constant 0 : i32
    %c0_i32_1 = arith.constant 0 : i32
    return %c0_i32, %c0_i32_0 : i32, i32
  }
  func.func @transform_7(%arg0: i32) -> (i32, i32) {
    %c0_i32 = arith.constant 0 : i32
    %c0_i32_0 = arith.constant 0 : i32
    %c0_i32_1 = arith.constant 0 : i32
    return %c0_i32, %c0_i32_0 : i32, i32
  }
  func.func @transform_8(%arg0: i32) -> (i32, i32) {
    %c0_i32 = arith.constant 0 : i32
    %c0_i32_0 = arith.constant 0 : i32
    %c0_i32_1 = arith.constant 0 : i32
    return %c0_i32, %c0_i32_0 : i32, i32
  }
  func.func @transform_9(%arg0: i32) -> (i32, i32) {
    %c0_i32 = arith.constant 0 : i32
    %c0_i32_0 = arith.constant 0 : i32
    %c0_i32_1 = arith.constant 0 : i32
    return %c0_i32, %c0_i32_0 : i32, i32
  }
  func.func @transform_10(%arg0: i32) -> (i32, i32) {
    %c0_i32 = arith.constant 0 : i32
    %c0_i32_0 = arith.constant 0 : i32
    %c0_i32_1 = arith.constant 0 : i32
    return %c0_i32, %c0_i32_0 : i32, i32
  }
  func.func @transform_11(%arg0: i32) -> (i32, i32, i32) {
    %c0_i32 = arith.constant 0 : i32
    %c0_i32_0 = arith.constant 0 : i32
    %c0_i32_1 = arith.constant 0 : i32
    return %arg0, %c0_i32, %c0_i32_0 : i32, i32, i32
  }
}

</mosaic_0001>

<llo_original>
// kernel: tpu_custom_call.1
$region0: #{tpu_custom_call.1}
  #allocation0 [shape = 'u32[]', space=smem, size = 0x4, offset = 0x4, fixed_abs, tag = 'smem constant byte address 0x4 - core index']
  #allocation1 [shape = 'u32[144,128]{1,0:T(1,128)}', space=vmem, size = 0x12000, scoped, tag = 'internal scratch']
  #allocation2 [shape = 'bf16[2,144,128]{2,1,0:T(16,128)(2,1)}', space=vmem, size = 0x12000, scoped, tag = 'scratch operand']
  #allocation3 [shape = 'bf16[2,80,128]{2,1,0:T(16,128)(2,1)}', space=vmem, size = 0xa000, scoped, tag = 'scratch operand']
  #allocation4 [shape = 'bf16[2,48,128]{2,1,0:T(16,128)(2,1)}', space=vmem, size = 0x6000, scoped, tag = 'scratch operand']
  #allocation5 [shape = 'bf16[2,32,128]{2,1,0:T(16,128)(2,1)}', space=vmem, size = 0x4000, scoped, tag = 'scratch operand']
  %s0 = inlined_call_operand.hbm [shape: bf16[2,2,272,128], index: 0, kind: input, shape index: {}]
  %s1 = inlined_call_operand.hbm [shape: bf16[4,128,128], index: 1, kind: input, shape index: {}]
  %s2 = inlined_call_operand.hbm [shape: bf16[4,128,128], index: 2, kind: input, shape index: {}]
  %s3 = inlined_call_operand.hbm [shape: bf16[4,128,128], index: 3, kind: input, shape index: {}]
  %s4 = inlined_call_operand.hbm [shape: bf16[4,128,128], index: 4, kind: input, shape index: {}]
  %s5 = inlined_call_operand.hbm [shape: bf16[4,128,128], index: 5, kind: input, shape index: {}]
  %s6 = inlined_call_operand.vmem [shape: f32[1,128], index: 6, kind: input, shape index: {}]
  %s7 = inlined_call_operand.vmem [shape: f32[1,128], index: 7, kind: input, shape index: {}]
  %s8 = inlined_call_operand.vmem [shape: f32[1,128], index: 8, kind: input, shape index: {}]
  %s9 = inlined_call_operand.vmem [shape: f32[1,128], index: 9, kind: input, shape index: {}]
  %s10 = inlined_call_operand.vmem [shape: f32[1,128], index: 10, kind: input, shape index: {}]
  %s11 = inlined_call_operand.hbm [shape: f32[2,16,128], index: 11, kind: output, shape index: {}]
  %s12 = sld [smem:[#allocation0]]
  $region101: #{tpu_custom_call.1} parent=0
    _
  %s14 = ssub.s32 1, %s12
  %s15 = scalar_select 0, %s14, %s12
  $region1: #{tpu_custom_call.1} parent=0
    #allocation6 [shape = 'u8[278528]{0}', space=vmem, size = 0x44000, scoped, tag = 'input window, operand 0']
    #allocation7 [shape = 's32[2]{0}', space=sflag, size = 0x8, scoped, tag = 'scoped memory for tpu_custom_call.1']
    #allocation8 [shape = 's32[2]{0}', space=sflag, size = 0x8, scoped, tag = 'scoped memory for tpu_custom_call.1']
    #allocation9 [shape = 'u8[131072]{0}', space=vmem, size = 0x20000, scoped, tag = 'input window, operand 1, single buffered']
    #allocation10 [shape = 's32[1]{0}', space=sflag, size = 0x4, scoped, tag = 'scoped memory for tpu_custom_call.1']
    #allocation11 [shape = 'u8[131072]{0}', space=vmem, size = 0x20000, scoped, tag = 'input window, operand 2, single buffered']
    #allocation12 [shape = 'u8[131072]{0}', space=vmem, size = 0x20000, scoped, tag = 'input window, operand 3, single buffered']
    #allocation13 [shape = 's32[1]{0}', space=sflag, size = 0x4, scoped, tag = 'scoped memory for tpu_custom_call.1']
    #allocation14 [shape = 'u8[131072]{0}', space=vmem, size = 0x20000, scoped, tag = 'input window, operand 4, single buffered']
    #allocation15 [shape = 'u8[131072]{0}', space=vmem, size = 0x20000, scoped, tag = 'input window, operand 5, single buffered']
    #allocation16 [shape = 's32[1]{0}', space=sflag, size = 0x4, scoped, tag = 'scoped memory for tpu_custom_call.1']
    #allocation17 [shape = 'u8[16384]{0}', space=vmem, size = 0x4000, scoped, tag = 'output window, operand 0']
    %16 = vsyncpa [#allocation7], 0
    %s17 = scalar_lea.sflag [#allocation7], 1
    %18 = vsyncpa %s17, 0
    %19 = vsyncpa [#allocation10], 0
    %20 = vsyncpa [#allocation13], 0
    %21 = vsyncpa [#allocation16], 0
    %22 = vsyncpa [#allocation8], 0
    %s23 = scalar_lea.sflag [#allocation8], 1
    %24 = vsyncpa %s23, 0
    loop: start=0, step=1, limit=4
    $region2: #{tpu_custom_call.1} parent=1 // loop_pre_header
      _
    $region3: #{tpu_custom_call.1} parent=1 // loop_header
      %s26 = sphi 0, %s30
      %p27 = scmp.ge.s32.totalorder %s26, 4
      %s36 = sphi 0, %s38
      %s39 = sphi 0, %s36
      %s40 = sphi 0, %s39
      %s56 = sphi 0, %s40
      %s60 = sphi 0, %s60
      %s62 = sphi 0, %s60
      %s63 = sphi 0, %s62
      %s77 = sphi 0, %s63
      %s81 = sphi 0, %s81
      %s83 = sphi 0, %s81
      %s84 = sphi 0, %s83
      %s98 = sphi 0, %s84
      %s102 = sphi 0, %s102
      %s104 = sphi 0, %s102
      %s105 = sphi 0, %s104
      %s119 = sphi 0, %s105
      %s123 = sphi 0, %s123
      %s125 = sphi 0, %s123
      %s126 = sphi 0, %s125
      %s140 = sphi 0, %s126
      %s144 = sphi 0, %s144
      %s146 = sphi 0, %s144
      %s147 = sphi 0, %s146
      %s161 = sphi 0, %s147
      %s165 = sphi 0, %s165
      %s167 = sphi 0, %s165
      %s168 = sphi 0, %s167
      %s182 = sphi 0, %s168
      %s186 = sphi 0, %s186
      %s188 = sphi 0, %s186
      %s189 = sphi 0, %s188
      %s203 = sphi 0, %s189
      %s207 = sphi 0, %s207
      %s209 = sphi 0, %s207
      %s210 = sphi 0, %s209
      %s224 = sphi 0, %s210
      %s228 = sphi 0, %s228
      %s230 = sphi 0, %s228
      %s231 = sphi 0, %s230
      %s245 = sphi 0, %s231
      %s249 = sphi 0, %s249
      %s251 = sphi 0, %s249
      %s252 = sphi 0, %s251
      %s266 = sphi 0, %s252
      %s272 = sphi 0, %s274
      %s275 = sphi 0, %s272
      %s276 = sphi 0, %s275
      %s292 = sphi 0, %s276
    $region4: #{tpu_custom_call.1} parent=1 // loop_header_branch
      %29 = sbr.rel (%p27) target = $region8
    $region5: #{tpu_custom_call.1} parent=1 // loop_body
      %s31 = ssub.s32 %s26, 1
      %s32 = ssub.s32 %s26, 2
      %s33 = sadd.s32 %s26, 1
      %s34 = ssub.s32 %s26, %s33
      %p35 = scmp.eq.s32.totalorder %s34, 0
      %s37 = sadd.s32 %s36, 1
      %s38 = scalar_select %p35, %s36, %s37
      %p41 = pneg %p35
      %p42 = scmp.eq.s32.totalorder %s26, 1
      %p43 = por %p41, %p42
      %p44 = scmp.ne.s32.totalorder %s36, %s39
      %p45 = scmp.eq.s32.totalorder %s26, 0
      %p46 = por %p44, %p45
      %p47 = scmp.ne.s32.totalorder %s36, %s39
      %p48 = scmp.eq.s32.totalorder %s31, 1
      %p49 = por %p47, %p48
      %p50 = scmp.ne.s32.totalorder %s39, %s40
      %p51 = scmp.eq.s32.totalorder %s31, 0
      %p52 = por %p50, %p51
      %p53 = scmp.ne.s32.totalorder %s39, %s40
      %p54 = scmp.eq.s32.totalorder %s32, 1
      %p55 = por %p53, %p54
      %p57 = scmp.ne.s32.totalorder %s40, %s56
      %p58 = scmp.eq.s32.totalorder %s32, 0
      %p59 = por %p57, %p58
      %s61 = sadd.s32 %s60, 1
      %p64 = scmp.eq.s32.totalorder %s26, 1
      %p65 = scmp.ne.s32.totalorder %s60, %s62
      %p66 = scmp.eq.s32.totalorder %s26, 0
      %p67 = por %p65, %p66
      %p68 = scmp.ne.s32.totalorder %s60, %s62
      %p69 = scmp.eq.s32.totalorder %s31, 1
      %p70 = por %p68, %p69
      %p71 = scmp.ne.s32.totalorder %s62, %s63
      %p72 = scmp.eq.s32.totalorder %s31, 0
      %p73 = por %p71, %p72
      %p74 = scmp.ne.s32.totalorder %s62, %s63
      %p75 = scmp.eq.s32.totalorder %s32, 1
      %p76 = por %p74, %p75
      %p78 = scmp.ne.s32.totalorder %s63, %s77
      %p79 = scmp.eq.s32.totalorder %s32, 0
      %p80 = por %p78, %p79
      %s82 = sadd.s32 %s81, 1
      %p85 = scmp.eq.s32.totalorder %s26, 1
      %p86 = scmp.ne.s32.totalorder %s81, %s83
      %p87 = scmp.eq.s32.totalorder %s26, 0
      %p88 = por %p86, %p87
      %p89 = scmp.ne.s32.totalorder %s81, %s83
      %p90 = scmp.eq.s32.totalorder %s31, 1
      %p91 = por %p89, %p90
      %p92 = scmp.ne.s32.totalorder %s83, %s84
      %p93 = scmp.eq.s32.totalorder %s31, 0
      %p94 = por %p92, %p93
      %p95 = scmp.ne.s32.totalorder %s83, %s84
      %p96 = scmp.eq.s32.totalorder %s32, 1
      %p97 = por %p95, %p96
      %p99 = scmp.ne.s32.totalorder %s84, %s98
      %p100 = scmp.eq.s32.totalorder %s32, 0
      %p101 = por %p99, %p100
      %s103 = sadd.s32 %s102, 1
      %p106 = scmp.eq.s32.totalorder %s26, 1
      %p107 = scmp.ne.s32.totalorder %s102, %s104
      %p108 = scmp.eq.s32.totalorder %s26, 0
      %p109 = por %p107, %p108
      %p110 = scmp.ne.s32.totalorder %s102, %s104
      %p111 = scmp.eq.s32.totalorder %s31, 1
      %p112 = por %p110, %p111
      %p113 = scmp.ne.s32.totalorder %s104, %s105
      %p114 = scmp.eq.s32.totalorder %s31, 0
      %p115 = por %p113, %p114
      %p116 = scmp.ne.s32.totalorder %s104, %s105
      %p117 = scmp.eq.s32.totalorder %s32, 1
      %p118 = por %p116, %p117
      %p120 = scmp.ne.s32.totalorder %s105, %s119
      %p121 = scmp.eq.s32.totalorder %s32, 0
      %p122 = por %p120, %p121
      %s124 = sadd.s32 %s123, 1
      %p127 = scmp.eq.s32.totalorder %s26, 1
      %p128 = scmp.ne.s32.totalorder %s123, %s125
      %p129 = scmp.eq.s32.totalorder %s26, 0
      %p130 = por %p128, %p129
      %p131 = scmp.ne.s32.totalorder %s123, %s125
      %p132 = scmp.eq.s32.totalorder %s31, 1
      %p133 = por %p131, %p132
      %p134 = scmp.ne.s32.totalorder %s125, %s126
      %p135 = scmp.eq.s32.totalorder %s31, 0
      %p136 = por %p134, %p135
      %p137 = scmp.ne.s32.totalorder %s125, %s126
      %p138 = scmp.eq.s32.totalorder %s32, 1
      %p139 = por %p137, %p138
      %p141 = scmp.ne.s32.totalorder %s126, %s140
      %p142 = scmp.eq.s32.totalorder %s32, 0
      %p143 = por %p141, %p142
      %s145 = sadd.s32 %s144, 1
      %p148 = scmp.eq.s32.totalorder %s26, 1
      %p149 = scmp.ne.s32.totalorder %s144, %s146
      %p150 = scmp.eq.s32.totalorder %s26, 0
      %p151 = por %p149, %p150
      %p152 = scmp.ne.s32.totalorder %s144, %s146
      %p153 = scmp.eq.s32.totalorder %s31, 1
      %p154 = por %p152, %p153
      %p155 = scmp.ne.s32.totalorder %s146, %s147
      %p156 = scmp.eq.s32.totalorder %s31, 0
      %p157 = por %p155, %p156
      %p158 = scmp.ne.s32.totalorder %s146, %s147
      %p159 = scmp.eq.s32.totalorder %s32, 1
      %p160 = por %p158, %p159
      %p162 = scmp.ne.s32.totalorder %s147, %s161
      %p163 = scmp.eq.s32.totalorder %s32, 0
      %p164 = por %p162, %p163
      %s166 = sadd.s32 %s165, 1
      %p169 = scmp.eq.s32.totalorder %s26, 1
      %p170 = scmp.ne.s32.totalorder %s165, %s167
      %p171 = scmp.eq.s32.totalorder %s26, 0
      %p172 = por %p170, %p171
      %p173 = scmp.ne.s32.totalorder %s165, %s167
      %p174 = scmp.eq.s32.totalorder %s31, 1
      %p175 = por %p173, %p174
      %p176 = scmp.ne.s32.totalorder %s167, %s168
      %p177 = scmp.eq.s32.totalorder %s31, 0
      %p178 = por %p176, %p177
      %p179 = scmp.ne.s32.totalorder %s167, %s168
      %p180 = scmp.eq.s32.totalorder %s32, 1
      %p181 = por %p179, %p180
      %p183 = scmp.ne.s32.totalorder %s168, %s182
      %p184 = scmp.eq.s32.totalorder %s32, 0
      %p185 = por %p183, %p184
      %s187 = sadd.s32 %s186, 1
      %p190 = scmp.eq.s32.totalorder %s26, 1
      %p191 = scmp.ne.s32.totalorder %s186, %s188
      %p192 = scmp.eq.s32.totalorder %s26, 0
      %p193 = por %p191, %p192
      %p194 = scmp.ne.s32.totalorder %s186, %s188
      %p195 = scmp.eq.s32.totalorder %s31, 1
      %p196 = por %p194, %p195
      %p197 = scmp.ne.s32.totalorder %s188, %s189
      %p198 = scmp.eq.s32.totalorder %s31, 0
      %p199 = por %p197, %p198
      %p200 = scmp.ne.s32.totalorder %s188, %s189
      %p201 = scmp.eq.s32.totalorder %s32, 1
      %p202 = por %p200, %p201
      %p204 = scmp.ne.s32.totalorder %s189, %s203
      %p205 = scmp.eq.s32.totalorder %s32, 0
      %p206 = por %p204, %p205
      %s208 = sadd.s32 %s207, 1
      %p211 = scmp.eq.s32.totalorder %s26, 1
      %p212 = scmp.ne.s32.totalorder %s207, %s209
      %p213 = scmp.eq.s32.totalorder %s26, 0
      %p214 = por %p212, %p213
      %p215 = scmp.ne.s32.totalorder %s207, %s209
      %p216 = scmp.eq.s32.totalorder %s31, 1
      %p217 = por %p215, %p216
      %p218 = scmp.ne.s32.totalorder %s209, %s210
      %p219 = scmp.eq.s32.totalorder %s31, 0
      %p220 = por %p218, %p219
      %p221 = scmp.ne.s32.totalorder %s209, %s210
      %p222 = scmp.eq.s32.totalorder %s32, 1
      %p223 = por %p221, %p222
      %p225 = scmp.ne.s32.totalorder %s210, %s224
      %p226 = scmp.eq.s32.totalorder %s32, 0
      %p227 = por %p225, %p226
      %s229 = sadd.s32 %s228, 1
      %p232 = scmp.eq.s32.totalorder %s26, 1
      %p233 = scmp.ne.s32.totalorder %s228, %s230
      %p234 = scmp.eq.s32.totalorder %s26, 0
      %p235 = por %p233, %p234
      %p236 = scmp.ne.s32.totalorder %s228, %s230
      %p237 = scmp.eq.s32.totalorder %s31, 1
      %p238 = por %p236, %p237
      %p239 = scmp.ne.s32.totalorder %s230, %s231
      %p240 = scmp.eq.s32.totalorder %s31, 0
      %p241 = por %p239, %p240
      %p242 = scmp.ne.s32.totalorder %s230, %s231
      %p243 = scmp.eq.s32.totalorder %s32, 1
      %p244 = por %p242, %p243
      %p246 = scmp.ne.s32.totalorder %s231, %s245
      %p247 = scmp.eq.s32.totalorder %s32, 0
      %p248 = por %p246, %p247
      %s250 = sadd.s32 %s249, 1
      %p253 = scmp.eq.s32.totalorder %s26, 1
      %p254 = scmp.ne.s32.totalorder %s249, %s251
      %p255 = scmp.eq.s32.totalorder %s26, 0
      %p256 = por %p254, %p255
      %p257 = scmp.ne.s32.totalorder %s249, %s251
      %p258 = scmp.eq.s32.totalorder %s31, 1
      %p259 = por %p257, %p258
      %p260 = scmp.ne.s32.totalorder %s251, %s252
      %p261 = scmp.eq.s32.totalorder %s31, 0
      %p262 = por %p260, %p261
      %p263 = scmp.ne.s32.totalorder %s251, %s252
      %p264 = scmp.eq.s32.totalorder %s32, 1
      %p265 = por %p263, %p264
      %p267 = scmp.ne.s32.totalorder %s252, %s266
      %p268 = scmp.eq.s32.totalorder %s32, 0
      %p269 = por %p267, %p268
      %s270 = ssub.s32 %s26, %s33
      %p271 = scmp.eq.s32.totalorder %s270, 0
      %s273 = sadd.s32 %s272, 1
      %s274 = scalar_select %p271, %s272, %s273
      %p277 = pneg %p271
      %p278 = scmp.eq.s32.totalorder %s26, 1
      %p279 = por %p277, %p278
      %p280 = scmp.ne.s32.totalorder %s272, %s275
      %p281 = scmp.eq.s32.totalorder %s26, 0
      %p282 = por %p280, %p281
      %p283 = scmp.ne.s32.totalorder %s272, %s275
      %p284 = scmp.eq.s32.totalorder %s31, 1
      %p285 = por %p283, %p284
      %p286 = scmp.ne.s32.totalorder %s275, %s276
      %p287 = scmp.eq.s32.totalorder %s31, 0
      %p288 = por %p286, %p287
      %p289 = scmp.ne.s32.totalorder %s275, %s276
      %p290 = scmp.eq.s32.totalorder %s32, 1
      %p291 = por %p289, %p290
      %p293 = scmp.ne.s32.totalorder %s276, %s292
      %p294 = scmp.eq.s32.totalorder %s32, 0
      %p295 = por %p293, %p294
      %p296 = scmp.le.s32.totalorder 1, %s26
      %p297 = scmp.lt.s32.totalorder %s26, 3
      %p298 = pnand %p296, %p297
      %p299 = pneg %p298
      // Predicated region
      $region9: #{tpu_custom_call.1} parent=5 // pred_check
        _
      $region10: #{tpu_custom_call.1} parent=5 // pred_check_branch
        %301 = sbr.rel (%p298) target = $region12
      $region11: #{tpu_custom_call.1} parent=5 // pred_region
        %s302 = ssub.s32 %s26, 1
        // Predicated region
        $region13: #{tpu_custom_call.1} parent=11 // pred_check
          %p303 = pneg %p73
        $region14: #{tpu_custom_call.1} parent=11 // pred_check_branch
          %305 = sbr.rel (%p303) target = $region16
        $region15: #{tpu_custom_call.1} parent=11 // pred_region
          %s307 = ssub.s32 4096, 4096
          %308 = vsyncadd [#allocation10], %s307
          %s309 = sshll.u32 [#allocation9], 4
          %s310 = int_to_ptr.vmem [resolvable:$true] %s309
          %315 = dma.hbm_to_vmem [thread:$0]  %s1, 4096, %s310, [#allocation10], 64, 64, 4
        $region16: #{tpu_custom_call.1} parent=11 // pred_fallthru
          _
        // Predicated region
        $region17: #{tpu_custom_call.1} parent=11 // pred_check
          %p316 = pneg %p94
        $region18: #{tpu_custom_call.1} parent=11 // pred_check_branch
          %318 = sbr.rel (%p316) target = $region20
        $region19: #{tpu_custom_call.1} parent=11 // pred_region
          %s320 = ssub.s32 4096, 4096
          %321 = vsyncadd [#allocation10], %s320
          %s322 = sshll.u32 [#allocation11], 4
          %s323 = int_to_ptr.vmem [resolvable:$true] %s322
          %328 = dma.hbm_to_vmem [thread:$0]  %s2, 4096, %s323, [#allocation10], 64, 64, 4
        $region20: #{tpu_custom_call.1} parent=11 // pred_fallthru
          _
        // Predicated region
        $region21: #{tpu_custom_call.1} parent=11 // pred_check
          %p329 = pneg %p115
        $region22: #{tpu_custom_call.1} parent=11 // pred_check_branch
          %331 = sbr.rel (%p329) target = $region24
        $region23: #{tpu_custom_call.1} parent=11 // pred_region
          %s333 = ssub.s32 4096, 4096
          %334 = vsyncadd [#allocation13], %s333
          %s335 = sshll.u32 [#allocation12], 4
          %s336 = int_to_ptr.vmem [resolvable:$true] %s335
          %341 = dma.hbm_to_vmem [thread:$0]  %s3, 4096, %s336, [#allocation13], 64, 64, 4
        $region24: #{tpu_custom_call.1} parent=11 // pred_fallthru
          _
        // Predicated region
        $region25: #{tpu_custom_call.1} parent=11 // pred_check
          %p342 = pneg %p136
        $region26: #{tpu_custom_call.1} parent=11 // pred_check_branch
          %344 = sbr.rel (%p342) target = $region28
        $region27: #{tpu_custom_call.1} parent=11 // pred_region
          %s346 = ssub.s32 4096, 4096
          %347 = vsyncadd [#allocation13], %s346
          %s348 = sshll.u32 [#allocation14], 4
          %s349 = int_to_ptr.vmem [resolvable:$true] %s348
          %354 = dma.hbm_to_vmem [thread:$0]  %s4, 4096, %s349, [#allocation13], 64, 64, 4
        $region28: #{tpu_custom_call.1} parent=11 // pred_fallthru
          _
        // Predicated region
        $region29: #{tpu_custom_call.1} parent=11 // pred_check
          %p355 = pneg %p157
        $region30: #{tpu_custom_call.1} parent=11 // pred_check_branch
          %357 = sbr.rel (%p355) target = $region32
        $region31: #{tpu_custom_call.1} parent=11 // pred_region
          %s359 = ssub.s32 4096, 4096
          %360 = vsyncadd [#allocation16], %s359
          %s361 = sshll.u32 [#allocation15], 4
          %s362 = int_to_ptr.vmem [resolvable:$true] %s361
          %367 = dma.hbm_to_vmem [thread:$0]  %s5, 4096, %s362, [#allocation16], 64, 64, 4
        $region32: #{tpu_custom_call.1} parent=11 // pred_fallthru
          _
        // Predicated region
        $region33: #{tpu_custom_call.1} parent=11 // pred_check
          %p368 = pneg %p178
        $region34: #{tpu_custom_call.1} parent=11 // pred_check_branch
          %370 = sbr.rel (%p368) target = $region36
        $region35: #{tpu_custom_call.1} parent=11 // pred_region
          _
        $region36: #{tpu_custom_call.1} parent=11 // pred_fallthru
          _
        // Predicated region
        $region37: #{tpu_custom_call.1} parent=11 // pred_check
          %p371 = pneg %p199
        $region38: #{tpu_custom_call.1} parent=11 // pred_check_branch
          %373 = sbr.rel (%p371) target = $region40
        $region39: #{tpu_custom_call.1} parent=11 // pred_region
          _
        $region40: #{tpu_custom_call.1} parent=11 // pred_fallthru
          _
        // Predicated region
        $region41: #{tpu_custom_call.1} parent=11 // pred_check
          %p374 = pneg %p220
        $region42: #{tpu_custom_call.1} parent=11 // pred_check_branch
          %376 = sbr.rel (%p374) target = $region44
        $region43: #{tpu_custom_call.1} parent=11 // pred_region
          _
        $region44: #{tpu_custom_call.1} parent=11 // pred_fallthru
          _
        // Predicated region
        $region45: #{tpu_custom_call.1} parent=11 // pred_check
          %p377 = pneg %p241
        $region46: #{tpu_custom_call.1} parent=11 // pred_check_branch
          %379 = sbr.rel (%p377) target = $region48
        $region47: #{tpu_custom_call.1} parent=11 // pred_region
          _
        $region48: #{tpu_custom_call.1} parent=11 // pred_fallthru
          _
        // Predicated region
        $region49: #{tpu_custom_call.1} parent=11 // pred_check
          %p380 = pneg %p262
        $region50: #{tpu_custom_call.1} parent=11 // pred_check_branch
          %382 = sbr.rel (%p380) target = $region52
        $region51: #{tpu_custom_call.1} parent=11 // pred_region
          _
        $region52: #{tpu_custom_call.1} parent=11 // pred_fallthru
          _
      $region12: #{tpu_custom_call.1} parent=5 // pred_fallthru
        _
      %p383 = scmp.lt.s32.totalorder %s26, 2
      // Predicated region
      $region53: #{tpu_custom_call.1} parent=5 // pred_check
        %p384 = pneg %p383
      $region54: #{tpu_custom_call.1} parent=5 // pred_check_branch
        %386 = sbr.rel (%p384) target = $region56
      $region55: #{tpu_custom_call.1} parent=5 // pred_region
        // Predicated region
        $region57: #{tpu_custom_call.1} parent=55 // pred_check
          %p387 = pneg %p46
        $region58: #{tpu_custom_call.1} parent=55 // pred_check_branch
          %389 = sbr.rel (%p387) target = $region60
        $region59: #{tpu_custom_call.1} parent=55 // pred_region
          %s390 = sand.u32 %s36, 1
          %s391 = scalar_lea.sflag [#allocation7], %s390
          %s392 = sand.u32 %s36, 1
          %s393 = smul.addr %s392, 272
          %s394 = scalar_lea.vmem [#allocation6], %s393
          %s396 = ssub.s32 4352, 4352
          %397 = vsyncadd %s391, %s396
          %s398 = smul.addr %s26, 68
          %s399 = smul.addr %s398, 64
          %s400 = scalar_lea.hbm %s0, %s399
          %s401 = sshll.u32 %s394, 4
          %s402 = int_to_ptr.vmem [resolvable:$true] %s401
          %407 = dma.hbm_to_vmem [thread:$0]  %s400, 4352, %s402, %s391, 64, 64, 4
        $region60: #{tpu_custom_call.1} parent=55 // pred_fallthru
          _
      $region56: #{tpu_custom_call.1} parent=5 // pred_fallthru
        _
      %p408 = scmp.le.s32.totalorder 1, %s26
      %p409 = scmp.lt.s32.totalorder %s26, 3
      %p410 = pnand %p408, %p409
      %p411 = pneg %p410
      // Predicated region
      $region61: #{tpu_custom_call.1} parent=5 // pred_check
        _
      $region62: #{tpu_custom_call.1} parent=5 // pred_check_branch
        %413 = sbr.rel (%p410) target = $region64
      $region63: #{tpu_custom_call.1} parent=5 // pred_region
        %s414 = ssub.s32 %s26, 1
        %s415 = sand.u32 %s39, 1
        %s416 = scalar_lea.sflag [#allocation7], %s415
        %s417 = sand.u32 %s39, 1
        %s418 = smul.addr %s417, 272
        %s419 = scalar_lea.vmem [#allocation6], %s418
        // Predicated region
        $region65: #{tpu_custom_call.1} parent=63 // pred_check
          %p420 = pneg %p52
        $region66: #{tpu_custom_call.1} parent=63 // pred_check_branch
          %422 = sbr.rel (%p420) target = $region68
        $region67: #{tpu_custom_call.1} parent=63 // pred_region
          %423 = dma.done %s416, 4352
        $region68: #{tpu_custom_call.1} parent=63 // pred_fallthru
          _
        // Predicated region
        $region69: #{tpu_custom_call.1} parent=63 // pred_check
          %p424 = pneg %p73
        $region70: #{tpu_custom_call.1} parent=63 // pred_check_branch
          %426 = sbr.rel (%p424) target = $region72
        $region71: #{tpu_custom_call.1} parent=63 // pred_region
          %427 = dma.done [#allocation10], 4096
        $region72: #{tpu_custom_call.1} parent=63 // pred_fallthru
          _
        // Predicated region
        $region73: #{tpu_custom_call.1} parent=63 // pred_check
          %p428 = pneg %p94
        $region74: #{tpu_custom_call.1} parent=63 // pred_check_branch
          %430 = sbr.rel (%p428) target = $region76
        $region75: #{tpu_custom_call.1} parent=63 // pred_region
          %431 = dma.done [#allocation10], 4096
        $region76: #{tpu_custom_call.1} parent=63 // pred_fallthru
          _
        // Predicated region
        $region77: #{tpu_custom_call.1} parent=63 // pred_check
          %p432 = pneg %p115
        $region78: #{tpu_custom_call.1} parent=63 // pred_check_branch
          %434 = sbr.rel (%p432) target = $region80
        $region79: #{tpu_custom_call.1} parent=63 // pred_region
          %435 = dma.done [#allocation13], 4096
        $region80: #{tpu_custom_call.1} parent=63 // pred_fallthru
          _
        // Predicated region
        $region81: #{tpu_custom_call.1} parent=63 // pred_check
          %p436 = pneg %p136
        $region82: #{tpu_custom_call.1} parent=63 // pred_check_branch
          %438 = sbr.rel (%p436) target = $region84
        $region83: #{tpu_custom_call.1} parent=63 // pred_region
          %439 = dma.done [#allocation13], 4096
        $region84: #{tpu_custom_call.1} parent=63 // pred_fallthru
          _
        // Predicated region
        $region85: #{tpu_custom_call.1} parent=63 // pred_check
          %p440 = pneg %p157
        $region86: #{tpu_custom_call.1} parent=63 // pred_check_branch
          %442 = sbr.rel (%p440) target = $region88
        $region87: #{tpu_custom_call.1} parent=63 // pred_region
          %443 = dma.done [#allocation16], 4096
        $region88: #{tpu_custom_call.1} parent=63 // pred_fallthru
          _
        %s444 = sand.u32 %s39, 1
        %s445 = scalar_lea.sflag [#allocation7], %s444
        %s446 = sand.u32 %s39, 1
        %s447 = smul.addr %s446, 272
        %s448 = scalar_lea.vmem [#allocation6], %s447
        %p449 = pneg %p52
        %p450 = pneg %p49
        %p451 = pneg %p73
        %p452 = pneg %p70
        %p453 = pneg %p94
        %p454 = pneg %p91
        %p455 = pneg %p115
        %p456 = pneg %p112
        %p457 = pneg %p136
        %p458 = pneg %p133
        %p459 = pneg %p157
        %p460 = pneg %p154
        %p461 = pneg %p178
        %p462 = pneg %p175
        %p463 = pneg %p199
        %p464 = pneg %p196
        %p465 = pneg %p220
        %p466 = pneg %p217
        %p467 = pneg %p241
        %p468 = pneg %p238
        %p469 = pneg %p262
        %p470 = pneg %p259
        %p471 = pneg %p288
        %p472 = pneg %p285
        %s473 = sand.u32 %s275, 1
        %s474 = scalar_lea.sflag [#allocation8], %s473
        %s475 = sand.u32 %s275, 1
        %s476 = smul.addr %s475, 16
        %s477 = scalar_lea.vmem [#allocation17], %s476
        %479 = vst [vmem:[#allocation2] sm:$0xff] 0
        %s480 = scalar_lea.vmem [#allocation2], 72
        %481 = vst [vmem:[%s480 + $0x40] sm:$0xff] 0
        %482 = vst [vmem:[#allocation3] sm:$0xff] 0
        %s483 = scalar_lea.vmem [#allocation3], 40
        %484 = vst [vmem:[%s483 + $0x20] sm:$0xff] 0
        %485 = vst [vmem:[#allocation4] sm:$0xff] 0
        %s486 = scalar_lea.vmem [#allocation4], 24
        %487 = vst [vmem:[%s486 + $0x10] sm:$0xff] 0
        %488 = vst [vmem:[#allocation5] sm:$0xff] 0
        %s489 = scalar_lea.vmem [#allocation5], 16
        %490 = vst [vmem:[%s489 + $0x8] sm:$0xff] 0
        %v491 = vld [vmem:[%s6] sm:$0x1]
        %v493 = vlaneseq
        %v494 = vshrl.u32 %v493, 7
        %v495 = vsub.s32 0, %v494
        %v496 = vrot.slane %v491, %v495
        %v498 = vld [vmem:[%s419] sm:$0xf]
        %v499 = vld [vmem:[%s419 + $0x4] sm:$0xf]
        %v500 = vld [vmem:[%s419 + $0x8] sm:$0xf]
        %v501 = vld [vmem:[%s419 + $0xc] sm:$0xf]
        %v502 = vld [vmem:[%s419 + $0x10] sm:$0xf]
        %v503 = vld [vmem:[%s419 + $0x14] sm:$0xf]
        %v504 = vld [vmem:[%s419 + $0x18] sm:$0xf]
        %v505 = vld [vmem:[%s419 + $0x1c] sm:$0xf]
        %v506 = vld [vmem:[%s419 + $0x20] sm:$0xf]
        %v507 = vld [vmem:[%s419 + $0x24] sm:$0xf]
        %v508 = vld [vmem:[%s419 + $0x28] sm:$0xf]
        %v509 = vld [vmem:[%s419 + $0x2c] sm:$0xf]
        %v510 = vld [vmem:[%s419 + $0x30] sm:$0xf]
        %v511 = vld [vmem:[%s419 + $0x34] sm:$0xf]
        %v512 = vld [vmem:[%s419 + $0x38] sm:$0xf]
        %v513 = vld [vmem:[%s419 + $0x3c] sm:$0xf]
        %v514 = vld [vmem:[%s419 + $0x40] sm:$0xf]
        %v515 = vld [vmem:[%s419 + $0x44] sm:$0xf]
        %v516 = vld [vmem:[%s419 + $0x48] sm:$0xf]
        %v517 = vld [vmem:[%s419 + $0x4c] sm:$0xf]
        %v518 = vld [vmem:[%s419 + $0x50] sm:$0xf]
        %v519 = vld [vmem:[%s419 + $0x54] sm:$0xf]
        %v520 = vld [vmem:[%s419 + $0x58] sm:$0xf]
        %v521 = vld [vmem:[%s419 + $0x5c] sm:$0xf]
        %v522 = vld [vmem:[%s419 + $0x60] sm:$0xf]
        %v523 = vld [vmem:[%s419 + $0x64] sm:$0xf]
        %v524 = vld [vmem:[%s419 + $0x68] sm:$0xf]
        %v525 = vld [vmem:[%s419 + $0x6c] sm:$0xf]
        %v526 = vld [vmem:[%s419 + $0x70] sm:$0xf]
        %v527 = vld [vmem:[%s419 + $0x74] sm:$0xf]
        %v528 = vld [vmem:[%s419 + $0x78] sm:$0xf]
        %v529 = vld [vmem:[%s419 + $0x7c] sm:$0xf]
        %v530 = vld [vmem:[#allocation9] sm:$0xf]
        %v531 = vld [vmem:[#allocation9 + $0x4] sm:$0xf]
        %v532 = vld [vmem:[#allocation9 + $0x8] sm:$0xf]
        %v533 = vld [vmem:[#allocation9 + $0xc] sm:$0xf]
        %v534 = vld [vmem:[#allocation9 + $0x10] sm:$0xf]
        %v535 = vld [vmem:[#allocation9 + $0x14] sm:$0xf]
        %v536 = vld [vmem:[#allocation9 + $0x18] sm:$0xf]
        %v537 = vld [vmem:[#allocation9 + $0x1c] sm:$0xf]
        %v538 = vld [vmem:[#allocation9 + $0x20] sm:$0xf]
        %v539 = vld [vmem:[#allocation9 + $0x24] sm:$0xf]
        %v540 = vld [vmem:[#allocation9 + $0x28] sm:$0xf]
        %v541 = vld [vmem:[#allocation9 + $0x2c] sm:$0xf]
        %v542 = vld [vmem:[#allocation9 + $0x30] sm:$0xf]
        %v543 = vld [vmem:[#allocation9 + $0x34] sm:$0xf]
        %v544 = vld [vmem:[#allocation9 + $0x38] sm:$0xf]
        %v545 = vld [vmem:[#allocation9 + $0x3c] sm:$0xf]
        %v578 = vunpack.c.l.b16 %v498
        %v579 = vunpack.c.l.b16 %v499
        %v580 = vunpack.c.l.b16 %v500
        %v581 = vunpack.c.l.b16 %v501
        %v582 = vunpack.c.l.b16 %v502
        %v583 = vunpack.c.l.b16 %v503
        %v584 = vunpack.c.l.b16 %v504
        %v585 = vunpack.c.l.b16 %v505
        %v586 = vunpack.c.l.b16 %v506
        %v587 = vunpack.c.l.b16 %v507
        %v588 = vunpack.c.l.b16 %v508
        %v589 = vunpack.c.l.b16 %v509
        %v590 = vunpack.c.l.b16 %v510
        %v591 = vunpack.c.l.b16 %v511
        %v592 = vunpack.c.l.b16 %v512
        %v593 = vunpack.c.l.b16 %v513
        %v594 = vunpack.c.l.b16 %v514
        %v595 = vunpack.c.l.b16 %v515
        %v596 = vunpack.c.l.b16 %v516
        %v597 = vunpack.c.l.b16 %v517
        %v598 = vunpack.c.l.b16 %v518
        %v599 = vunpack.c.l.b16 %v519
        %v600 = vunpack.c.l.b16 %v520
        %v601 = vunpack.c.l.b16 %v521
        %v602 = vunpack.c.l.b16 %v522
        %v603 = vunpack.c.l.b16 %v523
        %v604 = vunpack.c.l.b16 %v524
        %v605 = vunpack.c.l.b16 %v525
        %v606 = vunpack.c.l.b16 %v526
        %v607 = vunpack.c.l.b16 %v527
        %v608 = vunpack.c.l.b16 %v528
        %v609 = vunpack.c.l.b16 %v529
        %v610 = vpack.c.b16 %v579, %v578
        %v611 = vpack.c.b16 %v581, %v580
        %v612 = vpack.c.b16 %v583, %v582
        %v613 = vpack.c.b16 %v585, %v584
        %v614 = vpack.c.b16 %v587, %v586
        %v615 = vpack.c.b16 %v589, %v588
        %v616 = vpack.c.b16 %v591, %v590
        %v617 = vpack.c.b16 %v593, %v592
        %v618 = vpack.c.b16 %v595, %v594
        %v619 = vpack.c.b16 %v597, %v596
        %v620 = vpack.c.b16 %v599, %v598
        %v621 = vpack.c.b16 %v601, %v600
        %v622 = vpack.c.b16 %v603, %v602
        %v623 = vpack.c.b16 %v605, %v604
        %v624 = vpack.c.b16 %v607, %v606
        %v625 = vpack.c.b16 %v609, %v608
        %v658 = vunpack.c.l.b16 %v530
        %v659 = vunpack.c.l.b16 %v531
        %v660 = vunpack.c.l.b16 %v532
        %v661 = vunpack.c.l.b16 %v533
        %v662 = vunpack.c.l.b16 %v534
        %v663 = vunpack.c.l.b16 %v535
        %v664 = vunpack.c.l.b16 %v536
        %v665 = vunpack.c.l.b16 %v537
        %v666 = vunpack.c.l.b16 %v538
        %v667 = vunpack.c.l.b16 %v539
        %v668 = vunpack.c.l.b16 %v540
        %v669 = vunpack.c.l.b16 %v541
        %v670 = vunpack.c.l.b16 %v542
        %v671 = vunpack.c.l.b16 %v543
        %v672 = vunpack.c.l.b16 %v544
        %v673 = vunpack.c.l.b16 %v545
        %v674 = vpack.c.b16 %v659, %v658
        %v675 = vpack.c.b16 %v661, %v660
        %v676 = vpack.c.b16 %v663, %v662
        %v677 = vpack.c.b16 %v665, %v664
        %v678 = vpack.c.b16 %v667, %v666
        %v679 = vpack.c.b16 %v669, %v668
        %v680 = vpack.c.b16 %v671, %v670
        %v681 = vpack.c.b16 %v673, %v672
        %690 = vmatprep.subr.bf16.mxu0 0
        %691 = vmatpush1.bf16.msra.mxu0 %v674
        %692 = vmatprep.subr.bf16.mxu0 0
        %693 = vmatpush1.bf16.msra.mxu0 %v675
        %694 = vmatprep.subr.bf16.mxu0 0
        %695 = vmatpush1.bf16.msra.mxu0 %v676
        %696 = vmatprep.subr.bf16.mxu0 0
        %697 = vmatpush1.bf16.msra.mxu0 %v677
        %698 = vmatprep.subr.bf16.mxu0 0
        %699 = vmatpush1.bf16.msra.mxu0 %v678
        %700 = vmatprep.subr.bf16.mxu0 0
        %701 = vmatpush1.bf16.msra.mxu0 %v679
        %702 = vmatprep.subr.bf16.mxu0 0
        %703 = vmatpush1.bf16.msra.mxu0 %v680
        %704 = vmatprep.subr.bf16.mxu0 0
        %705 = vmatpush1.bf16.msra.mxu0 %v681
        %706 = vmatprep.subr.bf16.mxu0 0
        %707 = vmatpush1.bf16.msra.mxu0 0
        %708 = vmatprep.subr.bf16.mxu0 0
        %709 = vmatpush1.bf16.msra.mxu0 0
        %710 = vmatprep.subr.bf16.mxu0 0
        %711 = vmatpush1.bf16.msra.mxu0 0
        %712 = vmatprep.subr.bf16.mxu0 0
        %713 = vmatpush1.bf16.msra.mxu0 0
        %714 = vmatprep.subr.bf16.mxu0 0
        %715 = vmatpush1.bf16.msra.mxu0 0
        %716 = vmatprep.subr.bf16.mxu0 0
        %717 = vmatpush1.bf16.msra.mxu0 0
        %718 = vmatprep.subr.bf16.mxu0 0
        %719 = vmatpush1.bf16.msra.mxu0 0
        %720 = vmatprep.subr.bf16.mxu0 0
        %721 = vmatpush1.bf16.msra.mxu0 0
        %722 = vmatprep.mubr.bf16.mxu0 0
        %723 = vmatmul.mubr.bf16.gmra.mrb[0].mxu0 %v610
        %v724 = vpop.f32.mrb[0].mxu0
        %v725 = vadd.f32 0.0, %v724
        %v726 = vpop.f32.mrb[0].mxu0
        %v727 = vpop.f32.mrb[0].mxu0
        %v728 = vadd.f32 0.0, %v727
        %v729 = vpop.f32.mrb[0].mxu0
        %730 = vmatprep.mubr.bf16.mxu0 0
        %731 = vmatmul.mubr.bf16.gmra.mrb[0].mxu0 %v611
        %v732 = vpop.f32.mrb[0].mxu0
        %v733 = vadd.f32 0.0, %v732
        %v734 = vpop.f32.mrb[0].mxu0
        %v735 = vpop.f32.mrb[0].mxu0
        %v736 = vadd.f32 0.0, %v735
        %v737 = vpop.f32.mrb[0].mxu0
        %738 = vmatprep.mubr.bf16.mxu0 0
        %739 = vmatmul.mubr.bf16.gmra.mrb[0].mxu0 %v612
        %v740 = vpop.f32.mrb[0].mxu0
        %v741 = vadd.f32 0.0, %v740
        %v742 = vpop.f32.mrb[0].mxu0
        %v743 = vpop.f32.mrb[0].mxu0
        %v744 = vadd.f32 0.0, %v743
        %v745 = vpop.f32.mrb[0].mxu0
        %746 = vmatprep.mubr.bf16.mxu0 0
        %747 = vmatmul.mubr.bf16.gmra.mrb[0].mxu0 %v613
        %v748 = vpop.f32.mrb[0].mxu0
        %v749 = vadd.f32 0.0, %v748
        %v750 = vpop.f32.mrb[0].mxu0
        %v751 = vpop.f32.mrb[0].mxu0
        %v752 = vadd.f32 0.0, %v751
        %v753 = vpop.f32.mrb[0].mxu0
        %754 = vmatprep.mubr.bf16.mxu0 0
        %755 = vmatmul.mubr.bf16.gmra.mrb[0].mxu0 %v614
        %v756 = vpop.f32.mrb[0].mxu0
        %v757 = vadd.f32 0.0, %v756
        %v758 = vpop.f32.mrb[0].mxu0
        %v759 = vpop.f32.mrb[0].mxu0
        %v760 = vadd.f32 0.0, %v759
        %v761 = vpop.f32.mrb[0].mxu0
        %762 = vmatprep.mubr.bf16.mxu0 0
        %763 = vmatmul.mubr.bf16.gmra.mrb[0].mxu0 %v615
        %v764 = vpop.f32.mrb[0].mxu0
        %v765 = vadd.f32 0.0, %v764
        %v766 = vpop.f32.mrb[0].mxu0
        %v767 = vpop.f32.mrb[0].mxu0
        %v768 = vadd.f32 0.0, %v767
        %v769 = vpop.f32.mrb[0].mxu0
        %770 = vmatprep.mubr.bf16.mxu0 0
        %771 = vmatmul.mubr.bf16.gmra.mrb[0].mxu0 %v616
        %v772 = vpop.f32.mrb[0].mxu0
        %v773 = vadd.f32 0.0, %v772
        %v774 = vpop.f32.mrb[0].mxu0
        %v775 = vpop.f32.mrb[0].mxu0
        %v776 = vadd.f32 0.0, %v775
        %v777 = vpop.f32.mrb[0].mxu0
        %778 = vmatprep.mubr.bf16.mxu0 0
        %779 = vmatmul.mubr.bf16.gmra.mrb[0].mxu0 %v617
        %v780 = vpop.f32.mrb[0].mxu0
        %v781 = vadd.f32 0.0, %v780
        %v782 = vpop.f32.mrb[0].mxu0
        %v783 = vpop.f32.mrb[0].mxu0
        %v784 = vadd.f32 0.0, %v783
        %v785 = vpop.f32.mrb[0].mxu0
        %786 = vmatprep.mubr.bf16.mxu0 0
        %787 = vmatmul.mubr.bf16.gmra.mrb[0].mxu0 %v618
        %v788 = vpop.f32.mrb[0].mxu0
        %v789 = vadd.f32 0.0, %v788
        %v790 = vpop.f32.mrb[0].mxu0
        %v791 = vpop.f32.mrb[0].mxu0
        %v792 = vadd.f32 0.0, %v791
        %v793 = vpop.f32.mrb[0].mxu0
        %794 = vmatprep.mubr.bf16.mxu0 0
        %795 = vmatmul.mubr.bf16.gmra.mrb[0].mxu0 %v619
        %v796 = vpop.f32.mrb[0].mxu0
        %v797 = vadd.f32 0.0, %v796
        %v798 = vpop.f32.mrb[0].mxu0
        %v799 = vpop.f32.mrb[0].mxu0
        %v800 = vadd.f32 0.0, %v799
        %v801 = vpop.f32.mrb[0].mxu0
        %802 = vmatprep.mubr.bf16.mxu0 0
        %803 = vmatmul.mubr.bf16.gmra.mrb[0].mxu0 %v620
        %v804 = vpop.f32.mrb[0].mxu0
        %v805 = vadd.f32 0.0, %v804
        %v806 = vpop.f32.mrb[0].mxu0
        %v807 = vpop.f32.mrb[0].mxu0
        %v808 = vadd.f32 0.0, %v807
        %v809 = vpop.f32.mrb[0].mxu0
        %810 = vmatprep.mubr.bf16.mxu0 0
        %811 = vmatmul.mubr.bf16.gmra.mrb[0].mxu0 %v621
        %v812 = vpop.f32.mrb[0].mxu0
        %v813 = vadd.f32 0.0, %v812
        %v814 = vpop.f32.mrb[0].mxu0
        %v815 = vpop.f32.mrb[0].mxu0
        %v816 = vadd.f32 0.0, %v815
        %v817 = vpop.f32.mrb[0].mxu0
        %818 = vmatprep.mubr.bf16.mxu0 0
        %819 = vmatmul.mubr.bf16.gmra.mrb[0].mxu0 %v622
        %v820 = vpop.f32.mrb[0].mxu0
        %v821 = vadd.f32 0.0, %v820
        %v822 = vpop.f32.mrb[0].mxu0
        %v823 = vpop.f32.mrb[0].mxu0
        %v824 = vadd.f32 0.0, %v823
        %v825 = vpop.f32.mrb[0].mxu0
        %826 = vmatprep.mubr.bf16.mxu0 0
        %827 = vmatmul.mubr.bf16.gmra.mrb[0].mxu0 %v623
        %v828 = vpop.f32.mrb[0].mxu0
        %v829 = vadd.f32 0.0, %v828
        %v830 = vpop.f32.mrb[0].mxu0
        %v831 = vpop.f32.mrb[0].mxu0
        %v832 = vadd.f32 0.0, %v831
        %v833 = vpop.f32.mrb[0].mxu0
        %834 = vmatprep.mubr.bf16.mxu0 0
        %835 = vmatmul.mubr.bf16.gmra.mrb[0].mxu0 %v624
        %v836 = vpop.f32.mrb[0].mxu0
        %v837 = vadd.f32 0.0, %v836
        %v838 = vpop.f32.mrb[0].mxu0
        %v839 = vpop.f32.mrb[0].mxu0
        %v840 = vadd.f32 0.0, %v839
        %v841 = vpop.f32.mrb[0].mxu0
        %842 = vmatprep.mubr.bf16.mxu0 0
        %843 = vmatmul.mubr.bf16.gmra.mrb[0].mxu0 %v625
        %v844 = vpop.f32.mrb[0].mxu0
        %v845 = vadd.f32 0.0, %v844
        %v846 = vpop.f32.mrb[0].mxu0
        %v847 = vpop.f32.mrb[0].mxu0
        %v848 = vadd.f32 0.0, %v847
        %v849 = vpop.f32.mrb[0].mxu0
        %850 = vdwg.mxu0
        %v851 = vadd.f32 %v496, %v725
        %v852 = vadd.f32 %v496, %v728
        %v853 = vadd.f32 %v496, %v733
        %v854 = vadd.f32 %v496, %v736
        %v855 = vadd.f32 %v496, %v741
        %v856 = vadd.f32 %v496, %v744
        %v857 = vadd.f32 %v496, %v749
        %v858 = vadd.f32 %v496, %v752
        %v859 = vadd.f32 %v496, %v757
        %v860 = vadd.f32 %v496, %v760
        %v861 = vadd.f32 %v496, %v765
        %v862 = vadd.f32 %v496, %v768
        %v863 = vadd.f32 %v496, %v773
        %v864 = vadd.f32 %v496, %v776
        %v865 = vadd.f32 %v496, %v781
        %v866 = vadd.f32 %v496, %v784
        %v867 = vadd.f32 %v496, %v789
        %v868 = vadd.f32 %v496, %v792
        %v869 = vadd.f32 %v496, %v797
        %v870 = vadd.f32 %v496, %v800
        %v871 = vadd.f32 %v496, %v805
        %v872 = vadd.f32 %v496, %v808
        %v873 = vadd.f32 %v496, %v813
        %v874 = vadd.f32 %v496, %v816
        %v875 = vadd.f32 %v496, %v821
        %v876 = vadd.f32 %v496, %v824
        %v877 = vadd.f32 %v496, %v829
        %v878 = vadd.f32 %v496, %v832
        %v879 = vadd.f32 %v496, %v837
        %v880 = vadd.f32 %v496, %v840
        %v881 = vadd.f32 %v496, %v845
        %v882 = vadd.f32 %v496, %v848
        %s883 = scalar_lea.vmem %s419, 136 [#allocation6]
        %v884 = vld [vmem:[%s883] sm:$0xf]
        %v885 = vld [vmem:[%s883 + $0x4] sm:$0xf]
        %v886 = vld [vmem:[%s883 + $0x8] sm:$0xf]
        %v887 = vld [vmem:[%s883 + $0xc] sm:$0xf]
        %v888 = vld [vmem:[%s883 + $0x10] sm:$0xf]
        %v889 = vld [vmem:[%s883 + $0x14] sm:$0xf]
        %v890 = vld [vmem:[%s883 + $0x18] sm:$0xf]
        %v891 = vld [vmem:[%s883 + $0x1c] sm:$0xf]
        %v892 = vld [vmem:[%s883 + $0x20] sm:$0xf]
        %v893 = vld [vmem:[%s883 + $0x24] sm:$0xf]
        %v894 = vld [vmem:[%s883 + $0x28] sm:$0xf]
        %v895 = vld [vmem:[%s883 + $0x2c] sm:$0xf]
        %v896 = vld [vmem:[%s883 + $0x30] sm:$0xf]
        %v897 = vld [vmem:[%s883 + $0x34] sm:$0xf]
        %v898 = vld [vmem:[%s883 + $0x38] sm:$0xf]
        %v899 = vld [vmem:[%s883 + $0x3c] sm:$0xf]
        %v900 = vld [vmem:[%s883 + $0x40] sm:$0xf]
        %v901 = vld [vmem:[%s883 + $0x44] sm:$0xf]
        %v902 = vld [vmem:[%s883 + $0x48] sm:$0xf]
        %v903 = vld [vmem:[%s883 + $0x4c] sm:$0xf]
        %v904 = vld [vmem:[%s883 + $0x50] sm:$0xf]
        %v905 = vld [vmem:[%s883 + $0x54] sm:$0xf]
        %v906 = vld [vmem:[%s883 + $0x58] sm:$0xf]
        %v907 = vld [vmem:[%s883 + $0x5c] sm:$0xf]
        %v908 = vld [vmem:[%s883 + $0x60] sm:$0xf]
        %v909 = vld [vmem:[%s883 + $0x64] sm:$0xf]
        %v910 = vld [vmem:[%s883 + $0x68] sm:$0xf]
        %v911 = vld [vmem:[%s883 + $0x6c] sm:$0xf]
        %v912 = vld [vmem:[%s883 + $0x70] sm:$0xf]
        %v913 = vld [vmem:[%s883 + $0x74] sm:$0xf]
        %v914 = vld [vmem:[%s883 + $0x78] sm:$0xf]
        %v915 = vld [vmem:[%s883 + $0x7c] sm:$0xf]
        %s916 = scalar_lea.vmem [#allocation9], 64
        %v917 = vld [vmem:[%s916] sm:$0xf]
        %v918 = vld [vmem:[%s916 + $0x4] sm:$0xf]
        %v919 = vld [vmem:[%s916 + $0x8] sm:$0xf]
        %v920 = vld [vmem:[%s916 + $0xc] sm:$0xf]
        %v921 = vld [vmem:[%s916 + $0x10] sm:$0xf]
        %v922 = vld [vmem:[%s916 + $0x14] sm:$0xf]
        %v923 = vld [vmem:[%s916 + $0x18] sm:$0xf]
        %v924 = vld [vmem:[%s916 + $0x1c] sm:$0xf]
        %v925 = vld [vmem:[%s916 + $0x20] sm:$0xf]
        %v926 = vld [vmem:[%s916 + $0x24] sm:$0xf]
        %v927 = vld [vmem:[%s916 + $0x28] sm:$0xf]
        %v928 = vld [vmem:[%s916 + $0x2c] sm:$0xf]
        %v929 = vld [vmem:[%s916 + $0x30] sm:$0xf]
        %v930 = vld [vmem:[%s916 + $0x34] sm:$0xf]
        %v931 = vld [vmem:[%s916 + $0x38] sm:$0xf]
        %v932 = vld [vmem:[%s916 + $0x3c] sm:$0xf]
        %v965 = vunpack.c.l.b16 %v884
        %v966 = vunpack.c.l.b16 %v885
        %v967 = vunpack.c.l.b16 %v886
        %v968 = vunpack.c.l.b16 %v887
        %v969 = vunpack.c.l.b16 %v888
        %v970 = vunpack.c.l.b16 %v889
        %v971 = vunpack.c.l.b16 %v890
        %v972 = vunpack.c.l.b16 %v891
        %v973 = vunpack.c.l.b16 %v892
        %v974 = vunpack.c.l.b16 %v893
        %v975 = vunpack.c.l.b16 %v894
        %v976 = vunpack.c.l.b16 %v895
        %v977 = vunpack.c.l.b16 %v896
        %v978 = vunpack.c.l.b16 %v897
        %v979 = vunpack.c.l.b16 %v898
        %v980 = vunpack.c.l.b16 %v899
        %v981 = vunpack.c.l.b16 %v900
        %v982 = vunpack.c.l.b16 %v901
        %v983 = vunpack.c.l.b16 %v902
        %v984 = vunpack.c.l.b16 %v903
        %v985 = vunpack.c.l.b16 %v904
        %v986 = vunpack.c.l.b16 %v905
        %v987 = vunpack.c.l.b16 %v906
        %v988 = vunpack.c.l.b16 %v907
        %v989 = vunpack.c.l.b16 %v908
        %v990 = vunpack.c.l.b16 %v909
        %v991 = vunpack.c.l.b16 %v910
        %v992 = vunpack.c.l.b16 %v911
        %v993 = vunpack.c.l.b16 %v912
        %v994 = vunpack.c.l.b16 %v913
        %v995 = vunpack.c.l.b16 %v914
        %v996 = vunpack.c.l.b16 %v915
        %v997 = vpack.c.b16 %v966, %v965
        %v998 = vpack.c.b16 %v968, %v967
        %v999 = vpack.c.b16 %v970, %v969
        %v1000 = vpack.c.b16 %v972, %v971
        %v1001 = vpack.c.b16 %v974, %v973
        %v1002 = vpack.c.b16 %v976, %v975
        %v1003 = vpack.c.b16 %v978, %v977
        %v1004 = vpack.c.b16 %v980, %v979
        %v1005 = vpack.c.b16 %v982, %v981
        %v1006 = vpack.c.b16 %v984, %v983
        %v1007 = vpack.c.b16 %v986, %v985
        %v1008 = vpack.c.b16 %v988, %v987
        %v1009 = vpack.c.b16 %v990, %v989
        %v1010 = vpack.c.b16 %v992, %v991
        %v1011 = vpack.c.b16 %v994, %v993
        %v1012 = vpack.c.b16 %v996, %v995
        %v1045 = vunpack.c.l.b16 %v917
        %v1046 = vunpack.c.l.b16 %v918
        %v1047 = vunpack.c.l.b16 %v919
        %v1048 = vunpack.c.l.b16 %v920
        %v1049 = vunpack.c.l.b16 %v921
        %v1050 = vunpack.c.l.b16 %v922
        %v1051 = vunpack.c.l.b16 %v923
        %v1052 = vunpack.c.l.b16 %v924
        %v1053 = vunpack.c.l.b16 %v925
        %v1054 = vunpack.c.l.b16 %v926
        %v1055 = vunpack.c.l.b16 %v927
        %v1056 = vunpack.c.l.b16 %v928
        %v1057 = vunpack.c.l.b16 %v929
        %v1058 = vunpack.c.l.b16 %v930
        %v1059 = vunpack.c.l.b16 %v931
        %v1060 = vunpack.c.l.b16 %v932
        %v1061 = vpack.c.b16 %v1046, %v1045
        %v1062 = vpack.c.b16 %v1048, %v1047
        %v1063 = vpack.c.b16 %v1050, %v1049
        %v1064 = vpack.c.b16 %v1052, %v1051
        %v1065 = vpack.c.b16 %v1054, %v1053
        %v1066 = vpack.c.b16 %v1056, %v1055
        %v1067 = vpack.c.b16 %v1058, %v1057
        %v1068 = vpack.c.b16 %v1060, %v1059
        %1077 = vmatprep.subr.bf16.mxu0 0
        %1078 = vmatpush1.bf16.msra.mxu0 %v1061
        %1079 = vmatprep.subr.bf16.mxu0 0
        %1080 = vmatpush1.bf16.msra.mxu0 %v1062
        %1081 = vmatprep.subr.bf16.mxu0 0
        %1082 = vmatpush1.bf16.msra.mxu0 %v1063
        %1083 = vmatprep.subr.bf16.mxu0 0
        %1084 = vmatpush1.bf16.msra.mxu0 %v1064
        %1085 = vmatprep.subr.bf16.mxu0 0
        %1086 = vmatpush1.bf16.msra.mxu0 %v1065
        %1087 = vmatprep.subr.bf16.mxu0 0
        %1088 = vmatpush1.bf16.msra.mxu0 %v1066
        %1089 = vmatprep.subr.bf16.mxu0 0
        %1090 = vmatpush1.bf16.msra.mxu0 %v1067
        %1091 = vmatprep.subr.bf16.mxu0 0
        %1092 = vmatpush1.bf16.msra.mxu0 %v1068
        %1093 = vmatprep.subr.bf16.mxu0 0
        %1094 = vmatpush1.bf16.msra.mxu0 0
        %1095 = vmatprep.subr.bf16.mxu0 0
        %1096 = vmatpush1.bf16.msra.mxu0 0
        %1097 = vmatprep.subr.bf16.mxu0 0
        %1098 = vmatpush1.bf16.msra.mxu0 0
        %1099 = vmatprep.subr.bf16.mxu0 0
        %1100 = vmatpush1.bf16.msra.mxu0 0
        %1101 = vmatprep.subr.bf16.mxu0 0
        %1102 = vmatpush1.bf16.msra.mxu0 0
        %1103 = vmatprep.subr.bf16.mxu0 0
        %1104 = vmatpush1.bf16.msra.mxu0 0
        %1105 = vmatprep.subr.bf16.mxu0 0
        %1106 = vmatpush1.bf16.msra.mxu0 0
        %1107 = vmatprep.subr.bf16.mxu0 0
        %1108 = vmatpush1.bf16.msra.mxu0 0
        %1109 = vmatprep.mubr.bf16.mxu0 0
        %1110 = vmatmul.mubr.bf16.gmra.mrb[0].mxu0 %v997
        %v1111 = vpop.f32.mrb[0].mxu0
        %v1112 = vadd.f32 0.0, %v1111
        %v1113 = vpop.f32.mrb[0].mxu0
        %v1114 = vpop.f32.mrb[0].mxu0
        %v1115 = vadd.f32 0.0, %v1114
        %v1116 = vpop.f32.mrb[0].mxu0
        %1117 = vmatprep.mubr.bf16.mxu0 0
        %1118 = vmatmul.mubr.bf16.gmra.mrb[0].mxu0 %v998
        %v1119 = vpop.f32.mrb[0].mxu0
        %v1120 = vadd.f32 0.0, %v1119
        %v1121 = vpop.f32.mrb[0].mxu0
        %v1122 = vpop.f32.mrb[0].mxu0
        %v1123 = vadd.f32 0.0, %v1122
        %v1124 = vpop.f32.mrb[0].mxu0
        %1125 = vmatprep.mubr.bf16.mxu0 0
        %1126 = vmatmul.mubr.bf16.gmra.mrb[0].mxu0 %v999
        %v1127 = vpop.f32.mrb[0].mxu0
        %v1128 = vadd.f32 0.0, %v1127
        %v1129 = vpop.f32.mrb[0].mxu0
        %v1130 = vpop.f32.mrb[0].mxu0
        %v1131 = vadd.f32 0.0, %v1130
        %v1132 = vpop.f32.mrb[0].mxu0
        %1133 = vmatprep.mubr.bf16.mxu0 0
        %1134 = vmatmul.mubr.bf16.gmra.mrb[0].mxu0 %v1000
        %v1135 = vpop.f32.mrb[0].mxu0
        %v1136 = vadd.f32 0.0, %v1135
        %v1137 = vpop.f32.mrb[0].mxu0
        %v1138 = vpop.f32.mrb[0].mxu0
        %v1139 = vadd.f32 0.0, %v1138
        %v1140 = vpop.f32.mrb[0].mxu0
        %1141 = vmatprep.mubr.bf16.mxu0 0
        %1142 = vmatmul.mubr.bf16.gmra.mrb[0].mxu0 %v1001
        %v1143 = vpop.f32.mrb[0].mxu0
        %v1144 = vadd.f32 0.0, %v1143
        %v1145 = vpop.f32.mrb[0].mxu0
        %v1146 = vpop.f32.mrb[0].mxu0
        %v1147 = vadd.f32 0.0, %v1146
        %v1148 = vpop.f32.mrb[0].mxu0
        %1149 = vmatprep.mubr.bf16.mxu0 0
        %1150 = vmatmul.mubr.bf16.gmra.mrb[0].mxu0 %v1002
        %v1151 = vpop.f32.mrb[0].mxu0
        %v1152 = vadd.f32 0.0, %v1151
        %v1153 = vpop.f32.mrb[0].mxu0
        %v1154 = vpop.f32.mrb[0].mxu0
        %v1155 = vadd.f32 0.0, %v1154
        %v1156 = vpop.f32.mrb[0].mxu0
        %1157 = vmatprep.mubr.bf16.mxu0 0
        %1158 = vmatmul.mubr.bf16.gmra.mrb[0].mxu0 %v1003
        %v1159 = vpop.f32.mrb[0].mxu0
        %v1160 = vadd.f32 0.0, %v1159
        %v1161 = vpop.f32.mrb[0].mxu0
        %v1162 = vpop.f32.mrb[0].mxu0
        %v1163 = vadd.f32 0.0, %v1162
        %v1164 = vpop.f32.mrb[0].mxu0
        %1165 = vmatprep.mubr.bf16.mxu0 0
        %1166 = vmatmul.mubr.bf16.gmra.mrb[0].mxu0 %v1004
        %v1167 = vpop.f32.mrb[0].mxu0
        %v1168 = vadd.f32 0.0, %v1167
        %v1169 = vpop.f32.mrb[0].mxu0
        %v1170 = vpop.f32.mrb[0].mxu0
        %v1171 = vadd.f32 0.0, %v1170
        %v1172 = vpop.f32.mrb[0].mxu0
        %1173 = vmatprep.mubr.bf16.mxu0 0
        %1174 = vmatmul.mubr.bf16.gmra.mrb[0].mxu0 %v1005
        %v1175 = vpop.f32.mrb[0].mxu0
        %v1176 = vadd.f32 0.0, %v1175
        %v1177 = vpop.f32.mrb[0].mxu0
        %v1178 = vpop.f32.mrb[0].mxu0
        %v1179 = vadd.f32 0.0, %v1178
        %v1180 = vpop.f32.mrb[0].mxu0
        %1181 = vmatprep.mubr.bf16.mxu0 0
        %1182 = vmatmul.mubr.bf16.gmra.mrb[0].mxu0 %v1006
        %v1183 = vpop.f32.mrb[0].mxu0
        %v1184 = vadd.f32 0.0, %v1183
        %v1185 = vpop.f32.mrb[0].mxu0
        %v1186 = vpop.f32.mrb[0].mxu0
        %v1187 = vadd.f32 0.0, %v1186
        %v1188 = vpop.f32.mrb[0].mxu0
        %1189 = vmatprep.mubr.bf16.mxu0 0
        %1190 = vmatmul.mubr.bf16.gmra.mrb[0].mxu0 %v1007
        %v1191 = vpop.f32.mrb[0].mxu0
        %v1192 = vadd.f32 0.0, %v1191
        %v1193 = vpop.f32.mrb[0].mxu0
        %v1194 = vpop.f32.mrb[0].mxu0
        %v1195 = vadd.f32 0.0, %v1194
        %v1196 = vpop.f32.mrb[0].mxu0
        %1197 = vmatprep.mubr.bf16.mxu0 0
        %1198 = vmatmul.mubr.bf16.gmra.mrb[0].mxu0 %v1008
        %v1199 = vpop.f32.mrb[0].mxu0
        %v1200 = vadd.f32 0.0, %v1199
        %v1201 = vpop.f32.mrb[0].mxu0
        %v1202 = vpop.f32.mrb[0].mxu0
        %v1203 = vadd.f32 0.0, %v1202
        %v1204 = vpop.f32.mrb[0].mxu0
        %1205 = vmatprep.mubr.bf16.mxu0 0
        %1206 = vmatmul.mubr.bf16.gmra.mrb[0].mxu0 %v1009
        %v1207 = vpop.f32.mrb[0].mxu0
        %v1208 = vadd.f32 0.0, %v1207
        %v1209 = vpop.f32.mrb[0].mxu0
        %v1210 = vpop.f32.mrb[0].mxu0
        %v1211 = vadd.f32 0.0, %v1210
        %v1212 = vpop.f32.mrb[0].mxu0
        %1213 = vmatprep.mubr.bf16.mxu0 0
        %1214 = vmatmul.mubr.bf16.gmra.mrb[0].mxu0 %v1010
        %v1215 = vpop.f32.mrb[0].mxu0
        %v1216 = vadd.f32 0.0, %v1215
        %v1217 = vpop.f32.mrb[0].mxu0
        %v1218 = vpop.f32.mrb[0].mxu0
        %v1219 = vadd.f32 0.0, %v1218
        %v1220 = vpop.f32.mrb[0].mxu0
        %1221 = vmatprep.mubr.bf16.mxu0 0
        %1222 = vmatmul.mubr.bf16.gmra.mrb[0].mxu0 %v1011
        %v1223 = vpop.f32.mrb[0].mxu0
        %v1224 = vadd.f32 0.0, %v1223
        %v1225 = vpop.f32.mrb[0].mxu0
        %v1226 = vpop.f32.mrb[0].mxu0
        %v1227 = vadd.f32 0.0, %v1226
        %v1228 = vpop.f32.mrb[0].mxu0
        %1229 = vmatprep.mubr.bf16.mxu0 0
        %1230 = vmatmul.mubr.bf16.gmra.mrb[0].mxu0 %v1012
        %v1231 = vpop.f32.mrb[0].mxu0
        %v1232 = vadd.f32 0.0, %v1231
        %v1233 = vpop.f32.mrb[0].mxu0
        %v1234 = vpop.f32.mrb[0].mxu0
        %v1235 = vadd.f32 0.0, %v1234
        %v1236 = vpop.f32.mrb[0].mxu0
        %1237 = vdwg.mxu0
        %v1238 = vadd.f32 %v851, %v1112
        %v1239 = vadd.f32 %v852, %v1115
        %v1240 = vadd.f32 %v853, %v1120
        %v1241 = vadd.f32 %v854, %v1123
        %v1242 = vadd.f32 %v855, %v1128
        %v1243 = vadd.f32 %v856, %v1131
        %v1244 = vadd.f32 %v857, %v1136
        %v1245 = vadd.f32 %v858, %v1139
        %v1246 = vadd.f32 %v859, %v1144
        %v1247 = vadd.f32 %v860, %v1147
        %v1248 = vadd.f32 %v861, %v1152
        %v1249 = vadd.f32 %v862, %v1155
        %v1250 = vadd.f32 %v863, %v1160
        %v1251 = vadd.f32 %v864, %v1163
        %v1252 = vadd.f32 %v865, %v1168
        %v1253 = vadd.f32 %v866, %v1171
        %v1254 = vadd.f32 %v867, %v1176
        %v1255 = vadd.f32 %v868, %v1179
        %v1256 = vadd.f32 %v869, %v1184
        %v1257 = vadd.f32 %v870, %v1187
        %v1258 = vadd.f32 %v871, %v1192
        %v1259 = vadd.f32 %v872, %v1195
        %v1260 = vadd.f32 %v873, %v1200
        %v1261 = vadd.f32 %v874, %v1203
        %v1262 = vadd.f32 %v875, %v1208
        %v1263 = vadd.f32 %v876, %v1211
        %v1264 = vadd.f32 %v877, %v1216
        %v1265 = vadd.f32 %v878, %v1219
        %v1266 = vadd.f32 %v879, %v1224
        %v1267 = vadd.f32 %v880, %v1227
        %v1268 = vadd.f32 %v881, %v1232
        %v1269 = vadd.f32 %v882, %v1235
        %v1270 = vld [vmem:[%s419 + $0x8] sm:$0xf]
        %v1271 = vld [vmem:[%s419 + $0xc] sm:$0xf]
        %v1272 = vld [vmem:[%s419 + $0x10] sm:$0xf]
        %v1273 = vld [vmem:[%s419 + $0x14] sm:$0xf]
        %v1274 = vld [vmem:[%s419 + $0x18] sm:$0xf]
        %v1275 = vld [vmem:[%s419 + $0x1c] sm:$0xf]
        %v1276 = vld [vmem:[%s419 + $0x20] sm:$0xf]
        %v1277 = vld [vmem:[%s419 + $0x24] sm:$0xf]
        %v1278 = vld [vmem:[%s419 + $0x28] sm:$0xf]
        %v1279 = vld [vmem:[%s419 + $0x2c] sm:$0xf]
        %v1280 = vld [vmem:[%s419 + $0x30] sm:$0xf]
        %v1281 = vld [vmem:[%s419 + $0x34] sm:$0xf]
        %v1282 = vld [vmem:[%s419 + $0x38] sm:$0xf]
        %v1283 = vld [vmem:[%s419 + $0x3c] sm:$0xf]
        %v1284 = vld [vmem:[%s419 + $0x40] sm:$0xf]
        %v1285 = vld [vmem:[%s419 + $0x44] sm:$0xf]
        %v1286 = vld [vmem:[%s419 + $0x48] sm:$0xf]
        %v1287 = vld [vmem:[%s419 + $0x4c] sm:$0xf]
        %v1288 = vld [vmem:[%s419 + $0x50] sm:$0xf]
        %v1289 = vld [vmem:[%s419 + $0x54] sm:$0xf]
        %v1290 = vld [vmem:[%s419 + $0x58] sm:$0xf]
        %v1291 = vld [vmem:[%s419 + $0x5c] sm:$0xf]
        %v1292 = vld [vmem:[%s419 + $0x60] sm:$0xf]
        %v1293 = vld [vmem:[%s419 + $0x64] sm:$0xf]
        %v1294 = vld [vmem:[%s419 + $0x68] sm:$0xf]
        %v1295 = vld [vmem:[%s419 + $0x6c] sm:$0xf]
        %v1296 = vld [vmem:[%s419 + $0x70] sm:$0xf]
        %v1297 = vld [vmem:[%s419 + $0x74] sm:$0xf]
        %v1298 = vld [vmem:[%s419 + $0x78] sm:$0xf]
        %v1299 = vld [vmem:[%s419 + $0x7c] sm:$0xf]
        %v1300 = vld [vmem:[%s419 + $0x80] sm:$0xf]
        %v1301 = vld [vmem:[%s419 + $0x84] sm:$0xf]
        %s1302 = scalar_lea.vmem [#allocation9], 128
        %v1303 = vld [vmem:[%s1302] sm:$0xf]
        %v1304 = vld [vmem:[%s1302 + $0x4] sm:$0xf]
        %v1305 = vld [vmem:[%s1302 + $0x8] sm:$0xf]
        %v1306 = vld [vmem:[%s1302 + $0xc] sm:$0xf]
        %v1307 = vld [vmem:[%s1302 + $0x10] sm:$0xf]
        %v1308 = vld [vmem:[%s1302 + $0x14] sm:$0xf]
        %v1309 = vld [vmem:[%s1302 + $0x18] sm:$0xf]
        %v1310 = vld [vmem:[%s1302 + $0x1c] sm:$0xf]
        %v1311 = vld [vmem:[%s1302 + $0x20] sm:$0xf]
        %v1312 = vld [vmem:[%s1302 + $0x24] sm:$0xf]
        %v1313 = vld [vmem:[%s1302 + $0x28] sm:$0xf]
        %v1314 = vld [vmem:[%s1302 + $0x2c] sm:$0xf]
        %v1315 = vld [vmem:[%s1302 + $0x30] sm:$0xf]
        %v1316 = vld [vmem:[%s1302 + $0x34] sm:$0xf]
        %v1317 = vld [vmem:[%s1302 + $0x38] sm:$0xf]
        %v1318 = vld [vmem:[%s1302 + $0x3c] sm:$0xf]
        %v1351 = vunpack.c.l.b16 %v1270
        %v1352 = vunpack.c.l.b16 %v1271
        %v1353 = vunpack.c.l.b16 %v1272
        %v1354 = vunpack.c.l.b16 %v1273
        %v1355 = vunpack.c.l.b16 %v1274
        %v1356 = vunpack.c.l.b16 %v1275
        %v1357 = vunpack.c.l.b16 %v1276
        %v1358 = vunpack.c.l.b16 %v1277
        %v1359 = vunpack.c.l.b16 %v1278
        %v1360 = vunpack.c.l.b16 %v1279
        %v1361 = vunpack.c.l.b16 %v1280
        %v1362 = vunpack.c.l.b16 %v1281
        %v1363 = vunpack.c.l.b16 %v1282
        %v1364 = vunpack.c.l.b16 %v1283
        %v1365 = vunpack.c.l.b16 %v1284
        %v1366 = vunpack.c.l.b16 %v1285
        %v1367 = vunpack.c.l.b16 %v1286
        %v1368 = vunpack.c.l.b16 %v1287
        %v1369 = vunpack.c.l.b16 %v1288
        %v1370 = vunpack.c.l.b16 %v1289
        %v1371 = vunpack.c.l.b16 %v1290
        %v1372 = vunpack.c.l.b16 %v1291
        %v1373 = vunpack.c.l.b16 %v1292
        %v1374 = vunpack.c.l.b16 %v1293
        %v1375 = vunpack.c.l.b16 %v1294
        %v1376 = vunpack.c.l.b16 %v1295
        %v1377 = vunpack.c.l.b16 %v1296
        %v1378 = vunpack.c.l.b16 %v1297
        %v1379 = vunpack.c.l.b16 %v1298
        %v1380 = vunpack.c.l.b16 %v1299
        %v1381 = vunpack.c.l.b16 %v1300
        %v1382 = vunpack.c.l.b16 %v1301
        %v1383 = vpack.c.b16 %v1352, %v1351
        %v1384 = vpack.c.b16 %v1354, %v1353
        %v1385 = vpack.c.b16 %v1356, %v1355
        %v1386 = vpack.c.b16 %v1358, %v1357
        %v1387 = vpack.c.b16 %v1360, %v1359
        %v1388 = vpack.c.b16 %v1362, %v1361
        %v1389 = vpack.c.b16 %v1364, %v1363
        %v1390 = vpack.c.b16 %v1366, %v1365
        %v1391 = vpack.c.b16 %v1368, %v1367
        %v1392 = vpack.c.b16 %v1370, %v1369
        %v1393 = vpack.c.b16 %v1372, %v1371
        %v1394 = vpack.c.b16 %v1374, %v1373
        %v1395 = vpack.c.b16 %v1376, %v1375
        %v1396 = vpack.c.b16 %v1378, %v1377
        %v1397 = vpack.c.b16 %v1380, %v1379
        %v1398 = vpack.c.b16 %v1382, %v1381
        %v1431 = vunpack.c.l.b16 %v1303
        %v1432 = vunpack.c.l.b16 %v1304
        %v1433 = vunpack.c.l.b16 %v1305
        %v1434 = vunpack.c.l.b16 %v1306
        %v1435 = vunpack.c.l.b16 %v1307
        %v1436 = vunpack.c.l.b16 %v1308
        %v1437 = vunpack.c.l.b16 %v1309
        %v1438 = vunpack.c.l.b16 %v1310
        %v1439 = vunpack.c.l.b16 %v1311
        %v1440 = vunpack.c.l.b16 %v1312
        %v1441 = vunpack.c.l.b16 %v1313
        %v1442 = vunpack.c.l.b16 %v1314
        %v1443 = vunpack.c.l.b16 %v1315
        %v1444 = vunpack.c.l.b16 %v1316
        %v1445 = vunpack.c.l.b16 %v1317
        %v1446 = vunpack.c.l.b16 %v1318
        %v1447 = vpack.c.b16 %v1432, %v1431
        %v1448 = vpack.c.b16 %v1434, %v1433
        %v1449 = vpack.c.b16 %v1436, %v1435
        %v1450 = vpack.c.b16 %v1438, %v1437
        %v1451 = vpack.c.b16 %v1440, %v1439
        %v1452 = vpack.c.b16 %v1442, %v1441
        %v1453 = vpack.c.b16 %v1444, %v1443
        %v1454 = vpack.c.b16 %v1446, %v1445
        %1463 = vmatprep.subr.bf16.mxu0 0
        %1464 = vmatpush1.bf16.msra.mxu0 %v1447
        %1465 = vmatprep.subr.bf16.mxu0 0
        %1466 = vmatpush1.bf16.msra.mxu0 %v1448
        %1467 = vmatprep.subr.bf16.mxu0 0
        %1468 = vmatpush1.bf16.msra.mxu0 %v1449
        %1469 = vmatprep.subr.bf16.mxu0 0
        %1470 = vmatpush1.bf16.msra.mxu0 %v1450
        %1471 = vmatprep.subr.bf16.mxu0 0
        %1472 = vmatpush1.bf16.msra.mxu0 %v1451
        %1473 = vmatprep.subr.bf16.mxu0 0
        %1474 = vmatpush1.bf16.msra.mxu0 %v1452
        %1475 = vmatprep.subr.bf16.mxu0 0
        %1476 = vmatpush1.bf16.msra.mxu0 %v1453
        %1477 = vmatprep.subr.bf16.mxu0 0
        %1478 = vmatpush1.bf16.msra.mxu0 %v1454
        %1479 = vmatprep.subr.bf16.mxu0 0
        %1480 = vmatpush1.bf16.msra.mxu0 0
        %1481 = vmatprep.subr.bf16.mxu0 0
        %1482 = vmatpush1.bf16.msra.mxu0 0
        %1483 = vmatprep.subr.bf16.mxu0 0
        %1484 = vmatpush1.bf16.msra.mxu0 0
        %1485 = vmatprep.subr.bf16.mxu0 0
        %1486 = vmatpush1.bf16.msra.mxu0 0
        %1487 = vmatprep.subr.bf16.mxu0 0
        %1488 = vmatpush1.bf16.msra.mxu0 0
        %1489 = vmatprep.subr.bf16.mxu0 0
        %1490 = vmatpush1.bf16.msra.mxu0 0
        %1491 = vmatprep.subr.bf16.mxu0 0
        %1492 = vmatpush1.bf16.msra.mxu0 0
        %1493 = vmatprep.subr.bf16.mxu0 0
        %1494 = vmatpush1.bf16.msra.mxu0 0
        %1495 = vmatprep.mubr.bf16.mxu0 0
        %1496 = vmatmul.mubr.bf16.gmra.mrb[0].mxu0 %v1383
        %v1497 = vpop.f32.mrb[0].mxu0
        %v1498 = vadd.f32 0.0, %v1497
        %v1499 = vpop.f32.mrb[0].mxu0
        %v1500 = vpop.f32.mrb[0].mxu0
        %v1501 = vadd.f32 0.0, %v1500
        %v1502 = vpop.f32.mrb[0].mxu0
        %1503 = vmatprep.mubr.bf16.mxu0 0
        %1504 = vmatmul.mubr.bf16.gmra.mrb[0].mxu0 %v1384
        %v1505 = vpop.f32.mrb[0].mxu0
        %v1506 = vadd.f32 0.0, %v1505
        %v1507 = vpop.f32.mrb[0].mxu0
        %v1508 = vpop.f32.mrb[0].mxu0
        %v1509 = vadd.f32 0.0, %v1508
        %v1510 = vpop.f32.mrb[0].mxu0
        %1511 = vmatprep.mubr.bf16.mxu0 0
        %1512 = vmatmul.mubr.bf16.gmra.mrb[0].mxu0 %v1385
        %v1513 = vpop.f32.mrb[0].mxu0
        %v1514 = vadd.f32 0.0, %v1513
        %v1515 = vpop.f32.mrb[0].mxu0
        %v1516 = vpop.f32.mrb[0].mxu0
        %v1517 = vadd.f32 0.0, %v1516
        %v1518 = vpop.f32.mrb[0].mxu0
        %1519 = vmatprep.mubr.bf16.mxu0 0
        %1520 = vmatmul.mubr.bf16.gmra.mrb[0].mxu0 %v1386
        %v1521 = vpop.f32.mrb[0].mxu0
        %v1522 = vadd.f32 0.0, %v1521
        %v1523 = vpop.f32.mrb[0].mxu0
        %v1524 = vpop.f32.mrb[0].mxu0
        %v1525 = vadd.f32 0.0, %v1524
        %v1526 = vpop.f32.mrb[0].mxu0
        %1527 = vmatprep.mubr.bf16.mxu0 0
        %1528 = vmatmul.mubr.bf16.gmra.mrb[0].mxu0 %v1387
        %v1529 = vpop.f32.mrb[0].mxu0
        %v1530 = vadd.f32 0.0, %v1529
        %v1531 = vpop.f32.mrb[0].mxu0
        %v1532 = vpop.f32.mrb[0].mxu0
        %v1533 = vadd.f32 0.0, %v1532
        %v1534 = vpop.f32.mrb[0].mxu0
        %1535 = vmatprep.mubr.bf16.mxu0 0
        %1536 = vmatmul.mubr.bf16.gmra.mrb[0].mxu0 %v1388
        %v1537 = vpop.f32.mrb[0].mxu0
        %v1538 = vadd.f32 0.0, %v1537
        %v1539 = vpop.f32.mrb[0].mxu0
        %v1540 = vpop.f32.mrb[0].mxu0
        %v1541 = vadd.f32 0.0, %v1540
        %v1542 = vpop.f32.mrb[0].mxu0
        %1543 = vmatprep.mubr.bf16.mxu0 0
        %1544 = vmatmul.mubr.bf16.gmra.mrb[0].mxu0 %v1389
        %v1545 = vpop.f32.mrb[0].mxu0
        %v1546 = vadd.f32 0.0, %v1545
        %v1547 = vpop.f32.mrb[0].mxu0
        %v1548 = vpop.f32.mrb[0].mxu0
        %v1549 = vadd.f32 0.0, %v1548
        %v1550 = vpop.f32.mrb[0].mxu0
        %1551 = vmatprep.mubr.bf16.mxu0 0
        %1552 = vmatmul.mubr.bf16.gmra.mrb[0].mxu0 %v1390
        %v1553 = vpop.f32.mrb[0].mxu0
        %v1554 = vadd.f32 0.0, %v1553
        %v1555 = vpop.f32.mrb[0].mxu0
        %v1556 = vpop.f32.mrb[0].mxu0
        %v1557 = vadd.f32 0.0, %v1556
        %v1558 = vpop.f32.mrb[0].mxu0
        %1559 = vmatprep.mubr.bf16.mxu0 0
        %1560 = vmatmul.mubr.bf16.gmra.mrb[0].mxu0 %v1391
        %v1561 = vpop.f32.mrb[0].mxu0
        %v1562 = vadd.f32 0.0, %v1561
        %v1563 = vpop.f32.mrb[0].mxu0
        %v1564 = vpop.f32.mrb[0].mxu0
        %v1565 = vadd.f32 0.0, %v1564
        %v1566 = vpop.f32.mrb[0].mxu0
        %1567 = vmatprep.mubr.bf16.mxu0 0
        %1568 = vmatmul.mubr.bf16.gmra.mrb[0].mxu0 %v1392
        %v1569 = vpop.f32.mrb[0].mxu0
        %v1570 = vadd.f32 0.0, %v1569
        %v1571 = vpop.f32.mrb[0].mxu0
        %v1572 = vpop.f32.mrb[0].mxu0
        %v1573 = vadd.f32 0.0, %v1572
        %v1574 = vpop.f32.mrb[0].mxu0
        %1575 = vmatprep.mubr.bf16.mxu0 0
        %1576 = vmatmul.mubr.bf16.gmra.mrb[0].mxu0 %v1393
        %v1577 = vpop.f32.mrb[0].mxu0
        %v1578 = vadd.f32 0.0, %v1577
        %v1579 = vpop.f32.mrb[0].mxu0
        %v1580 = vpop.f32.mrb[0].mxu0
        %v1581 = vadd.f32 0.0, %v1580
        %v1582 = vpop.f32.mrb[0].mxu0
        %1583 = vmatprep.mubr.bf16.mxu0 0
        %1584 = vmatmul.mubr.bf16.gmra.mrb[0].mxu0 %v1394
        %v1585 = vpop.f32.mrb[0].mxu0
        %v1586 = vadd.f32 0.0, %v1585
        %v1587 = vpop.f32.mrb[0].mxu0
        %v1588 = vpop.f32.mrb[0].mxu0
        %v1589 = vadd.f32 0.0, %v1588
        %v1590 = vpop.f32.mrb[0].mxu0
        %1591 = vmatprep.mubr.bf16.mxu0 0
        %1592 = vmatmul.mubr.bf16.gmra.mrb[0].mxu0 %v1395
        %v1593 = vpop.f32.mrb[0].mxu0
        %v1594 = vadd.f32 0.0, %v1593
        %v1595 = vpop.f32.mrb[0].mxu0
        %v1596 = vpop.f32.mrb[0].mxu0
        %v1597 = vadd.f32 0.0, %v1596
        %v1598 = vpop.f32.mrb[0].mxu0
        %1599 = vmatprep.mubr.bf16.mxu0 0
        %1600 = vmatmul.mubr.bf16.gmra.mrb[0].mxu0 %v1396
        %v1601 = vpop.f32.mrb[0].mxu0
        %v1602 = vadd.f32 0.0, %v1601
        %v1603 = vpop.f32.mrb[0].mxu0
        %v1604 = vpop.f32.mrb[0].mxu0
        %v1605 = vadd.f32 0.0, %v1604
        %v1606 = vpop.f32.mrb[0].mxu0
        %1607 = vmatprep.mubr.bf16.mxu0 0
        %1608 = vmatmul.mubr.bf16.gmra.mrb[0].mxu0 %v1397
        %v1609 = vpop.f32.mrb[0].mxu0
        %v1610 = vadd.f32 0.0, %v1609
        %v1611 = vpop.f32.mrb[0].mxu0
        %v1612 = vpop.f32.mrb[0].mxu0
        %v1613 = vadd.f32 0.0, %v1612
        %v1614 = vpop.f32.mrb[0].mxu0
        %1615 = vmatprep.mubr.bf16.mxu0 0
        %1616 = vmatmul.mubr.bf16.gmra.mrb[0].mxu0 %v1398
        %v1617 = vpop.f32.mrb[0].mxu0
        %v1618 = vadd.f32 0.0, %v1617
        %v1619 = vpop.f32.mrb[0].mxu0
        %v1620 = vpop.f32.mrb[0].mxu0
        %v1621 = vadd.f32 0.0, %v1620
        %v1622 = vpop.f32.mrb[0].mxu0
        %1623 = vdwg.mxu0
        %v1624 = vadd.f32 %v1238, %v1498
        %v1625 = vadd.f32 %v1239, %v1501
        %v1626 = vadd.f32 %v1240, %v1506
        %v1627 = vadd.f32 %v1241, %v1509
        %v1628 = vadd.f32 %v1242, %v1514
        %v1629 = vadd.f32 %v1243, %v1517
        %v1630 = vadd.f32 %v1244, %v1522
        %v1631 = vadd.f32 %v1245, %v1525
        %v1632 = vadd.f32 %v1246, %v1530
        %v1633 = vadd.f32 %v1247, %v1533
        %v1634 = vadd.f32 %v1248, %v1538
        %v1635 = vadd.f32 %v1249, %v1541
        %v1636 = vadd.f32 %v1250, %v1546
        %v1637 = vadd.f32 %v1251, %v1549
        %v1638 = vadd.f32 %v1252, %v1554
        %v1639 = vadd.f32 %v1253, %v1557
        %v1640 = vadd.f32 %v1254, %v1562
        %v1641 = vadd.f32 %v1255, %v1565
        %v1642 = vadd.f32 %v1256, %v1570
        %v1643 = vadd.f32 %v1257, %v1573
        %v1644 = vadd.f32 %v1258, %v1578
        %v1645 = vadd.f32 %v1259, %v1581
        %v1646 = vadd.f32 %v1260, %v1586
        %v1647 = vadd.f32 %v1261, %v1589
        %v1648 = vadd.f32 %v1262, %v1594
        %v1649 = vadd.f32 %v1263, %v1597
        %v1650 = vadd.f32 %v1264, %v1602
        %v1651 = vadd.f32 %v1265, %v1605
        %v1652 = vadd.f32 %v1266, %v1610
        %v1653 = vadd.f32 %v1267, %v1613
        %v1654 = vadd.f32 %v1268, %v1618
        %v1655 = vadd.f32 %v1269, %v1621
        %v1656 = vld [vmem:[%s883 + $0x8] sm:$0xf]
        %v1657 = vld [vmem:[%s883 + $0xc] sm:$0xf]
        %v1658 = vld [vmem:[%s883 + $0x10] sm:$0xf]
        %v1659 = vld [vmem:[%s883 + $0x14] sm:$0xf]
        %v1660 = vld [vmem:[%s883 + $0x18] sm:$0xf]
        %v1661 = vld [vmem:[%s883 + $0x1c] sm:$0xf]
        %v1662 = vld [vmem:[%s883 + $0x20] sm:$0xf]
        %v1663 = vld [vmem:[%s883 + $0x24] sm:$0xf]
        %v1664 = vld [vmem:[%s883 + $0x28] sm:$0xf]
        %v1665 = vld [vmem:[%s883 + $0x2c] sm:$0xf]
        %v1666 = vld [vmem:[%s883 + $0x30] sm:$0xf]
        %v1667 = vld [vmem:[%s883 + $0x34] sm:$0xf]
        %v1668 = vld [vmem:[%s883 + $0x38] sm:$0xf]
        %v1669 = vld [vmem:[%s883 + $0x3c] sm:$0xf]
        %v1670 = vld [vmem:[%s883 + $0x40] sm:$0xf]
        %v1671 = vld [vmem:[%s883 + $0x44] sm:$0xf]
        %v1672 = vld [vmem:[%s883 + $0x48] sm:$0xf]
        %v1673 = vld [vmem:[%s883 + $0x4c] sm:$0xf]
        %v1674 = vld [vmem:[%s883 + $0x50] sm:$0xf]
        %v1675 = vld [vmem:[%s883 + $0x54] sm:$0xf]
        %v1676 = vld [vmem:[%s883 + $0x58] sm:$0xf]
        %v1677 = vld [vmem:[%s883 + $0x5c] sm:$0xf]
        %v1678 = vld [vmem:[%s883 + $0x60] sm:$0xf]
        %v1679 = vld [vmem:[%s883 + $0x64] sm:$0xf]
        %v1680 = vld [vmem:[%s883 + $0x68] sm:$0xf]
        %v1681 = vld [vmem:[%s883 + $0x6c] sm:$0xf]
        %v1682 = vld [vmem:[%s883 + $0x70] sm:$0xf]
        %v1683 = vld [vmem:[%s883 + $0x74] sm:$0xf]
        %v1684 = vld [vmem:[%s883 + $0x78] sm:$0xf]
        %v1685 = vld [vmem:[%s883 + $0x7c] sm:$0xf]
        %v1686 = vld [vmem:[%s883 + $0x80] sm:$0xf]
        %v1687 = vld [vmem:[%s883 + $0x84] sm:$0xf]
        %s1688 = scalar_lea.vmem [#allocation9], 192
        %v1689 = vld [vmem:[%s1688] sm:$0xf]
        %v1690 = vld [vmem:[%s1688 + $0x4] sm:$0xf]
        %v1691 = vld [vmem:[%s1688 + $0x8] sm:$0xf]
        %v1692 = vld [vmem:[%s1688 + $0xc] sm:$0xf]
        %v1693 = vld [vmem:[%s1688 + $0x10] sm:$0xf]
        %v1694 = vld [vmem:[%s1688 + $0x14] sm:$0xf]
        %v1695 = vld [vmem:[%s1688 + $0x18] sm:$0xf]
        %v1696 = vld [vmem:[%s1688 + $0x1c] sm:$0xf]
        %v1697 = vld [vmem:[%s1688 + $0x20] sm:$0xf]
        %v1698 = vld [vmem:[%s1688 + $0x24] sm:$0xf]
        %v1699 = vld [vmem:[%s1688 + $0x28] sm:$0xf]
        %v1700 = vld [vmem:[%s1688 + $0x2c] sm:$0xf]
        %v1701 = vld [vmem:[%s1688 + $0x30] sm:$0xf]
        %v1702 = vld [vmem:[%s1688 + $0x34] sm:$0xf]
        %v1703 = vld [vmem:[%s1688 + $0x38] sm:$0xf]
        %v1704 = vld [vmem:[%s1688 + $0x3c] sm:$0xf]
        %v1737 = vunpack.c.l.b16 %v1656
        %v1738 = vunpack.c.l.b16 %v1657
        %v1739 = vunpack.c.l.b16 %v1658
        %v1740 = vunpack.c.l.b16 %v1659
        %v1741 = vunpack.c.l.b16 %v1660
        %v1742 = vunpack.c.l.b16 %v1661
        %v1743 = vunpack.c.l.b16 %v1662
        %v1744 = vunpack.c.l.b16 %v1663
        %v1745 = vunpack.c.l.b16 %v1664
        %v1746 = vunpack.c.l.b16 %v1665
        %v1747 = vunpack.c.l.b16 %v1666
        %v1748 = vunpack.c.l.b16 %v1667
        %v1749 = vunpack.c.l.b16 %v1668
        %v1750 = vunpack.c.l.b16 %v1669
        %v1751 = vunpack.c.l.b16 %v1670
        %v1752 = vunpack.c.l.b16 %v1671
        %v1753 = vunpack.c.l.b16 %v1672
        %v1754 = vunpack.c.l.b16 %v1673
        %v1755 = vunpack.c.l.b16 %v1674
        %v1756 = vunpack.c.l.b16 %v1675
        %v1757 = vunpack.c.l.b16 %v1676
        %v1758 = vunpack.c.l.b16 %v1677
        %v1759 = vunpack.c.l.b16 %v1678
        %v1760 = vunpack.c.l.b16 %v1679
        %v1761 = vunpack.c.l.b16 %v1680
        %v1762 = vunpack.c.l.b16 %v1681
        %v1763 = vunpack.c.l.b16 %v1682
        %v1764 = vunpack.c.l.b16 %v1683
        %v1765 = vunpack.c.l.b16 %v1684
        %v1766 = vunpack.c.l.b16 %v1685
        %v1767 = vunpack.c.l.b16 %v1686
        %v1768 = vunpack.c.l.b16 %v1687
        %v1769 = vpack.c.b16 %v1738, %v1737
        %v1770 = vpack.c.b16 %v1740, %v1739
        %v1771 = vpack.c.b16 %v1742, %v1741
        %v1772 = vpack.c.b16 %v1744, %v1743
        %v1773 = vpack.c.b16 %v1746, %v1745
        %v1774 = vpack.c.b16 %v1748, %v1747
        %v1775 = vpack.c.b16 %v1750, %v1749
        %v1776 = vpack.c.b16 %v1752, %v1751
        %v1777 = vpack.c.b16 %v1754, %v1753
        %v1778 = vpack.c.b16 %v1756, %v1755
        %v1779 = vpack.c.b16 %v1758, %v1757
        %v1780 = vpack.c.b16 %v1760, %v1759
        %v1781 = vpack.c.b16 %v1762, %v1761
        %v1782 = vpack.c.b16 %v1764, %v1763
        %v1783 = vpack.c.b16 %v1766, %v1765
        %v1784 = vpack.c.b16 %v1768, %v1767
        %v1817 = vunpack.c.l.b16 %v1689
        %v1818 = vunpack.c.l.b16 %v1690
        %v1819 = vunpack.c.l.b16 %v1691
        %v1820 = vunpack.c.l.b16 %v1692
        %v1821 = vunpack.c.l.b16 %v1693
        %v1822 = vunpack.c.l.b16 %v1694
        %v1823 = vunpack.c.l.b16 %v1695
        %v1824 = vunpack.c.l.b16 %v1696
        %v1825 = vunpack.c.l.b16 %v1697
        %v1826 = vunpack.c.l.b16 %v1698
        %v1827 = vunpack.c.l.b16 %v1699
        %v1828 = vunpack.c.l.b16 %v1700
        %v1829 = vunpack.c.l.b16 %v1701
        %v1830 = vunpack.c.l.b16 %v1702
        %v1831 = vunpack.c.l.b16 %v1703
        %v1832 = vunpack.c.l.b16 %v1704
        %v1833 = vpack.c.b16 %v1818, %v1817
        %v1834 = vpack.c.b16 %v1820, %v1819
        %v1835 = vpack.c.b16 %v1822, %v1821
        %v1836 = vpack.c.b16 %v1824, %v1823
        %v1837 = vpack.c.b16 %v1826, %v1825
        %v1838 = vpack.c.b16 %v1828, %v1827
        %v1839 = vpack.c.b16 %v1830, %v1829
        %v1840 = vpack.c.b16 %v1832, %v1831
        %1849 = vmatprep.subr.bf16.mxu0 0
        %1850 = vmatpush1.bf16.msra.mxu0 %v1833
        %1851 = vmatprep.subr.bf16.mxu0 0
        %1852 = vmatpush1.bf16.msra.mxu0 %v1834
        %1853 = vmatprep.subr.bf16.mxu0 0
        %1854 = vmatpush1.bf16.msra.mxu0 %v1835
        %1855 = vmatprep.subr.bf16.mxu0 0
        %1856 = vmatpush1.bf16.msra.mxu0 %v1836
        %1857 = vmatprep.subr.bf16.mxu0 0
        %1858 = vmatpush1.bf16.msra.mxu0 %v1837
        %1859 = vmatprep.subr.bf16.mxu0 0
        %1860 = vmatpush1.bf16.msra.mxu0 %v1838
        %1861 = vmatprep.subr.bf16.mxu0 0
        %1862 = vmatpush1.bf16.msra.mxu0 %v1839
        %1863 = vmatprep.subr.bf16.mxu0 0
        %1864 = vmatpush1.bf16.msra.mxu0 %v1840
        %1865 = vmatprep.subr.bf16.mxu0 0
        %1866 = vmatpush1.bf16.msra.mxu0 0
        %1867 = vmatprep.subr.bf16.mxu0 0
        %1868 = vmatpush1.bf16.msra.mxu0 0
        %1869 = vmatprep.subr.bf16.mxu0 0
        %1870 = vmatpush1.bf16.msra.mxu0 0
        %1871 = vmatprep.subr.bf16.mxu0 0
        %1872 = vmatpush1.bf16.msra.mxu0 0
        %1873 = vmatprep.subr.bf16.mxu0 0
        %1874 = vmatpush1.bf16.msra.mxu0 0
        %1875 = vmatprep.subr.bf16.mxu0 0
        %1876 = vmatpush1.bf16.msra.mxu0 0
        %1877 = vmatprep.subr.bf16.mxu0 0
        %1878 = vmatpush1.bf16.msra.mxu0 0
        %1879 = vmatprep.subr.bf16.mxu0 0
        %1880 = vmatpush1.bf16.msra.mxu0 0
        %1881 = vmatprep.mubr.bf16.mxu0 0
        %1882 = vmatmul.mubr.bf16.gmra.mrb[0].mxu0 %v1769
        %v1883 = vpop.f32.mrb[0].mxu0
        %v1884 = vadd.f32 0.0, %v1883
        %v1885 = vpop.f32.mrb[0].mxu0
        %v1886 = vpop.f32.mrb[0].mxu0
        %v1887 = vadd.f32 0.0, %v1886
        %v1888 = vpop.f32.mrb[0].mxu0
        %1889 = vmatprep.mubr.bf16.mxu0 0
        %1890 = vmatmul.mubr.bf16.gmra.mrb[0].mxu0 %v1770
        %v1891 = vpop.f32.mrb[0].mxu0
        %v1892 = vadd.f32 0.0, %v1891
        %v1893 = vpop.f32.mrb[0].mxu0
        %v1894 = vpop.f32.mrb[0].mxu0
        %v1895 = vadd.f32 0.0, %v1894
        %v1896 = vpop.f32.mrb[0].mxu0
        %1897 = vmatprep.mubr.bf16.mxu0 0
        %1898 = vmatmul.mubr.bf16.gmra.mrb[0].mxu0 %v1771
        %v1899 = vpop.f32.mrb[0].mxu0
        %v1900 = vadd.f32 0.0, %v1899
        %v1901 = vpop.f32.mrb[0].mxu0
        %v1902 = vpop.f32.mrb[0].mxu0
        %v1903 = vadd.f32 0.0, %v1902
        %v1904 = vpop.f32.mrb[0].mxu0
        %1905 = vmatprep.mubr.bf16.mxu0 0
        %1906 = vmatmul.mubr.bf16.gmra.mrb[0].mxu0 %v1772
        %v1907 = vpop.f32.mrb[0].mxu0
        %v1908 = vadd.f32 0.0, %v1907
        %v1909 = vpop.f32.mrb[0].mxu0
        %v1910 = vpop.f32.mrb[0].mxu0
        %v1911 = vadd.f32 0.0, %v1910
        %v1912 = vpop.f32.mrb[0].mxu0
        %1913 = vmatprep.mubr.bf16.mxu0 0
        %1914 = vmatmul.mubr.bf16.gmra.mrb[0].mxu0 %v1773
        %v1915 = vpop.f32.mrb[0].mxu0
        %v1916 = vadd.f32 0.0, %v1915
        %v1917 = vpop.f32.mrb[0].mxu0
        %v1918 = vpop.f32.mrb[0].mxu0
        %v1919 = vadd.f32 0.0, %v1918
        %v1920 = vpop.f32.mrb[0].mxu0
        %1921 = vmatprep.mubr.bf16.mxu0 0
        %1922 = vmatmul.mubr.bf16.gmra.mrb[0].mxu0 %v1774
        %v1923 = vpop.f32.mrb[0].mxu0
        %v1924 = vadd.f32 0.0, %v1923
        %v1925 = vpop.f32.mrb[0].mxu0
        %v1926 = vpop.f32.mrb[0].mxu0
        %v1927 = vadd.f32 0.0, %v1926
        %v1928 = vpop.f32.mrb[0].mxu0
        %1929 = vmatprep.mubr.bf16.mxu0 0
        %1930 = vmatmul.mubr.bf16.gmra.mrb[0].mxu0 %v1775
        %v1931 = vpop.f32.mrb[0].mxu0
        %v1932 = vadd.f32 0.0, %v1931
        %v1933 = vpop.f32.mrb[0].mxu0
        %v1934 = vpop.f32.mrb[0].mxu0
        %v1935 = vadd.f32 0.0, %v1934
        %v1936 = vpop.f32.mrb[0].mxu0
        %1937 = vmatprep.mubr.bf16.mxu0 0
        %1938 = vmatmul.mubr.bf16.gmra.mrb[0].mxu0 %v1776
        %v1939 = vpop.f32.mrb[0].mxu0
        %v1940 = vadd.f32 0.0, %v1939
        %v1941 = vpop.f32.mrb[0].mxu0
        %v1942 = vpop.f32.mrb[0].mxu0
        %v1943 = vadd.f32 0.0, %v1942
        %v1944 = vpop.f32.mrb[0].mxu0
        %1945 = vmatprep.mubr.bf16.mxu0 0
        %1946 = vmatmul.mubr.bf16.gmra.mrb[0].mxu0 %v1777
        %v1947 = vpop.f32.mrb[0].mxu0
        %v1948 = vadd.f32 0.0, %v1947
        %v1949 = vpop.f32.mrb[0].mxu0
        %v1950 = vpop.f32.mrb[0].mxu0
        %v1951 = vadd.f32 0.0, %v1950
        %v1952 = vpop.f32.mrb[0].mxu0
        %1953 = vmatprep.mubr.bf16.mxu0 0
        %1954 = vmatmul.mubr.bf16.gmra.mrb[0].mxu0 %v1778
        %v1955 = vpop.f32.mrb[0].mxu0
        %v1956 = vadd.f32 0.0, %v1955
        %v1957 = vpop.f32.mrb[0].mxu0
        %v1958 = vpop.f32.mrb[0].mxu0
        %v1959 = vadd.f32 0.0, %v1958
        %v1960 = vpop.f32.mrb[0].mxu0
        %1961 = vmatprep.mubr.bf16.mxu0 0
        %1962 = vmatmul.mubr.bf16.gmra.mrb[0].mxu0 %v1779
        %v1963 = vpop.f32.mrb[0].mxu0
        %v1964 = vadd.f32 0.0, %v1963
        %v1965 = vpop.f32.mrb[0].mxu0
        %v1966 = vpop.f32.mrb[0].mxu0
        %v1967 = vadd.f32 0.0, %v1966
        %v1968 = vpop.f32.mrb[0].mxu0
        %1969 = vmatprep.mubr.bf16.mxu0 0
        %1970 = vmatmul.mubr.bf16.gmra.mrb[0].mxu0 %v1780
        %v1971 = vpop.f32.mrb[0].mxu0
        %v1972 = vadd.f32 0.0, %v1971
        %v1973 = vpop.f32.mrb[0].mxu0
        %v1974 = vpop.f32.mrb[0].mxu0
        %v1975 = vadd.f32 0.0, %v1974
        %v1976 = vpop.f32.mrb[0].mxu0
        %1977 = vmatprep.mubr.bf16.mxu0 0
        %1978 = vmatmul.mubr.bf16.gmra.mrb[0].mxu0 %v1781
        %v1979 = vpop.f32.mrb[0].mxu0
        %v1980 = vadd.f32 0.0, %v1979
        %v1981 = vpop.f32.mrb[0].mxu0
        %v1982 = vpop.f32.mrb[0].mxu0
        %v1983 = vadd.f32 0.0, %v1982
        %v1984 = vpop.f32.mrb[0].mxu0
        %1985 = vmatprep.mubr.bf16.mxu0 0
        %1986 = vmatmul.mubr.bf16.gmra.mrb[0].mxu0 %v1782
        %v1987 = vpop.f32.mrb[0].mxu0
        %v1988 = vadd.f32 0.0, %v1987
        %v1989 = vpop.f32.mrb[0].mxu0
        %v1990 = vpop.f32.mrb[0].mxu0
        %v1991 = vadd.f32 0.0, %v1990
        %v1992 = vpop.f32.mrb[0].mxu0
        %1993 = vmatprep.mubr.bf16.mxu0 0
        %1994 = vmatmul.mubr.bf16.gmra.mrb[0].mxu0 %v1783
        %v1995 = vpop.f32.mrb[0].mxu0
        %v1996 = vadd.f32 0.0, %v1995
        %v1997 = vpop.f32.mrb[0].mxu0
        %v1998 = vpop.f32.mrb[0].mxu0
        %v1999 = vadd.f32 0.0, %v1998
        %v2000 = vpop.f32.mrb[0].mxu0
        %2001 = vmatprep.mubr.bf16.mxu0 0
        %2002 = vmatmul.mubr.bf16.gmra.mrb[0].mxu0 %v1784
        %v2003 = vpop.f32.mrb[0].mxu0
        %v2004 = vadd.f32 0.0, %v2003
        %v2005 = vpop.f32.mrb[0].mxu0
        %v2006 = vpop.f32.mrb[0].mxu0
        %v2007 = vadd.f32 0.0, %v2006
        %v2008 = vpop.f32.mrb[0].mxu0
        %2009 = vdwg.mxu0
        %v2010 = vadd.f32 %v1624, %v1884
        %v2011 = vadd.f32 %v1625, %v1887
        %v2012 = vadd.f32 %v1626, %v1892
        %v2013 = vadd.f32 %v1627, %v1895
        %v2014 = vadd.f32 %v1628, %v1900
        %v2015 = vadd.f32 %v1629, %v1903
        %v2016 = vadd.f32 %v1630, %v1908
        %v2017 = vadd.f32 %v1631, %v1911
        %v2018 = vadd.f32 %v1632, %v1916
        %v2019 = vadd.f32 %v1633, %v1919
        %v2020 = vadd.f32 %v1634, %v1924
        %v2021 = vadd.f32 %v1635, %v1927
        %v2022 = vadd.f32 %v1636, %v1932
        %v2023 = vadd.f32 %v1637, %v1935
        %v2024 = vadd.f32 %v1638, %v1940
        %v2025 = vadd.f32 %v1639, %v1943
        %v2026 = vadd.f32 %v1640, %v1948
        %v2027 = vadd.f32 %v1641, %v1951
        %v2028 = vadd.f32 %v1642, %v1956
        %v2029 = vadd.f32 %v1643, %v1959
        %v2030 = vadd.f32 %v1644, %v1964
        %v2031 = vadd.f32 %v1645, %v1967
        %v2032 = vadd.f32 %v1646, %v1972
        %v2033 = vadd.f32 %v1647, %v1975
        %v2034 = vadd.f32 %v1648, %v1980
        %v2035 = vadd.f32 %v1649, %v1983
        %v2036 = vadd.f32 %v1650, %v1988
        %v2037 = vadd.f32 %v1651, %v1991
        %v2038 = vadd.f32 %v1652, %v1996
        %v2039 = vadd.f32 %v1653, %v1999
        %v2040 = vadd.f32 %v1654, %v2004
        %v2041 = vadd.f32 %v1655, %v2007
        %vm2042 = vcmp.ge.f32.partialorder %v2010, 0.0
        %vm2043 = vcmp.ge.f32.partialorder %v2011, 0.0
        %vm2044 = vcmp.ge.f32.partialorder %v2012, 0.0
        %vm2045 = vcmp.ge.f32.partialorder %v2013, 0.0
        %vm2046 = vcmp.ge.f32.partialorder %v2014, 0.0
        %vm2047 = vcmp.ge.f32.partialorder %v2015, 0.0
        %vm2048 = vcmp.ge.f32.partialorder %v2016, 0.0
        %vm2049 = vcmp.ge.f32.partialorder %v2017, 0.0
        %vm2050 = vcmp.ge.f32.partialorder %v2018, 0.0
        %vm2051 = vcmp.ge.f32.partialorder %v2019, 0.0
        %vm2052 = vcmp.ge.f32.partialorder %v2020, 0.0
        %vm2053 = vcmp.ge.f32.partialorder %v2021, 0.0
        %vm2054 = vcmp.ge.f32.partialorder %v2022, 0.0
        %vm2055 = vcmp.ge.f32.partialorder %v2023, 0.0
        %vm2056 = vcmp.ge.f32.partialorder %v2024, 0.0
        %vm2057 = vcmp.ge.f32.partialorder %v2025, 0.0
        %vm2058 = vcmp.ge.f32.partialorder %v2026, 0.0
        %vm2059 = vcmp.ge.f32.partialorder %v2027, 0.0
        %vm2060 = vcmp.ge.f32.partialorder %v2028, 0.0
        %vm2061 = vcmp.ge.f32.partialorder %v2029, 0.0
        %vm2062 = vcmp.ge.f32.partialorder %v2030, 0.0
        %vm2063 = vcmp.ge.f32.partialorder %v2031, 0.0
        %vm2064 = vcmp.ge.f32.partialorder %v2032, 0.0
        %vm2065 = vcmp.ge.f32.partialorder %v2033, 0.0
        %vm2066 = vcmp.ge.f32.partialorder %v2034, 0.0
        %vm2067 = vcmp.ge.f32.partialorder %v2035, 0.0
        %vm2068 = vcmp.ge.f32.partialorder %v2036, 0.0
        %vm2069 = vcmp.ge.f32.partialorder %v2037, 0.0
        %vm2070 = vcmp.ge.f32.partialorder %v2038, 0.0
        %vm2071 = vcmp.ge.f32.partialorder %v2039, 0.0
        %vm2072 = vcmp.ge.f32.partialorder %v2040, 0.0
        %vm2073 = vcmp.ge.f32.partialorder %v2041, 0.0
        %v2074 = vmul.f32 %v2010, 0.2
        %v2075 = vmul.f32 %v2011, 0.2
        %v2076 = vmul.f32 %v2012, 0.2
        %v2077 = vmul.f32 %v2013, 0.2
        %v2078 = vmul.f32 %v2014, 0.2
        %v2079 = vmul.f32 %v2015, 0.2
        %v2080 = vmul.f32 %v2016, 0.2
        %v2081 = vmul.f32 %v2017, 0.2
        %v2082 = vmul.f32 %v2018, 0.2
        %v2083 = vmul.f32 %v2019, 0.2
        %v2084 = vmul.f32 %v2020, 0.2
        %v2085 = vmul.f32 %v2021, 0.2
        %v2086 = vmul.f32 %v2022, 0.2
        %v2087 = vmul.f32 %v2023, 0.2
        %v2088 = vmul.f32 %v2024, 0.2
        %v2089 = vmul.f32 %v2025, 0.2
        %v2090 = vmul.f32 %v2026, 0.2
        %v2091 = vmul.f32 %v2027, 0.2
        %v2092 = vmul.f32 %v2028, 0.2
        %v2093 = vmul.f32 %v2029, 0.2
        %v2094 = vmul.f32 %v2030, 0.2
        %v2095 = vmul.f32 %v2031, 0.2
        %v2096 = vmul.f32 %v2032, 0.2
        %v2097 = vmul.f32 %v2033, 0.2
        %v2098 = vmul.f32 %v2034, 0.2
        %v2099 = vmul.f32 %v2035, 0.2
        %v2100 = vmul.f32 %v2036, 0.2
        %v2101 = vmul.f32 %v2037, 0.2
        %v2102 = vmul.f32 %v2038, 0.2
        %v2103 = vmul.f32 %v2039, 0.2
        %v2104 = vmul.f32 %v2040, 0.2
        %v2105 = vmul.f32 %v2041, 0.2
        %v2106 = vsel %vm2042, %v2010, %v2074
        %v2107 = vsel %vm2043, %v2011, %v2075
        %v2108 = vsel %vm2044, %v2012, %v2076
        %v2109 = vsel %vm2045, %v2013, %v2077
        %v2110 = vsel %vm2046, %v2014, %v2078
        %v2111 = vsel %vm2047, %v2015, %v2079
        %v2112 = vsel %vm2048, %v2016, %v2080
        %v2113 = vsel %vm2049, %v2017, %v2081
        %v2114 = vsel %vm2050, %v2018, %v2082
        %v2115 = vsel %vm2051, %v2019, %v2083
        %v2116 = vsel %vm2052, %v2020, %v2084
        %v2117 = vsel %vm2053, %v2021, %v2085
        %v2118 = vsel %vm2054, %v2022, %v2086
        %v2119 = vsel %vm2055, %v2023, %v2087
        %v2120 = vsel %vm2056, %v2024, %v2088
        %v2121 = vsel %vm2057, %v2025, %v2089
        %v2122 = vsel %vm2058, %v2026, %v2090
        %v2123 = vsel %vm2059, %v2027, %v2091
        %v2124 = vsel %vm2060, %v2028, %v2092
        %v2125 = vsel %vm2061, %v2029, %v2093
        %v2126 = vsel %vm2062, %v2030, %v2094
        %v2127 = vsel %vm2063, %v2031, %v2095
        %v2128 = vsel %vm2064, %v2032, %v2096
        %v2129 = vsel %vm2065, %v2033, %v2097
        %v2130 = vsel %vm2066, %v2034, %v2098
        %v2131 = vsel %vm2067, %v2035, %v2099
        %v2132 = vsel %vm2068, %v2036, %v2100
        %v2133 = vsel %vm2069, %v2037, %v2101
        %v2134 = vsel %vm2070, %v2038, %v2102
        %v2135 = vsel %vm2071, %v2039, %v2103
        %v2136 = vsel %vm2072, %v2040, %v2104
        %v2137 = vsel %vm2073, %v2041, %v2105
        %v2138 = vpack.c.bf16 %v2107, %v2106
        %v2139 = vpack.c.bf16 %v2109, %v2108
        %v2140 = vpack.c.bf16 %v2111, %v2110
        %v2141 = vpack.c.bf16 %v2113, %v2112
        %v2142 = vpack.c.bf16 %v2115, %v2114
        %v2143 = vpack.c.bf16 %v2117, %v2116
        %v2144 = vpack.c.bf16 %v2119, %v2118
        %v2145 = vpack.c.bf16 %v2121, %v2120
        %v2146 = vpack.c.bf16 %v2123, %v2122
        %v2147 = vpack.c.bf16 %v2125, %v2124
        %v2148 = vpack.c.bf16 %v2127, %v2126
        %v2149 = vpack.c.bf16 %v2129, %v2128
        %v2150 = vpack.c.bf16 %v2131, %v2130
        %v2151 = vpack.c.bf16 %v2133, %v2132
        %v2152 = vpack.c.bf16 %v2135, %v2134
        %v2153 = vpack.c.bf16 %v2137, %v2136
        %2154 = vst [vmem:[%s480] sm:$0xff] %v2138
        %2155 = vst [vmem:[#allocation2 + $0x8] sm:$0xff] %v2139
        %2156 = vst [vmem:[%s480 + $0x8] sm:$0xff] %v2140
        %2157 = vst [vmem:[#allocation2 + $0x10] sm:$0xff] %v2141
        %2158 = vst [vmem:[%s480 + $0x10] sm:$0xff] %v2142
        %2159 = vst [vmem:[#allocation2 + $0x18] sm:$0xff] %v2143
        %2160 = vst [vmem:[%s480 + $0x18] sm:$0xff] %v2144
        %2161 = vst [vmem:[#allocation2 + $0x20] sm:$0xff] %v2145
        %2162 = vst [vmem:[%s480 + $0x20] sm:$0xff] %v2146
        %2163 = vst [vmem:[#allocation2 + $0x28] sm:$0xff] %v2147
        %2164 = vst [vmem:[%s480 + $0x28] sm:$0xff] %v2148
        %2165 = vst [vmem:[#allocation2 + $0x30] sm:$0xff] %v2149
        %2166 = vst [vmem:[%s480 + $0x30] sm:$0xff] %v2150
        %2167 = vst [vmem:[#allocation2 + $0x38] sm:$0xff] %v2151
        %2168 = vst [vmem:[%s480 + $0x38] sm:$0xff] %v2152
        %2169 = vst [vmem:[#allocation2 + $0x40] sm:$0xff] %v2153
        %v2170 = vld [vmem:[%s7] sm:$0x1]
        %v2172 = vlaneseq
        %v2173 = vshrl.u32 %v2172, 7
        %v2174 = vsub.s32 0, %v2173
        %v2175 = vrot.slane %v2170, %v2174
        %v2177 = vld [vmem:[#allocation2] sm:$0xff]
        %v2178 = vld [vmem:[#allocation2 + $0x8] sm:$0xff]
        %v2179 = vld [vmem:[#allocation2 + $0x10] sm:$0xff]
        %v2180 = vld [vmem:[#allocation2 + $0x18] sm:$0xff]
        %v2181 = vld [vmem:[#allocation2 + $0x20] sm:$0xff]
        %v2182 = vld [vmem:[#allocation2 + $0x28] sm:$0xff]
        %v2183 = vld [vmem:[#allocation2 + $0x30] sm:$0xff]
        %v2184 = vld [vmem:[#allocation2 + $0x38] sm:$0xff]
        %v2185 = vld [vmem:[#allocation11] sm:$0xf]
        %v2186 = vld [vmem:[#allocation11 + $0x4] sm:$0xf]
        %v2187 = vld [vmem:[#allocation11 + $0x8] sm:$0xf]
        %v2188 = vld [vmem:[#allocation11 + $0xc] sm:$0xf]
        %v2189 = vld [vmem:[#allocation11 + $0x10] sm:$0xf]
        %v2190 = vld [vmem:[#allocation11 + $0x14] sm:$0xf]
        %v2191 = vld [vmem:[#allocation11 + $0x18] sm:$0xf]
        %v2192 = vld [vmem:[#allocation11 + $0x1c] sm:$0xf]
        %v2193 = vld [vmem:[#allocation11 + $0x20] sm:$0xf]
        %v2194 = vld [vmem:[#allocation11 + $0x24] sm:$0xf]
        %v2195 = vld [vmem:[#allocation11 + $0x28] sm:$0xf]
        %v2196 = vld [vmem:[#allocation11 + $0x2c] sm:$0xf]
        %v2197 = vld [vmem:[#allocation11 + $0x30] sm:$0xf]
        %v2198 = vld [vmem:[#allocation11 + $0x34] sm:$0xf]
        %v2199 = vld [vmem:[#allocation11 + $0x38] sm:$0xf]
        %v2200 = vld [vmem:[#allocation11 + $0x3c] sm:$0xf]
        %v2217 = vunpack.c.l.b16 %v2185
        %v2218 = vunpack.c.l.b16 %v2186
        %v2219 = vunpack.c.l.b16 %v2187
        %v2220 = vunpack.c.l.b16 %v2188
        %v2221 = vunpack.c.l.b16 %v2189
        %v2222 = vunpack.c.l.b16 %v2190
        %v2223 = vunpack.c.l.b16 %v2191
        %v2224 = vunpack.c.l.b16 %v2192
        %v2225 = vunpack.c.l.b16 %v2193
        %v2226 = vunpack.c.l.b16 %v2194
        %v2227 = vunpack.c.l.b16 %v2195
        %v2228 = vunpack.c.l.b16 %v2196
        %v2229 = vunpack.c.l.b16 %v2197
        %v2230 = vunpack.c.l.b16 %v2198
        %v2231 = vunpack.c.l.b16 %v2199
        %v2232 = vunpack.c.l.b16 %v2200
        %v2233 = vpack.c.b16 %v2218, %v2217
        %v2234 = vpack.c.b16 %v2220, %v2219
        %v2235 = vpack.c.b16 %v2222, %v2221
        %v2236 = vpack.c.b16 %v2224, %v2223
        %v2237 = vpack.c.b16 %v2226, %v2225
        %v2238 = vpack.c.b16 %v2228, %v2227
        %v2239 = vpack.c.b16 %v2230, %v2229
        %v2240 = vpack.c.b16 %v2232, %v2231
        %2249 = vmatprep.subr.bf16.mxu0 0
        %2250 = vmatpush1.bf16.msra.mxu0 %v2233
        %2251 = vmatprep.subr.bf16.mxu0 0
        %2252 = vmatpush1.bf16.msra.mxu0 %v2234
        %2253 = vmatprep.subr.bf16.mxu0 0
        %2254 = vmatpush1.bf16.msra.mxu0 %v2235
        %2255 = vmatprep.subr.bf16.mxu0 0
        %2256 = vmatpush1.bf16.msra.mxu0 %v2236
        %2257 = vmatprep.subr.bf16.mxu0 0
        %2258 = vmatpush1.bf16.msra.mxu0 %v2237
        %2259 = vmatprep.subr.bf16.mxu0 0
        %2260 = vmatpush1.bf16.msra.mxu0 %v2238
        %2261 = vmatprep.subr.bf16.mxu0 0
        %2262 = vmatpush1.bf16.msra.mxu0 %v2239
        %2263 = vmatprep.subr.bf16.mxu0 0
        %2264 = vmatpush1.bf16.msra.mxu0 %v2240
        %2265 = vmatprep.subr.bf16.mxu0 0
        %2266 = vmatpush1.bf16.msra.mxu0 0
        %2267 = vmatprep.subr.bf16.mxu0 0
        %2268 = vmatpush1.bf16.msra.mxu0 0
        %2269 = vmatprep.subr.bf16.mxu0 0
        %2270 = vmatpush1.bf16.msra.mxu0 0
        %2271 = vmatprep.subr.bf16.mxu0 0
        %2272 = vmatpush1.bf16.msra.mxu0 0
        %2273 = vmatprep.subr.bf16.mxu0 0
        %2274 = vmatpush1.bf16.msra.mxu0 0
        %2275 = vmatprep.subr.bf16.mxu0 0
        %2276 = vmatpush1.bf16.msra.mxu0 0
        %2277 = vmatprep.subr.bf16.mxu0 0
        %2278 = vmatpush1.bf16.msra.mxu0 0
        %2279 = vmatprep.subr.bf16.mxu0 0
        %2280 = vmatpush1.bf16.msra.mxu0 0
        %2281 = vmatprep.mubr.bf16.mxu0 0
        %2282 = vmatmul.mubr.bf16.gmra.mrb[0].mxu0 %v2177
        %v2283 = vpop.f32.mrb[0].mxu0
        %v2284 = vadd.f32 0.0, %v2283
        %v2285 = vpop.f32.mrb[0].mxu0
        %v2286 = vpop.f32.mrb[0].mxu0
        %v2287 = vadd.f32 0.0, %v2286
        %v2288 = vpop.f32.mrb[0].mxu0
        %2289 = vmatprep.mubr.bf16.mxu0 0
        %2290 = vmatmul.mubr.bf16.gmra.mrb[0].mxu0 %v2178
        %v2291 = vpop.f32.mrb[0].mxu0
        %v2292 = vadd.f32 0.0, %v2291
        %v2293 = vpop.f32.mrb[0].mxu0
        %v2294 = vpop.f32.mrb[0].mxu0
        %v2295 = vadd.f32 0.0, %v2294
        %v2296 = vpop.f32.mrb[0].mxu0
        %2297 = vmatprep.mubr.bf16.mxu0 0
        %2298 = vmatmul.mubr.bf16.gmra.mrb[0].mxu0 %v2179
        %v2299 = vpop.f32.mrb[0].mxu0
        %v2300 = vadd.f32 0.0, %v2299
        %v2301 = vpop.f32.mrb[0].mxu0
        %v2302 = vpop.f32.mrb[0].mxu0
        %v2303 = vadd.f32 0.0, %v2302
        %v2304 = vpop.f32.mrb[0].mxu0
        %2305 = vmatprep.mubr.bf16.mxu0 0
        %2306 = vmatmul.mubr.bf16.gmra.mrb[0].mxu0 %v2180
        %v2307 = vpop.f32.mrb[0].mxu0
        %v2308 = vadd.f32 0.0, %v2307
        %v2309 = vpop.f32.mrb[0].mxu0
        %v2310 = vpop.f32.mrb[0].mxu0
        %v2311 = vadd.f32 0.0, %v2310
        %v2312 = vpop.f32.mrb[0].mxu0
        %2313 = vmatprep.mubr.bf16.mxu0 0
        %2314 = vmatmul.mubr.bf16.gmra.mrb[0].mxu0 %v2181
        %v2315 = vpop.f32.mrb[0].mxu0
        %v2316 = vadd.f32 0.0, %v2315
        %v2317 = vpop.f32.mrb[0].mxu0
        %v2318 = vpop.f32.mrb[0].mxu0
        %v2319 = vadd.f32 0.0, %v2318
        %v2320 = vpop.f32.mrb[0].mxu0
        %2321 = vmatprep.mubr.bf16.mxu0 0
        %2322 = vmatmul.mubr.bf16.gmra.mrb[0].mxu0 %v2182
        %v2323 = vpop.f32.mrb[0].mxu0
        %v2324 = vadd.f32 0.0, %v2323
        %v2325 = vpop.f32.mrb[0].mxu0
        %v2326 = vpop.f32.mrb[0].mxu0
        %v2327 = vadd.f32 0.0, %v2326
        %v2328 = vpop.f32.mrb[0].mxu0
        %2329 = vmatprep.mubr.bf16.mxu0 0
        %2330 = vmatmul.mubr.bf16.gmra.mrb[0].mxu0 %v2183
        %v2331 = vpop.f32.mrb[0].mxu0
        %v2332 = vadd.f32 0.0, %v2331
        %v2333 = vpop.f32.mrb[0].mxu0
        %v2334 = vpop.f32.mrb[0].mxu0
        %v2335 = vadd.f32 0.0, %v2334
        %v2336 = vpop.f32.mrb[0].mxu0
        %2337 = vmatprep.mubr.bf16.mxu0 0
        %2338 = vmatmul.mubr.bf16.gmra.mrb[0].mxu0 %v2184
        %v2339 = vpop.f32.mrb[0].mxu0
        %v2340 = vadd.f32 0.0, %v2339
        %v2341 = vpop.f32.mrb[0].mxu0
        %v2342 = vpop.f32.mrb[0].mxu0
        %v2343 = vadd.f32 0.0, %v2342
        %v2344 = vpop.f32.mrb[0].mxu0
        %2345 = vdwg.mxu0
        %v2346 = vadd.f32 %v2175, %v2284
        %v2347 = vadd.f32 %v2175, %v2287
        %v2348 = vadd.f32 %v2175, %v2292
        %v2349 = vadd.f32 %v2175, %v2295
        %v2350 = vadd.f32 %v2175, %v2300
        %v2351 = vadd.f32 %v2175, %v2303
        %v2352 = vadd.f32 %v2175, %v2308
        %v2353 = vadd.f32 %v2175, %v2311
        %v2354 = vadd.f32 %v2175, %v2316
        %v2355 = vadd.f32 %v2175, %v2319
        %v2356 = vadd.f32 %v2175, %v2324
        %v2357 = vadd.f32 %v2175, %v2327
        %v2358 = vadd.f32 %v2175, %v2332
        %v2359 = vadd.f32 %v2175, %v2335
        %v2360 = vadd.f32 %v2175, %v2340
        %v2361 = vadd.f32 %v2175, %v2343
        %v2362 = vld [vmem:[%s480] sm:$0xff]
        %v2363 = vld [vmem:[%s480 + $0x8] sm:$0xff]
        %v2364 = vld [vmem:[%s480 + $0x10] sm:$0xff]
        %v2365 = vld [vmem:[%s480 + $0x18] sm:$0xff]
        %v2366 = vld [vmem:[%s480 + $0x20] sm:$0xff]
        %v2367 = vld [vmem:[%s480 + $0x28] sm:$0xff]
        %v2368 = vld [vmem:[%s480 + $0x30] sm:$0xff]
        %v2369 = vld [vmem:[%s480 + $0x38] sm:$0xff]
        %s2370 = scalar_lea.vmem [#allocation11], 64
        %v2371 = vld [vmem:[%s2370] sm:$0xf]
        %v2372 = vld [vmem:[%s2370 + $0x4] sm:$0xf]
        %v2373 = vld [vmem:[%s2370 + $0x8] sm:$0xf]
        %v2374 = vld [vmem:[%s2370 + $0xc] sm:$0xf]
        %v2375 = vld [vmem:[%s2370 + $0x10] sm:$0xf]
        %v2376 = vld [vmem:[%s2370 + $0x14] sm:$0xf]
        %v2377 = vld [vmem:[%s2370 + $0x18] sm:$0xf]
        %v2378 = vld [vmem:[%s2370 + $0x1c] sm:$0xf]
        %v2379 = vld [vmem:[%s2370 + $0x20] sm:$0xf]
        %v2380 = vld [vmem:[%s2370 + $0x24] sm:$0xf]
        %v2381 = vld [vmem:[%s2370 + $0x28] sm:$0xf]
        %v2382 = vld [vmem:[%s2370 + $0x2c] sm:$0xf]
        %v2383 = vld [vmem:[%s2370 + $0x30] sm:$0xf]
        %v2384 = vld [vmem:[%s2370 + $0x34] sm:$0xf]
        %v2385 = vld [vmem:[%s2370 + $0x38] sm:$0xf]
        %v2386 = vld [vmem:[%s2370 + $0x3c] sm:$0xf]
        %v2403 = vunpack.c.l.b16 %v2371
        %v2404 = vunpack.c.l.b16 %v2372
        %v2405 = vunpack.c.l.b16 %v2373
        %v2406 = vunpack.c.l.b16 %v2374
        %v2407 = vunpack.c.l.b16 %v2375
        %v2408 = vunpack.c.l.b16 %v2376
        %v2409 = vunpack.c.l.b16 %v2377
        %v2410 = vunpack.c.l.b16 %v2378
        %v2411 = vunpack.c.l.b16 %v2379
        %v2412 = vunpack.c.l.b16 %v2380
        %v2413 = vunpack.c.l.b16 %v2381
        %v2414 = vunpack.c.l.b16 %v2382
        %v2415 = vunpack.c.l.b16 %v2383
        %v2416 = vunpack.c.l.b16 %v2384
        %v2417 = vunpack.c.l.b16 %v2385
        %v2418 = vunpack.c.l.b16 %v2386
        %v2419 = vpack.c.b16 %v2404, %v2403
        %v2420 = vpack.c.b16 %v2406, %v2405
        %v2421 = vpack.c.b16 %v2408, %v2407
        %v2422 = vpack.c.b16 %v2410, %v2409
        %v2423 = vpack.c.b16 %v2412, %v2411
        %v2424 = vpack.c.b16 %v2414, %v2413
        %v2425 = vpack.c.b16 %v2416, %v2415
        %v2426 = vpack.c.b16 %v2418, %v2417
        %2435 = vmatprep.subr.bf16.mxu0 0
        %2436 = vmatpush1.bf16.msra.mxu0 %v2419
        %2437 = vmatprep.subr.bf16.mxu0 0
        %2438 = vmatpush1.bf16.msra.mxu0 %v2420
        %2439 = vmatprep.subr.bf16.mxu0 0
        %2440 = vmatpush1.bf16.msra.mxu0 %v2421
        %2441 = vmatprep.subr.bf16.mxu0 0
        %2442 = vmatpush1.bf16.msra.mxu0 %v2422
        %2443 = vmatprep.subr.bf16.mxu0 0
        %2444 = vmatpush1.bf16.msra.mxu0 %v2423
        %2445 = vmatprep.subr.bf16.mxu0 0
        %2446 = vmatpush1.bf16.msra.mxu0 %v2424
        %2447 = vmatprep.subr.bf16.mxu0 0
        %2448 = vmatpush1.bf16.msra.mxu0 %v2425
        %2449 = vmatprep.subr.bf16.mxu0 0
        %2450 = vmatpush1.bf16.msra.mxu0 %v2426
        %2451 = vmatprep.subr.bf16.mxu0 0
        %2452 = vmatpush1.bf16.msra.mxu0 0
        %2453 = vmatprep.subr.bf16.mxu0 0
        %2454 = vmatpush1.bf16.msra.mxu0 0
        %2455 = vmatprep.subr.bf16.mxu0 0
        %2456 = vmatpush1.bf16.msra.mxu0 0
        %2457 = vmatprep.subr.bf16.mxu0 0
        %2458 = vmatpush1.bf16.msra.mxu0 0
        %2459 = vmatprep.subr.bf16.mxu0 0
        %2460 = vmatpush1.bf16.msra.mxu0 0
        %2461 = vmatprep.subr.bf16.mxu0 0
        %2462 = vmatpush1.bf16.msra.mxu0 0
        %2463 = vmatprep.subr.bf16.mxu0 0
        %2464 = vmatpush1.bf16.msra.mxu0 0
        %2465 = vmatprep.subr.bf16.mxu0 0
        %2466 = vmatpush1.bf16.msra.mxu0 0
        %2467 = vmatprep.mubr.bf16.mxu0 0
        %2468 = vmatmul.mubr.bf16.gmra.mrb[0].mxu0 %v2362
        %v2469 = vpop.f32.mrb[0].mxu0
        %v2470 = vadd.f32 0.0, %v2469
        %v2471 = vpop.f32.mrb[0].mxu0
        %v2472 = vpop.f32.mrb[0].mxu0
        %v2473 = vadd.f32 0.0, %v2472
        %v2474 = vpop.f32.mrb[0].mxu0
        %2475 = vmatprep.mubr.bf16.mxu0 0
        %2476 = vmatmul.mubr.bf16.gmra.mrb[0].mxu0 %v2363
        %v2477 = vpop.f32.mrb[0].mxu0
        %v2478 = vadd.f32 0.0, %v2477
        %v2479 = vpop.f32.mrb[0].mxu0
        %v2480 = vpop.f32.mrb[0].mxu0
        %v2481 = vadd.f32 0.0, %v2480
        %v2482 = vpop.f32.mrb[0].mxu0
        %2483 = vmatprep.mubr.bf16.mxu0 0
        %2484 = vmatmul.mubr.bf16.gmra.mrb[0].mxu0 %v2364
        %v2485 = vpop.f32.mrb[0].mxu0
        %v2486 = vadd.f32 0.0, %v2485
        %v2487 = vpop.f32.mrb[0].mxu0
        %v2488 = vpop.f32.mrb[0].mxu0
        %v2489 = vadd.f32 0.0, %v2488
        %v2490 = vpop.f32.mrb[0].mxu0
        %2491 = vmatprep.mubr.bf16.mxu0 0
        %2492 = vmatmul.mubr.bf16.gmra.mrb[0].mxu0 %v2365
        %v2493 = vpop.f32.mrb[0].mxu0
        %v2494 = vadd.f32 0.0, %v2493
        %v2495 = vpop.f32.mrb[0].mxu0
        %v2496 = vpop.f32.mrb[0].mxu0
        %v2497 = vadd.f32 0.0, %v2496
        %v2498 = vpop.f32.mrb[0].mxu0
        %2499 = vmatprep.mubr.bf16.mxu0 0
        %2500 = vmatmul.mubr.bf16.gmra.mrb[0].mxu0 %v2366
        %v2501 = vpop.f32.mrb[0].mxu0
        %v2502 = vadd.f32 0.0, %v2501
        %v2503 = vpop.f32.mrb[0].mxu0
        %v2504 = vpop.f32.mrb[0].mxu0
        %v2505 = vadd.f32 0.0, %v2504
        %v2506 = vpop.f32.mrb[0].mxu0
        %2507 = vmatprep.mubr.bf16.mxu0 0
        %2508 = vmatmul.mubr.bf16.gmra.mrb[0].mxu0 %v2367
        %v2509 = vpop.f32.mrb[0].mxu0
        %v2510 = vadd.f32 0.0, %v2509
        %v2511 = vpop.f32.mrb[0].mxu0
        %v2512 = vpop.f32.mrb[0].mxu0
        %v2513 = vadd.f32 0.0, %v2512
        %v2514 = vpop.f32.mrb[0].mxu0
        %2515 = vmatprep.mubr.bf16.mxu0 0
        %2516 = vmatmul.mubr.bf16.gmra.mrb[0].mxu0 %v2368
        %v2517 = vpop.f32.mrb[0].mxu0
        %v2518 = vadd.f32 0.0, %v2517
        %v2519 = vpop.f32.mrb[0].mxu0
        %v2520 = vpop.f32.mrb[0].mxu0
        %v2521 = vadd.f32 0.0, %v2520
        %v2522 = vpop.f32.mrb[0].mxu0
        %2523 = vmatprep.mubr.bf16.mxu0 0
        %2524 = vmatmul.mubr.bf16.gmra.mrb[0].mxu0 %v2369
        %v2525 = vpop.f32.mrb[0].mxu0
        %v2526 = vadd.f32 0.0, %v2525
        %v2527 = vpop.f32.mrb[0].mxu0
        %v2528 = vpop.f32.mrb[0].mxu0
        %v2529 = vadd.f32 0.0, %v2528
        %v2530 = vpop.f32.mrb[0].mxu0
        %2531 = vdwg.mxu0
        %v2532 = vadd.f32 %v2346, %v2470
        %v2533 = vadd.f32 %v2347, %v2473
        %v2534 = vadd.f32 %v2348, %v2478
        %v2535 = vadd.f32 %v2349, %v2481
        %v2536 = vadd.f32 %v2350, %v2486
        %v2537 = vadd.f32 %v2351, %v2489
        %v2538 = vadd.f32 %v2352, %v2494
        %v2539 = vadd.f32 %v2353, %v2497
        %v2540 = vadd.f32 %v2354, %v2502
        %v2541 = vadd.f32 %v2355, %v2505
        %v2542 = vadd.f32 %v2356, %v2510
        %v2543 = vadd.f32 %v2357, %v2513
        %v2544 = vadd.f32 %v2358, %v2518
        %v2545 = vadd.f32 %v2359, %v2521
        %v2546 = vadd.f32 %v2360, %v2526
        %v2547 = vadd.f32 %v2361, %v2529
        %v2548 = vld [vmem:[#allocation2 + $0x8] sm:$0xff]
        %v2549 = vld [vmem:[#allocation2 + $0x10] sm:$0xff]
        %v2550 = vld [vmem:[#allocation2 + $0x18] sm:$0xff]
        %v2551 = vld [vmem:[#allocation2 + $0x20] sm:$0xff]
        %v2552 = vld [vmem:[#allocation2 + $0x28] sm:$0xff]
        %v2553 = vld [vmem:[#allocation2 + $0x30] sm:$0xff]
        %v2554 = vld [vmem:[#allocation2 + $0x38] sm:$0xff]
        %v2555 = vld [vmem:[#allocation2 + $0x40] sm:$0xff]
        %s2556 = scalar_lea.vmem [#allocation11], 128
        %v2557 = vld [vmem:[%s2556] sm:$0xf]
        %v2558 = vld [vmem:[%s2556 + $0x4] sm:$0xf]
        %v2559 = vld [vmem:[%s2556 + $0x8] sm:$0xf]
        %v2560 = vld [vmem:[%s2556 + $0xc] sm:$0xf]
        %v2561 = vld [vmem:[%s2556 + $0x10] sm:$0xf]
        %v2562 = vld [vmem:[%s2556 + $0x14] sm:$0xf]
        %v2563 = vld [vmem:[%s2556 + $0x18] sm:$0xf]
        %v2564 = vld [vmem:[%s2556 + $0x1c] sm:$0xf]
        %v2565 = vld [vmem:[%s2556 + $0x20] sm:$0xf]
        %v2566 = vld [vmem:[%s2556 + $0x24] sm:$0xf]
        %v2567 = vld [vmem:[%s2556 + $0x28] sm:$0xf]
        %v2568 = vld [vmem:[%s2556 + $0x2c] sm:$0xf]
        %v2569 = vld [vmem:[%s2556 + $0x30] sm:$0xf]
        %v2570 = vld [vmem:[%s2556 + $0x34] sm:$0xf]
        %v2571 = vld [vmem:[%s2556 + $0x38] sm:$0xf]
        %v2572 = vld [vmem:[%s2556 + $0x3c] sm:$0xf]
        %v2589 = vunpack.c.l.b16 %v2557
        %v2590 = vunpack.c.l.b16 %v2558
        %v2591 = vunpack.c.l.b16 %v2559
        %v2592 = vunpack.c.l.b16 %v2560
        %v2593 = vunpack.c.l.b16 %v2561
        %v2594 = vunpack.c.l.b16 %v2562
        %v2595 = vunpack.c.l.b16 %v2563
        %v2596 = vunpack.c.l.b16 %v2564
        %v2597 = vunpack.c.l.b16 %v2565
        %v2598 = vunpack.c.l.b16 %v2566
        %v2599 = vunpack.c.l.b16 %v2567
        %v2600 = vunpack.c.l.b16 %v2568
        %v2601 = vunpack.c.l.b16 %v2569
        %v2602 = vunpack.c.l.b16 %v2570
        %v2603 = vunpack.c.l.b16 %v2571
        %v2604 = vunpack.c.l.b16 %v2572
        %v2605 = vpack.c.b16 %v2590, %v2589
        %v2606 = vpack.c.b16 %v2592, %v2591
        %v2607 = vpack.c.b16 %v2594, %v2593
        %v2608 = vpack.c.b16 %v2596, %v2595
        %v2609 = vpack.c.b16 %v2598, %v2597
        %v2610 = vpack.c.b16 %v2600, %v2599
        %v2611 = vpack.c.b16 %v2602, %v2601
        %v2612 = vpack.c.b16 %v2604, %v2603
        %2621 = vmatprep.subr.bf16.mxu0 0
        %2622 = vmatpush1.bf16.msra.mxu0 %v2605
        %2623 = vmatprep.subr.bf16.mxu0 0
        %2624 = vmatpush1.bf16.msra.mxu0 %v2606
        %2625 = vmatprep.subr.bf16.mxu0 0
        %2626 = vmatpush1.bf16.msra.mxu0 %v2607
        %2627 = vmatprep.subr.bf16.mxu0 0
        %2628 = vmatpush1.bf16.msra.mxu0 %v2608
        %2629 = vmatprep.subr.bf16.mxu0 0
        %2630 = vmatpush1.bf16.msra.mxu0 %v2609
        %2631 = vmatprep.subr.bf16.mxu0 0
        %2632 = vmatpush1.bf16.msra.mxu0 %v2610
        %2633 = vmatprep.subr.bf16.mxu0 0
        %2634 = vmatpush1.bf16.msra.mxu0 %v2611
        %2635 = vmatprep.subr.bf16.mxu0 0
        %2636 = vmatpush1.bf16.msra.mxu0 %v2612
        %2637 = vmatprep.subr.bf16.mxu0 0
        %2638 = vmatpush1.bf16.msra.mxu0 0
        %2639 = vmatprep.subr.bf16.mxu0 0
        %2640 = vmatpush1.bf16.msra.mxu0 0
        %2641 = vmatprep.subr.bf16.mxu0 0
        %2642 = vmatpush1.bf16.msra.mxu0 0
        %2643 = vmatprep.subr.bf16.mxu0 0
        %2644 = vmatpush1.bf16.msra.mxu0 0
        %2645 = vmatprep.subr.bf16.mxu0 0
        %2646 = vmatpush1.bf16.msra.mxu0 0
        %2647 = vmatprep.subr.bf16.mxu0 0
        %2648 = vmatpush1.bf16.msra.mxu0 0
        %2649 = vmatprep.subr.bf16.mxu0 0
        %2650 = vmatpush1.bf16.msra.mxu0 0
        %2651 = vmatprep.subr.bf16.mxu0 0
        %2652 = vmatpush1.bf16.msra.mxu0 0
        %2653 = vmatprep.mubr.bf16.mxu0 0
        %2654 = vmatmul.mubr.bf16.gmra.mrb[0].mxu0 %v2548
        %v2655 = vpop.f32.mrb[0].mxu0
        %v2656 = vadd.f32 0.0, %v2655
        %v2657 = vpop.f32.mrb[0].mxu0
        %v2658 = vpop.f32.mrb[0].mxu0
        %v2659 = vadd.f32 0.0, %v2658
        %v2660 = vpop.f32.mrb[0].mxu0
        %2661 = vmatprep.mubr.bf16.mxu0 0
        %2662 = vmatmul.mubr.bf16.gmra.mrb[0].mxu0 %v2549
        %v2663 = vpop.f32.mrb[0].mxu0
        %v2664 = vadd.f32 0.0, %v2663
        %v2665 = vpop.f32.mrb[0].mxu0
        %v2666 = vpop.f32.mrb[0].mxu0
        %v2667 = vadd.f32 0.0, %v2666
        %v2668 = vpop.f32.mrb[0].mxu0
        %2669 = vmatprep.mubr.bf16.mxu0 0
        %2670 = vmatmul.mubr.bf16.gmra.mrb[0].mxu0 %v2550
        %v2671 = vpop.f32.mrb[0].mxu0
        %v2672 = vadd.f32 0.0, %v2671
        %v2673 = vpop.f32.mrb[0].mxu0
        %v2674 = vpop.f32.mrb[0].mxu0
        %v2675 = vadd.f32 0.0, %v2674
        %v2676 = vpop.f32.mrb[0].mxu0
        %2677 = vmatprep.mubr.bf16.mxu0 0
        %2678 = vmatmul.mubr.bf16.gmra.mrb[0].mxu0 %v2551
        %v2679 = vpop.f32.mrb[0].mxu0
        %v2680 = vadd.f32 0.0, %v2679
        %v2681 = vpop.f32.mrb[0].mxu0
        %v2682 = vpop.f32.mrb[0].mxu0
        %v2683 = vadd.f32 0.0, %v2682
        %v2684 = vpop.f32.mrb[0].mxu0
        %2685 = vmatprep.mubr.bf16.mxu0 0
        %2686 = vmatmul.mubr.bf16.gmra.mrb[0].mxu0 %v2552
        %v2687 = vpop.f32.mrb[0].mxu0
        %v2688 = vadd.f32 0.0, %v2687
        %v2689 = vpop.f32.mrb[0].mxu0
        %v2690 = vpop.f32.mrb[0].mxu0
        %v2691 = vadd.f32 0.0, %v2690
        %v2692 = vpop.f32.mrb[0].mxu0
        %2693 = vmatprep.mubr.bf16.mxu0 0
        %2694 = vmatmul.mubr.bf16.gmra.mrb[0].mxu0 %v2553
        %v2695 = vpop.f32.mrb[0].mxu0
        %v2696 = vadd.f32 0.0, %v2695
        %v2697 = vpop.f32.mrb[0].mxu0
        %v2698 = vpop.f32.mrb[0].mxu0
        %v2699 = vadd.f32 0.0, %v2698
        %v2700 = vpop.f32.mrb[0].mxu0
        %2701 = vmatprep.mubr.bf16.mxu0 0
        %2702 = vmatmul.mubr.bf16.gmra.mrb[0].mxu0 %v2554
        %v2703 = vpop.f32.mrb[0].mxu0
        %v2704 = vadd.f32 0.0, %v2703
        %v2705 = vpop.f32.mrb[0].mxu0
        %v2706 = vpop.f32.mrb[0].mxu0
        %v2707 = vadd.f32 0.0, %v2706
        %v2708 = vpop.f32.mrb[0].mxu0
        %2709 = vmatprep.mubr.bf16.mxu0 0
        %2710 = vmatmul.mubr.bf16.gmra.mrb[0].mxu0 %v2555
        %v2711 = vpop.f32.mrb[0].mxu0
        %v2712 = vadd.f32 0.0, %v2711
        %v2713 = vpop.f32.mrb[0].mxu0
        %v2714 = vpop.f32.mrb[0].mxu0
        %v2715 = vadd.f32 0.0, %v2714
        %v2716 = vpop.f32.mrb[0].mxu0
        %2717 = vdwg.mxu0
        %v2718 = vadd.f32 %v2532, %v2656
        %v2719 = vadd.f32 %v2533, %v2659
        %v2720 = vadd.f32 %v2534, %v2664
        %v2721 = vadd.f32 %v2535, %v2667
        %v2722 = vadd.f32 %v2536, %v2672
        %v2723 = vadd.f32 %v2537, %v2675
        %v2724 = vadd.f32 %v2538, %v2680
        %v2725 = vadd.f32 %v2539, %v2683
        %v2726 = vadd.f32 %v2540, %v2688
        %v2727 = vadd.f32 %v2541, %v2691
        %v2728 = vadd.f32 %v2542, %v2696
        %v2729 = vadd.f32 %v2543, %v2699
        %v2730 = vadd.f32 %v2544, %v2704
        %v2731 = vadd.f32 %v2545, %v2707
        %v2732 = vadd.f32 %v2546, %v2712
        %v2733 = vadd.f32 %v2547, %v2715
        %v2734 = vld [vmem:[%s480 + $0x8] sm:$0xff]
        %v2735 = vld [vmem:[%s480 + $0x10] sm:$0xff]
        %v2736 = vld [vmem:[%s480 + $0x18] sm:$0xff]
        %v2737 = vld [vmem:[%s480 + $0x20] sm:$0xff]
        %v2738 = vld [vmem:[%s480 + $0x28] sm:$0xff]
        %v2739 = vld [vmem:[%s480 + $0x30] sm:$0xff]
        %v2740 = vld [vmem:[%s480 + $0x38] sm:$0xff]
        %v2741 = vld [vmem:[%s480 + $0x40] sm:$0xff]
        %s2742 = scalar_lea.vmem [#allocation11], 192
        %v2743 = vld [vmem:[%s2742] sm:$0xf]
        %v2744 = vld [vmem:[%s2742 + $0x4] sm:$0xf]
        %v2745 = vld [vmem:[%s2742 + $0x8] sm:$0xf]
        %v2746 = vld [vmem:[%s2742 + $0xc] sm:$0xf]
        %v2747 = vld [vmem:[%s2742 + $0x10] sm:$0xf]
        %v2748 = vld [vmem:[%s2742 + $0x14] sm:$0xf]
        %v2749 = vld [vmem:[%s2742 + $0x18] sm:$0xf]
        %v2750 = vld [vmem:[%s2742 + $0x1c] sm:$0xf]
        %v2751 = vld [vmem:[%s2742 + $0x20] sm:$0xf]
        %v2752 = vld [vmem:[%s2742 + $0x24] sm:$0xf]
        %v2753 = vld [vmem:[%s2742 + $0x28] sm:$0xf]
        %v2754 = vld [vmem:[%s2742 + $0x2c] sm:$0xf]
        %v2755 = vld [vmem:[%s2742 + $0x30] sm:$0xf]
        %v2756 = vld [vmem:[%s2742 + $0x34] sm:$0xf]
        %v2757 = vld [vmem:[%s2742 + $0x38] sm:$0xf]
        %v2758 = vld [vmem:[%s2742 + $0x3c] sm:$0xf]
        %v2775 = vunpack.c.l.b16 %v2743
        %v2776 = vunpack.c.l.b16 %v2744
        %v2777 = vunpack.c.l.b16 %v2745
        %v2778 = vunpack.c.l.b16 %v2746
        %v2779 = vunpack.c.l.b16 %v2747
        %v2780 = vunpack.c.l.b16 %v2748
        %v2781 = vunpack.c.l.b16 %v2749
        %v2782 = vunpack.c.l.b16 %v2750
        %v2783 = vunpack.c.l.b16 %v2751
        %v2784 = vunpack.c.l.b16 %v2752
        %v2785 = vunpack.c.l.b16 %v2753
        %v2786 = vunpack.c.l.b16 %v2754
        %v2787 = vunpack.c.l.b16 %v2755
        %v2788 = vunpack.c.l.b16 %v2756
        %v2789 = vunpack.c.l.b16 %v2757
        %v2790 = vunpack.c.l.b16 %v2758
        %v2791 = vpack.c.b16 %v2776, %v2775
        %v2792 = vpack.c.b16 %v2778, %v2777
        %v2793 = vpack.c.b16 %v2780, %v2779
        %v2794 = vpack.c.b16 %v2782, %v2781
        %v2795 = vpack.c.b16 %v2784, %v2783
        %v2796 = vpack.c.b16 %v2786, %v2785
        %v2797 = vpack.c.b16 %v2788, %v2787
        %v2798 = vpack.c.b16 %v2790, %v2789
        %2807 = vmatprep.subr.bf16.mxu0 0
        %2808 = vmatpush1.bf16.msra.mxu0 %v2791
        %2809 = vmatprep.subr.bf16.mxu0 0
        %2810 = vmatpush1.bf16.msra.mxu0 %v2792
        %2811 = vmatprep.subr.bf16.mxu0 0
        %2812 = vmatpush1.bf16.msra.mxu0 %v2793
        %2813 = vmatprep.subr.bf16.mxu0 0
        %2814 = vmatpush1.bf16.msra.mxu0 %v2794
        %2815 = vmatprep.subr.bf16.mxu0 0
        %2816 = vmatpush1.bf16.msra.mxu0 %v2795
        %2817 = vmatprep.subr.bf16.mxu0 0
        %2818 = vmatpush1.bf16.msra.mxu0 %v2796
        %2819 = vmatprep.subr.bf16.mxu0 0
        %2820 = vmatpush1.bf16.msra.mxu0 %v2797
        %2821 = vmatprep.subr.bf16.mxu0 0
        %2822 = vmatpush1.bf16.msra.mxu0 %v2798
        %2823 = vmatprep.subr.bf16.mxu0 0
        %2824 = vmatpush1.bf16.msra.mxu0 0
        %2825 = vmatprep.subr.bf16.mxu0 0
        %2826 = vmatpush1.bf16.msra.mxu0 0
        %2827 = vmatprep.subr.bf16.mxu0 0
        %2828 = vmatpush1.bf16.msra.mxu0 0
        %2829 = vmatprep.subr.bf16.mxu0 0
        %2830 = vmatpush1.bf16.msra.mxu0 0
        %2831 = vmatprep.subr.bf16.mxu0 0
        %2832 = vmatpush1.bf16.msra.mxu0 0
        %2833 = vmatprep.subr.bf16.mxu0 0
        %2834 = vmatpush1.bf16.msra.mxu0 0
        %2835 = vmatprep.subr.bf16.mxu0 0
        %2836 = vmatpush1.bf16.msra.mxu0 0
        %2837 = vmatprep.subr.bf16.mxu0 0
        %2838 = vmatpush1.bf16.msra.mxu0 0
        %2839 = vmatprep.mubr.bf16.mxu0 0
        %2840 = vmatmul.mubr.bf16.gmra.mrb[0].mxu0 %v2734
        %v2841 = vpop.f32.mrb[0].mxu0
        %v2842 = vadd.f32 0.0, %v2841
        %v2843 = vpop.f32.mrb[0].mxu0
        %v2844 = vpop.f32.mrb[0].mxu0
        %v2845 = vadd.f32 0.0, %v2844
        %v2846 = vpop.f32.mrb[0].mxu0
        %2847 = vmatprep.mubr.bf16.mxu0 0
        %2848 = vmatmul.mubr.bf16.gmra.mrb[0].mxu0 %v2735
        %v2849 = vpop.f32.mrb[0].mxu0
        %v2850 = vadd.f32 0.0, %v2849
        %v2851 = vpop.f32.mrb[0].mxu0
        %v2852 = vpop.f32.mrb[0].mxu0
        %v2853 = vadd.f32 0.0, %v2852
        %v2854 = vpop.f32.mrb[0].mxu0
        %2855 = vmatprep.mubr.bf16.mxu0 0
        %2856 = vmatmul.mubr.bf16.gmra.mrb[0].mxu0 %v2736
        %v2857 = vpop.f32.mrb[0].mxu0
        %v2858 = vadd.f32 0.0, %v2857
        %v2859 = vpop.f32.mrb[0].mxu0
        %v2860 = vpop.f32.mrb[0].mxu0
        %v2861 = vadd.f32 0.0, %v2860
        %v2862 = vpop.f32.mrb[0].mxu0
        %2863 = vmatprep.mubr.bf16.mxu0 0
        %2864 = vmatmul.mubr.bf16.gmra.mrb[0].mxu0 %v2737
        %v2865 = vpop.f32.mrb[0].mxu0
        %v2866 = vadd.f32 0.0, %v2865
        %v2867 = vpop.f32.mrb[0].mxu0
        %v2868 = vpop.f32.mrb[0].mxu0
        %v2869 = vadd.f32 0.0, %v2868
        %v2870 = vpop.f32.mrb[0].mxu0
        %2871 = vmatprep.mubr.bf16.mxu0 0
        %2872 = vmatmul.mubr.bf16.gmra.mrb[0].mxu0 %v2738
        %v2873 = vpop.f32.mrb[0].mxu0
        %v2874 = vadd.f32 0.0, %v2873
        %v2875 = vpop.f32.mrb[0].mxu0
        %v2876 = vpop.f32.mrb[0].mxu0
        %v2877 = vadd.f32 0.0, %v2876
        %v2878 = vpop.f32.mrb[0].mxu0
        %2879 = vmatprep.mubr.bf16.mxu0 0
        %2880 = vmatmul.mubr.bf16.gmra.mrb[0].mxu0 %v2739
        %v2881 = vpop.f32.mrb[0].mxu0
        %v2882 = vadd.f32 0.0, %v2881
        %v2883 = vpop.f32.mrb[0].mxu0
        %v2884 = vpop.f32.mrb[0].mxu0
        %v2885 = vadd.f32 0.0, %v2884
        %v2886 = vpop.f32.mrb[0].mxu0
        %2887 = vmatprep.mubr.bf16.mxu0 0
        %2888 = vmatmul.mubr.bf16.gmra.mrb[0].mxu0 %v2740
        %v2889 = vpop.f32.mrb[0].mxu0
        %v2890 = vadd.f32 0.0, %v2889
        %v2891 = vpop.f32.mrb[0].mxu0
        %v2892 = vpop.f32.mrb[0].mxu0
        %v2893 = vadd.f32 0.0, %v2892
        %v2894 = vpop.f32.mrb[0].mxu0
        %2895 = vmatprep.mubr.bf16.mxu0 0
        %2896 = vmatmul.mubr.bf16.gmra.mrb[0].mxu0 %v2741
        %v2897 = vpop.f32.mrb[0].mxu0
        %v2898 = vadd.f32 0.0, %v2897
        %v2899 = vpop.f32.mrb[0].mxu0
        %v2900 = vpop.f32.mrb[0].mxu0
        %v2901 = vadd.f32 0.0, %v2900
        %v2902 = vpop.f32.mrb[0].mxu0
        %2903 = vdwg.mxu0
        %v2904 = vadd.f32 %v2718, %v2842
        %v2905 = vadd.f32 %v2719, %v2845
        %v2906 = vadd.f32 %v2720, %v2850
        %v2907 = vadd.f32 %v2721, %v2853
        %v2908 = vadd.f32 %v2722, %v2858
        %v2909 = vadd.f32 %v2723, %v2861
        %v2910 = vadd.f32 %v2724, %v2866
        %v2911 = vadd.f32 %v2725, %v2869
        %v2912 = vadd.f32 %v2726, %v2874
        %v2913 = vadd.f32 %v2727, %v2877
        %v2914 = vadd.f32 %v2728, %v2882
        %v2915 = vadd.f32 %v2729, %v2885
        %v2916 = vadd.f32 %v2730, %v2890
        %v2917 = vadd.f32 %v2731, %v2893
        %v2918 = vadd.f32 %v2732, %v2898
        %v2919 = vadd.f32 %v2733, %v2901
        %vm2920 = vcmp.ge.f32.partialorder %v2904, 0.0
        %vm2921 = vcmp.ge.f32.partialorder %v2905, 0.0
        %vm2922 = vcmp.ge.f32.partialorder %v2906, 0.0
        %vm2923 = vcmp.ge.f32.partialorder %v2907, 0.0
        %vm2924 = vcmp.ge.f32.partialorder %v2908, 0.0
        %vm2925 = vcmp.ge.f32.partialorder %v2909, 0.0
        %vm2926 = vcmp.ge.f32.partialorder %v2910, 0.0
        %vm2927 = vcmp.ge.f32.partialorder %v2911, 0.0
        %vm2928 = vcmp.ge.f32.partialorder %v2912, 0.0
        %vm2929 = vcmp.ge.f32.partialorder %v2913, 0.0
        %vm2930 = vcmp.ge.f32.partialorder %v2914, 0.0
        %vm2931 = vcmp.ge.f32.partialorder %v2915, 0.0
        %vm2932 = vcmp.ge.f32.partialorder %v2916, 0.0
        %vm2933 = vcmp.ge.f32.partialorder %v2917, 0.0
        %vm2934 = vcmp.ge.f32.partialorder %v2918, 0.0
        %vm2935 = vcmp.ge.f32.partialorder %v2919, 0.0
        %v2936 = vmul.f32 %v2904, 0.2
        %v2937 = vmul.f32 %v2905, 0.2
        %v2938 = vmul.f32 %v2906, 0.2
        %v2939 = vmul.f32 %v2907, 0.2
        %v2940 = vmul.f32 %v2908, 0.2
        %v2941 = vmul.f32 %v2909, 0.2
        %v2942 = vmul.f32 %v2910, 0.2
        %v2943 = vmul.f32 %v2911, 0.2
        %v2944 = vmul.f32 %v2912, 0.2
        %v2945 = vmul.f32 %v2913, 0.2
        %v2946 = vmul.f32 %v2914, 0.2
        %v2947 = vmul.f32 %v2915, 0.2
        %v2948 = vmul.f32 %v2916, 0.2
        %v2949 = vmul.f32 %v2917, 0.2
        %v2950 = vmul.f32 %v2918, 0.2
        %v2951 = vmul.f32 %v2919, 0.2
        %v2952 = vsel %vm2920, %v2904, %v2936
        %v2953 = vsel %vm2921, %v2905, %v2937
        %v2954 = vsel %vm2922, %v2906, %v2938
        %v2955 = vsel %vm2923, %v2907, %v2939
        %v2956 = vsel %vm2924, %v2908, %v2940
        %v2957 = vsel %vm2925, %v2909, %v2941
        %v2958 = vsel %vm2926, %v2910, %v2942
        %v2959 = vsel %vm2927, %v2911, %v2943
        %v2960 = vsel %vm2928, %v2912, %v2944
        %v2961 = vsel %vm2929, %v2913, %v2945
        %v2962 = vsel %vm2930, %v2914, %v2946
        %v2963 = vsel %vm2931, %v2915, %v2947
        %v2964 = vsel %vm2932, %v2916, %v2948
        %v2965 = vsel %vm2933, %v2917, %v2949
        %v2966 = vsel %vm2934, %v2918, %v2950
        %v2967 = vsel %vm2935, %v2919, %v2951
        %v2968 = vpack.c.bf16 %v2953, %v2952
        %v2969 = vpack.c.bf16 %v2955, %v2954
        %v2970 = vpack.c.bf16 %v2957, %v2956
        %v2971 = vpack.c.bf16 %v2959, %v2958
        %v2972 = vpack.c.bf16 %v2961, %v2960
        %v2973 = vpack.c.bf16 %v2963, %v2962
        %v2974 = vpack.c.bf16 %v2965, %v2964
        %v2975 = vpack.c.bf16 %v2967, %v2966
        %2976 = vst [vmem:[%s483] sm:$0xff] %v2968
        %2977 = vst [vmem:[#allocation3 + $0x8] sm:$0xff] %v2969
        %2978 = vst [vmem:[%s483 + $0x8] sm:$0xff] %v2970
        %2979 = vst [vmem:[#allocation3 + $0x10] sm:$0xff] %v2971
        %2980 = vst [vmem:[%s483 + $0x10] sm:$0xff] %v2972
        %2981 = vst [vmem:[#allocation3 + $0x18] sm:$0xff] %v2973
        %2982 = vst [vmem:[%s483 + $0x18] sm:$0xff] %v2974
        %2983 = vst [vmem:[#allocation3 + $0x20] sm:$0xff] %v2975
        %v2984 = vld [vmem:[%s8] sm:$0x1]
        %v2986 = vlaneseq
        %v2987 = vshrl.u32 %v2986, 7
        %v2988 = vsub.s32 0, %v2987
        %v2989 = vrot.slane %v2984, %v2988
        %v2991 = vld [vmem:[#allocation3] sm:$0xff]
        %v2992 = vld [vmem:[#allocation3 + $0x8] sm:$0xff]
        %v2993 = vld [vmem:[#allocation3 + $0x10] sm:$0xff]
        %v2994 = vld [vmem:[#allocation3 + $0x18] sm:$0xff]
        %v2995 = vld [vmem:[#allocation12] sm:$0xf]
        %v2996 = vld [vmem:[#allocation12 + $0x4] sm:$0xf]
        %v2997 = vld [vmem:[#allocation12 + $0x8] sm:$0xf]
        %v2998 = vld [vmem:[#allocation12 + $0xc] sm:$0xf]
        %v2999 = vld [vmem:[#allocation12 + $0x10] sm:$0xf]
        %v3000 = vld [vmem:[#allocation12 + $0x14] sm:$0xf]
        %v3001 = vld [vmem:[#allocation12 + $0x18] sm:$0xf]
        %v3002 = vld [vmem:[#allocation12 + $0x1c] sm:$0xf]
        %v3003 = vld [vmem:[#allocation12 + $0x20] sm:$0xf]
        %v3004 = vld [vmem:[#allocation12 + $0x24] sm:$0xf]
        %v3005 = vld [vmem:[#allocation12 + $0x28] sm:$0xf]
        %v3006 = vld [vmem:[#allocation12 + $0x2c] sm:$0xf]
        %v3007 = vld [vmem:[#allocation12 + $0x30] sm:$0xf]
        %v3008 = vld [vmem:[#allocation12 + $0x34] sm:$0xf]
        %v3009 = vld [vmem:[#allocation12 + $0x38] sm:$0xf]
        %v3010 = vld [vmem:[#allocation12 + $0x3c] sm:$0xf]
        %v3027 = vunpack.c.l.b16 %v2995
        %v3028 = vunpack.c.l.b16 %v2996
        %v3029 = vunpack.c.l.b16 %v2997
        %v3030 = vunpack.c.l.b16 %v2998
        %v3031 = vunpack.c.l.b16 %v2999
        %v3032 = vunpack.c.l.b16 %v3000
        %v3033 = vunpack.c.l.b16 %v3001
        %v3034 = vunpack.c.l.b16 %v3002
        %v3035 = vunpack.c.l.b16 %v3003
        %v3036 = vunpack.c.l.b16 %v3004
        %v3037 = vunpack.c.l.b16 %v3005
        %v3038 = vunpack.c.l.b16 %v3006
        %v3039 = vunpack.c.l.b16 %v3007
        %v3040 = vunpack.c.l.b16 %v3008
        %v3041 = vunpack.c.l.b16 %v3009
        %v3042 = vunpack.c.l.b16 %v3010
        %v3043 = vpack.c.b16 %v3028, %v3027
        %v3044 = vpack.c.b16 %v3030, %v3029
        %v3045 = vpack.c.b16 %v3032, %v3031
        %v3046 = vpack.c.b16 %v3034, %v3033
        %v3047 = vpack.c.b16 %v3036, %v3035
        %v3048 = vpack.c.b16 %v3038, %v3037
        %v3049 = vpack.c.b16 %v3040, %v3039
        %v3050 = vpack.c.b16 %v3042, %v3041
        %3059 = vmatprep.subr.bf16.mxu0 0
        %3060 = vmatpush1.bf16.msra.mxu0 %v3043
        %3061 = vmatprep.subr.bf16.mxu0 0
        %3062 = vmatpush1.bf16.msra.mxu0 %v3044
        %3063 = vmatprep.subr.bf16.mxu0 0
        %3064 = vmatpush1.bf16.msra.mxu0 %v3045
        %3065 = vmatprep.subr.bf16.mxu0 0
        %3066 = vmatpush1.bf16.msra.mxu0 %v3046
        %3067 = vmatprep.subr.bf16.mxu0 0
        %3068 = vmatpush1.bf16.msra.mxu0 %v3047
        %3069 = vmatprep.subr.bf16.mxu0 0
        %3070 = vmatpush1.bf16.msra.mxu0 %v3048
        %3071 = vmatprep.subr.bf16.mxu0 0
        %3072 = vmatpush1.bf16.msra.mxu0 %v3049
        %3073 = vmatprep.subr.bf16.mxu0 0
        %3074 = vmatpush1.bf16.msra.mxu0 %v3050
        %3075 = vmatprep.subr.bf16.mxu0 0
        %3076 = vmatpush1.bf16.msra.mxu0 0
        %3077 = vmatprep.subr.bf16.mxu0 0
        %3078 = vmatpush1.bf16.msra.mxu0 0
        %3079 = vmatprep.subr.bf16.mxu0 0
        %3080 = vmatpush1.bf16.msra.mxu0 0
        %3081 = vmatprep.subr.bf16.mxu0 0
        %3082 = vmatpush1.bf16.msra.mxu0 0
        %3083 = vmatprep.subr.bf16.mxu0 0
        %3084 = vmatpush1.bf16.msra.mxu0 0
        %3085 = vmatprep.subr.bf16.mxu0 0
        %3086 = vmatpush1.bf16.msra.mxu0 0
        %3087 = vmatprep.subr.bf16.mxu0 0
        %3088 = vmatpush1.bf16.msra.mxu0 0
        %3089 = vmatprep.subr.bf16.mxu0 0
        %3090 = vmatpush1.bf16.msra.mxu0 0
        %3091 = vmatprep.mubr.bf16.mxu0 0
        %3092 = vmatmul.mubr.bf16.gmra.mrb[0].mxu0 %v2991
        %v3093 = vpop.f32.mrb[0].mxu0
        %v3094 = vadd.f32 0.0, %v3093
        %v3095 = vpop.f32.mrb[0].mxu0
        %v3096 = vpop.f32.mrb[0].mxu0
        %v3097 = vadd.f32 0.0, %v3096
        %v3098 = vpop.f32.mrb[0].mxu0
        %3099 = vmatprep.mubr.bf16.mxu0 0
        %3100 = vmatmul.mubr.bf16.gmra.mrb[0].mxu0 %v2992
        %v3101 = vpop.f32.mrb[0].mxu0
        %v3102 = vadd.f32 0.0, %v3101
        %v3103 = vpop.f32.mrb[0].mxu0
        %v3104 = vpop.f32.mrb[0].mxu0
        %v3105 = vadd.f32 0.0, %v3104
        %v3106 = vpop.f32.mrb[0].mxu0
        %3107 = vmatprep.mubr.bf16.mxu0 0
        %3108 = vmatmul.mubr.bf16.gmra.mrb[0].mxu0 %v2993
        %v3109 = vpop.f32.mrb[0].mxu0
        %v3110 = vadd.f32 0.0, %v3109
        %v3111 = vpop.f32.mrb[0].mxu0
        %v3112 = vpop.f32.mrb[0].mxu0
        %v3113 = vadd.f32 0.0, %v3112
        %v3114 = vpop.f32.mrb[0].mxu0
        %3115 = vmatprep.mubr.bf16.mxu0 0
        %3116 = vmatmul.mubr.bf16.gmra.mrb[0].mxu0 %v2994
        %v3117 = vpop.f32.mrb[0].mxu0
        %v3118 = vadd.f32 0.0, %v3117
        %v3119 = vpop.f32.mrb[0].mxu0
        %v3120 = vpop.f32.mrb[0].mxu0
        %v3121 = vadd.f32 0.0, %v3120
        %v3122 = vpop.f32.mrb[0].mxu0
        %3123 = vdwg.mxu0
        %v3124 = vadd.f32 %v2989, %v3094
        %v3125 = vadd.f32 %v2989, %v3097
        %v3126 = vadd.f32 %v2989, %v3102
        %v3127 = vadd.f32 %v2989, %v3105
        %v3128 = vadd.f32 %v2989, %v3110
        %v3129 = vadd.f32 %v2989, %v3113
        %v3130 = vadd.f32 %v2989, %v3118
        %v3131 = vadd.f32 %v2989, %v3121
        %v3132 = vld [vmem:[%s483] sm:$0xff]
        %v3133 = vld [vmem:[%s483 + $0x8] sm:$0xff]
        %v3134 = vld [vmem:[%s483 + $0x10] sm:$0xff]
        %v3135 = vld [vmem:[%s483 + $0x18] sm:$0xff]
        %s3136 = scalar_lea.vmem [#allocation12], 64
        %v3137 = vld [vmem:[%s3136] sm:$0xf]
        %v3138 = vld [vmem:[%s3136 + $0x4] sm:$0xf]
        %v3139 = vld [vmem:[%s3136 + $0x8] sm:$0xf]
        %v3140 = vld [vmem:[%s3136 + $0xc] sm:$0xf]
        %v3141 = vld [vmem:[%s3136 + $0x10] sm:$0xf]
        %v3142 = vld [vmem:[%s3136 + $0x14] sm:$0xf]
        %v3143 = vld [vmem:[%s3136 + $0x18] sm:$0xf]
        %v3144 = vld [vmem:[%s3136 + $0x1c] sm:$0xf]
        %v3145 = vld [vmem:[%s3136 + $0x20] sm:$0xf]
        %v3146 = vld [vmem:[%s3136 + $0x24] sm:$0xf]
        %v3147 = vld [vmem:[%s3136 + $0x28] sm:$0xf]
        %v3148 = vld [vmem:[%s3136 + $0x2c] sm:$0xf]
        %v3149 = vld [vmem:[%s3136 + $0x30] sm:$0xf]
        %v3150 = vld [vmem:[%s3136 + $0x34] sm:$0xf]
        %v3151 = vld [vmem:[%s3136 + $0x38] sm:$0xf]
        %v3152 = vld [vmem:[%s3136 + $0x3c] sm:$0xf]
        %v3169 = vunpack.c.l.b16 %v3137
        %v3170 = vunpack.c.l.b16 %v3138
        %v3171 = vunpack.c.l.b16 %v3139
        %v3172 = vunpack.c.l.b16 %v3140
        %v3173 = vunpack.c.l.b16 %v3141
        %v3174 = vunpack.c.l.b16 %v3142
        %v3175 = vunpack.c.l.b16 %v3143
        %v3176 = vunpack.c.l.b16 %v3144
        %v3177 = vunpack.c.l.b16 %v3145
        %v3178 = vunpack.c.l.b16 %v3146
        %v3179 = vunpack.c.l.b16 %v3147
        %v3180 = vunpack.c.l.b16 %v3148
        %v3181 = vunpack.c.l.b16 %v3149
        %v3182 = vunpack.c.l.b16 %v3150
        %v3183 = vunpack.c.l.b16 %v3151
        %v3184 = vunpack.c.l.b16 %v3152
        %v3185 = vpack.c.b16 %v3170, %v3169
        %v3186 = vpack.c.b16 %v3172, %v3171
        %v3187 = vpack.c.b16 %v3174, %v3173
        %v3188 = vpack.c.b16 %v3176, %v3175
        %v3189 = vpack.c.b16 %v3178, %v3177
        %v3190 = vpack.c.b16 %v3180, %v3179
        %v3191 = vpack.c.b16 %v3182, %v3181
        %v3192 = vpack.c.b16 %v3184, %v3183
        %3201 = vmatprep.subr.bf16.mxu0 0
        %3202 = vmatpush1.bf16.msra.mxu0 %v3185
        %3203 = vmatprep.subr.bf16.mxu0 0
        %3204 = vmatpush1.bf16.msra.mxu0 %v3186
        %3205 = vmatprep.subr.bf16.mxu0 0
        %3206 = vmatpush1.bf16.msra.mxu0 %v3187
        %3207 = vmatprep.subr.bf16.mxu0 0
        %3208 = vmatpush1.bf16.msra.mxu0 %v3188
        %3209 = vmatprep.subr.bf16.mxu0 0
        %3210 = vmatpush1.bf16.msra.mxu0 %v3189
        %3211 = vmatprep.subr.bf16.mxu0 0
        %3212 = vmatpush1.bf16.msra.mxu0 %v3190
        %3213 = vmatprep.subr.bf16.mxu0 0
        %3214 = vmatpush1.bf16.msra.mxu0 %v3191
        %3215 = vmatprep.subr.bf16.mxu0 0
        %3216 = vmatpush1.bf16.msra.mxu0 %v3192
        %3217 = vmatprep.subr.bf16.mxu0 0
        %3218 = vmatpush1.bf16.msra.mxu0 0
        %3219 = vmatprep.subr.bf16.mxu0 0
        %3220 = vmatpush1.bf16.msra.mxu0 0
        %3221 = vmatprep.subr.bf16.mxu0 0
        %3222 = vmatpush1.bf16.msra.mxu0 0
        %3223 = vmatprep.subr.bf16.mxu0 0
        %3224 = vmatpush1.bf16.msra.mxu0 0
        %3225 = vmatprep.subr.bf16.mxu0 0
        %3226 = vmatpush1.bf16.msra.mxu0 0
        %3227 = vmatprep.subr.bf16.mxu0 0
        %3228 = vmatpush1.bf16.msra.mxu0 0
        %3229 = vmatprep.subr.bf16.mxu0 0
        %3230 = vmatpush1.bf16.msra.mxu0 0
        %3231 = vmatprep.subr.bf16.mxu0 0
        %3232 = vmatpush1.bf16.msra.mxu0 0
        %3233 = vmatprep.mubr.bf16.mxu0 0
        %3234 = vmatmul.mubr.bf16.gmra.mrb[0].mxu0 %v3132
        %v3235 = vpop.f32.mrb[0].mxu0
        %v3236 = vadd.f32 0.0, %v3235
        %v3237 = vpop.f32.mrb[0].mxu0
        %v3238 = vpop.f32.mrb[0].mxu0
        %v3239 = vadd.f32 0.0, %v3238
        %v3240 = vpop.f32.mrb[0].mxu0
        %3241 = vmatprep.mubr.bf16.mxu0 0
        %3242 = vmatmul.mubr.bf16.gmra.mrb[0].mxu0 %v3133
        %v3243 = vpop.f32.mrb[0].mxu0
        %v3244 = vadd.f32 0.0, %v3243
        %v3245 = vpop.f32.mrb[0].mxu0
        %v3246 = vpop.f32.mrb[0].mxu0
        %v3247 = vadd.f32 0.0, %v3246
        %v3248 = vpop.f32.mrb[0].mxu0
        %3249 = vmatprep.mubr.bf16.mxu0 0
        %3250 = vmatmul.mubr.bf16.gmra.mrb[0].mxu0 %v3134
        %v3251 = vpop.f32.mrb[0].mxu0
        %v3252 = vadd.f32 0.0, %v3251
        %v3253 = vpop.f32.mrb[0].mxu0
        %v3254 = vpop.f32.mrb[0].mxu0
        %v3255 = vadd.f32 0.0, %v3254
        %v3256 = vpop.f32.mrb[0].mxu0
        %3257 = vmatprep.mubr.bf16.mxu0 0
        %3258 = vmatmul.mubr.bf16.gmra.mrb[0].mxu0 %v3135
        %v3259 = vpop.f32.mrb[0].mxu0
        %v3260 = vadd.f32 0.0, %v3259
        %v3261 = vpop.f32.mrb[0].mxu0
        %v3262 = vpop.f32.mrb[0].mxu0
        %v3263 = vadd.f32 0.0, %v3262
        %v3264 = vpop.f32.mrb[0].mxu0
        %3265 = vdwg.mxu0
        %v3266 = vadd.f32 %v3124, %v3236
        %v3267 = vadd.f32 %v3125, %v3239
        %v3268 = vadd.f32 %v3126, %v3244
        %v3269 = vadd.f32 %v3127, %v3247
        %v3270 = vadd.f32 %v3128, %v3252
        %v3271 = vadd.f32 %v3129, %v3255
        %v3272 = vadd.f32 %v3130, %v3260
        %v3273 = vadd.f32 %v3131, %v3263
        %v3274 = vld [vmem:[#allocation3 + $0x8] sm:$0xff]
        %v3275 = vld [vmem:[#allocation3 + $0x10] sm:$0xff]
        %v3276 = vld [vmem:[#allocation3 + $0x18] sm:$0xff]
        %v3277 = vld [vmem:[#allocation3 + $0x20] sm:$0xff]
        %s3278 = scalar_lea.vmem [#allocation12], 128
        %v3279 = vld [vmem:[%s3278] sm:$0xf]
        %v3280 = vld [vmem:[%s3278 + $0x4] sm:$0xf]
        %v3281 = vld [vmem:[%s3278 + $0x8] sm:$0xf]
        %v3282 = vld [vmem:[%s3278 + $0xc] sm:$0xf]
        %v3283 = vld [vmem:[%s3278 + $0x10] sm:$0xf]
        %v3284 = vld [vmem:[%s3278 + $0x14] sm:$0xf]
        %v3285 = vld [vmem:[%s3278 + $0x18] sm:$0xf]
        %v3286 = vld [vmem:[%s3278 + $0x1c] sm:$0xf]
        %v3287 = vld [vmem:[%s3278 + $0x20] sm:$0xf]
        %v3288 = vld [vmem:[%s3278 + $0x24] sm:$0xf]
        %v3289 = vld [vmem:[%s3278 + $0x28] sm:$0xf]
        %v3290 = vld [vmem:[%s3278 + $0x2c] sm:$0xf]
        %v3291 = vld [vmem:[%s3278 + $0x30] sm:$0xf]
        %v3292 = vld [vmem:[%s3278 + $0x34] sm:$0xf]
        %v3293 = vld [vmem:[%s3278 + $0x38] sm:$0xf]
        %v3294 = vld [vmem:[%s3278 + $0x3c] sm:$0xf]
        %v3311 = vunpack.c.l.b16 %v3279
        %v3312 = vunpack.c.l.b16 %v3280
        %v3313 = vunpack.c.l.b16 %v3281
        %v3314 = vunpack.c.l.b16 %v3282
        %v3315 = vunpack.c.l.b16 %v3283
        %v3316 = vunpack.c.l.b16 %v3284
        %v3317 = vunpack.c.l.b16 %v3285
        %v3318 = vunpack.c.l.b16 %v3286
        %v3319 = vunpack.c.l.b16 %v3287
        %v3320 = vunpack.c.l.b16 %v3288
        %v3321 = vunpack.c.l.b16 %v3289
        %v3322 = vunpack.c.l.b16 %v3290
        %v3323 = vunpack.c.l.b16 %v3291
        %v3324 = vunpack.c.l.b16 %v3292
        %v3325 = vunpack.c.l.b16 %v3293
        %v3326 = vunpack.c.l.b16 %v3294
        %v3327 = vpack.c.b16 %v3312, %v3311
        %v3328 = vpack.c.b16 %v3314, %v3313
        %v3329 = vpack.c.b16 %v3316, %v3315
        %v3330 = vpack.c.b16 %v3318, %v3317
        %v3331 = vpack.c.b16 %v3320, %v3319
        %v3332 = vpack.c.b16 %v3322, %v3321
        %v3333 = vpack.c.b16 %v3324, %v3323
        %v3334 = vpack.c.b16 %v3326, %v3325
        %3343 = vmatprep.subr.bf16.mxu0 0
        %3344 = vmatpush1.bf16.msra.mxu0 %v3327
        %3345 = vmatprep.subr.bf16.mxu0 0
        %3346 = vmatpush1.bf16.msra.mxu0 %v3328
        %3347 = vmatprep.subr.bf16.mxu0 0
        %3348 = vmatpush1.bf16.msra.mxu0 %v3329
        %3349 = vmatprep.subr.bf16.mxu0 0
        %3350 = vmatpush1.bf16.msra.mxu0 %v3330
        %3351 = vmatprep.subr.bf16.mxu0 0
        %3352 = vmatpush1.bf16.msra.mxu0 %v3331
        %3353 = vmatprep.subr.bf16.mxu0 0
        %3354 = vmatpush1.bf16.msra.mxu0 %v3332
        %3355 = vmatprep.subr.bf16.mxu0 0
        %3356 = vmatpush1.bf16.msra.mxu0 %v3333
        %3357 = vmatprep.subr.bf16.mxu0 0
        %3358 = vmatpush1.bf16.msra.mxu0 %v3334
        %3359 = vmatprep.subr.bf16.mxu0 0
        %3360 = vmatpush1.bf16.msra.mxu0 0
        %3361 = vmatprep.subr.bf16.mxu0 0
        %3362 = vmatpush1.bf16.msra.mxu0 0
        %3363 = vmatprep.subr.bf16.mxu0 0
        %3364 = vmatpush1.bf16.msra.mxu0 0
        %3365 = vmatprep.subr.bf16.mxu0 0
        %3366 = vmatpush1.bf16.msra.mxu0 0
        %3367 = vmatprep.subr.bf16.mxu0 0
        %3368 = vmatpush1.bf16.msra.mxu0 0
        %3369 = vmatprep.subr.bf16.mxu0 0
        %3370 = vmatpush1.bf16.msra.mxu0 0
        %3371 = vmatprep.subr.bf16.mxu0 0
        %3372 = vmatpush1.bf16.msra.mxu0 0
        %3373 = vmatprep.subr.bf16.mxu0 0
        %3374 = vmatpush1.bf16.msra.mxu0 0
        %3375 = vmatprep.mubr.bf16.mxu0 0
        %3376 = vmatmul.mubr.bf16.gmra.mrb[0].mxu0 %v3274
        %v3377 = vpop.f32.mrb[0].mxu0
        %v3378 = vadd.f32 0.0, %v3377
        %v3379 = vpop.f32.mrb[0].mxu0
        %v3380 = vpop.f32.mrb[0].mxu0
        %v3381 = vadd.f32 0.0, %v3380
        %v3382 = vpop.f32.mrb[0].mxu0
        %3383 = vmatprep.mubr.bf16.mxu0 0
        %3384 = vmatmul.mubr.bf16.gmra.mrb[0].mxu0 %v3275
        %v3385 = vpop.f32.mrb[0].mxu0
        %v3386 = vadd.f32 0.0, %v3385
        %v3387 = vpop.f32.mrb[0].mxu0
        %v3388 = vpop.f32.mrb[0].mxu0
        %v3389 = vadd.f32 0.0, %v3388
        %v3390 = vpop.f32.mrb[0].mxu0
        %3391 = vmatprep.mubr.bf16.mxu0 0
        %3392 = vmatmul.mubr.bf16.gmra.mrb[0].mxu0 %v3276
        %v3393 = vpop.f32.mrb[0].mxu0
        %v3394 = vadd.f32 0.0, %v3393
        %v3395 = vpop.f32.mrb[0].mxu0
        %v3396 = vpop.f32.mrb[0].mxu0
        %v3397 = vadd.f32 0.0, %v3396
        %v3398 = vpop.f32.mrb[0].mxu0
        %3399 = vmatprep.mubr.bf16.mxu0 0
        %3400 = vmatmul.mubr.bf16.gmra.mrb[0].mxu0 %v3277
        %v3401 = vpop.f32.mrb[0].mxu0
        %v3402 = vadd.f32 0.0, %v3401
        %v3403 = vpop.f32.mrb[0].mxu0
        %v3404 = vpop.f32.mrb[0].mxu0
        %v3405 = vadd.f32 0.0, %v3404
        %v3406 = vpop.f32.mrb[0].mxu0
        %3407 = vdwg.mxu0
        %v3408 = vadd.f32 %v3266, %v3378
        %v3409 = vadd.f32 %v3267, %v3381
        %v3410 = vadd.f32 %v3268, %v3386
        %v3411 = vadd.f32 %v3269, %v3389
        %v3412 = vadd.f32 %v3270, %v3394
        %v3413 = vadd.f32 %v3271, %v3397
        %v3414 = vadd.f32 %v3272, %v3402
        %v3415 = vadd.f32 %v3273, %v3405
        %v3416 = vld [vmem:[%s483 + $0x8] sm:$0xff]
        %v3417 = vld [vmem:[%s483 + $0x10] sm:$0xff]
        %v3418 = vld [vmem:[%s483 + $0x18] sm:$0xff]
        %v3419 = vld [vmem:[%s483 + $0x20] sm:$0xff]
        %s3420 = scalar_lea.vmem [#allocation12], 192
        %v3421 = vld [vmem:[%s3420] sm:$0xf]
        %v3422 = vld [vmem:[%s3420 + $0x4] sm:$0xf]
        %v3423 = vld [vmem:[%s3420 + $0x8] sm:$0xf]
        %v3424 = vld [vmem:[%s3420 + $0xc] sm:$0xf]
        %v3425 = vld [vmem:[%s3420 + $0x10] sm:$0xf]
        %v3426 = vld [vmem:[%s3420 + $0x14] sm:$0xf]
        %v3427 = vld [vmem:[%s3420 + $0x18] sm:$0xf]
        %v3428 = vld [vmem:[%s3420 + $0x1c] sm:$0xf]
        %v3429 = vld [vmem:[%s3420 + $0x20] sm:$0xf]
        %v3430 = vld [vmem:[%s3420 + $0x24] sm:$0xf]
        %v3431 = vld [vmem:[%s3420 + $0x28] sm:$0xf]
        %v3432 = vld [vmem:[%s3420 + $0x2c] sm:$0xf]
        %v3433 = vld [vmem:[%s3420 + $0x30] sm:$0xf]
        %v3434 = vld [vmem:[%s3420 + $0x34] sm:$0xf]
        %v3435 = vld [vmem:[%s3420 + $0x38] sm:$0xf]
        %v3436 = vld [vmem:[%s3420 + $0x3c] sm:$0xf]
        %v3453 = vunpack.c.l.b16 %v3421
        %v3454 = vunpack.c.l.b16 %v3422
        %v3455 = vunpack.c.l.b16 %v3423
        %v3456 = vunpack.c.l.b16 %v3424
        %v3457 = vunpack.c.l.b16 %v3425
        %v3458 = vunpack.c.l.b16 %v3426
        %v3459 = vunpack.c.l.b16 %v3427
        %v3460 = vunpack.c.l.b16 %v3428
        %v3461 = vunpack.c.l.b16 %v3429
        %v3462 = vunpack.c.l.b16 %v3430
        %v3463 = vunpack.c.l.b16 %v3431
        %v3464 = vunpack.c.l.b16 %v3432
        %v3465 = vunpack.c.l.b16 %v3433
        %v3466 = vunpack.c.l.b16 %v3434
        %v3467 = vunpack.c.l.b16 %v3435
        %v3468 = vunpack.c.l.b16 %v3436
        %v3469 = vpack.c.b16 %v3454, %v3453
        %v3470 = vpack.c.b16 %v3456, %v3455
        %v3471 = vpack.c.b16 %v3458, %v3457
        %v3472 = vpack.c.b16 %v3460, %v3459
        %v3473 = vpack.c.b16 %v3462, %v3461
        %v3474 = vpack.c.b16 %v3464, %v3463
        %v3475 = vpack.c.b16 %v3466, %v3465
        %v3476 = vpack.c.b16 %v3468, %v3467
        %3485 = vmatprep.subr.bf16.mxu0 0
        %3486 = vmatpush1.bf16.msra.mxu0 %v3469
        %3487 = vmatprep.subr.bf16.mxu0 0
        %3488 = vmatpush1.bf16.msra.mxu0 %v3470
        %3489 = vmatprep.subr.bf16.mxu0 0
        %3490 = vmatpush1.bf16.msra.mxu0 %v3471
        %3491 = vmatprep.subr.bf16.mxu0 0
        %3492 = vmatpush1.bf16.msra.mxu0 %v3472
        %3493 = vmatprep.subr.bf16.mxu0 0
        %3494 = vmatpush1.bf16.msra.mxu0 %v3473
        %3495 = vmatprep.subr.bf16.mxu0 0
        %3496 = vmatpush1.bf16.msra.mxu0 %v3474
        %3497 = vmatprep.subr.bf16.mxu0 0
        %3498 = vmatpush1.bf16.msra.mxu0 %v3475
        %3499 = vmatprep.subr.bf16.mxu0 0
        %3500 = vmatpush1.bf16.msra.mxu0 %v3476
        %3501 = vmatprep.subr.bf16.mxu0 0
        %3502 = vmatpush1.bf16.msra.mxu0 0
        %3503 = vmatprep.subr.bf16.mxu0 0
        %3504 = vmatpush1.bf16.msra.mxu0 0
        %3505 = vmatprep.subr.bf16.mxu0 0
        %3506 = vmatpush1.bf16.msra.mxu0 0
        %3507 = vmatprep.subr.bf16.mxu0 0
        %3508 = vmatpush1.bf16.msra.mxu0 0
        %3509 = vmatprep.subr.bf16.mxu0 0
        %3510 = vmatpush1.bf16.msra.mxu0 0
        %3511 = vmatprep.subr.bf16.mxu0 0
        %3512 = vmatpush1.bf16.msra.mxu0 0
        %3513 = vmatprep.subr.bf16.mxu0 0
        %3514 = vmatpush1.bf16.msra.mxu0 0
        %3515 = vmatprep.subr.bf16.mxu0 0
        %3516 = vmatpush1.bf16.msra.mxu0 0
        %3517 = vmatprep.mubr.bf16.mxu0 0
        %3518 = vmatmul.mubr.bf16.gmra.mrb[0].mxu0 %v3416
        %v3519 = vpop.f32.mrb[0].mxu0
        %v3520 = vadd.f32 0.0, %v3519
        %v3521 = vpop.f32.mrb[0].mxu0
        %v3522 = vpop.f32.mrb[0].mxu0
        %v3523 = vadd.f32 0.0, %v3522
        %v3524 = vpop.f32.mrb[0].mxu0
        %3525 = vmatprep.mubr.bf16.mxu0 0
        %3526 = vmatmul.mubr.bf16.gmra.mrb[0].mxu0 %v3417
        %v3527 = vpop.f32.mrb[0].mxu0
        %v3528 = vadd.f32 0.0, %v3527
        %v3529 = vpop.f32.mrb[0].mxu0
        %v3530 = vpop.f32.mrb[0].mxu0
        %v3531 = vadd.f32 0.0, %v3530
        %v3532 = vpop.f32.mrb[0].mxu0
        %3533 = vmatprep.mubr.bf16.mxu0 0
        %3534 = vmatmul.mubr.bf16.gmra.mrb[0].mxu0 %v3418
        %v3535 = vpop.f32.mrb[0].mxu0
        %v3536 = vadd.f32 0.0, %v3535
        %v3537 = vpop.f32.mrb[0].mxu0
        %v3538 = vpop.f32.mrb[0].mxu0
        %v3539 = vadd.f32 0.0, %v3538
        %v3540 = vpop.f32.mrb[0].mxu0
        %3541 = vmatprep.mubr.bf16.mxu0 0
        %3542 = vmatmul.mubr.bf16.gmra.mrb[0].mxu0 %v3419
        %v3543 = vpop.f32.mrb[0].mxu0
        %v3544 = vadd.f32 0.0, %v3543
        %v3545 = vpop.f32.mrb[0].mxu0
        %v3546 = vpop.f32.mrb[0].mxu0
        %v3547 = vadd.f32 0.0, %v3546
        %v3548 = vpop.f32.mrb[0].mxu0
        %3549 = vdwg.mxu0
        %v3550 = vadd.f32 %v3408, %v3520
        %v3551 = vadd.f32 %v3409, %v3523
        %v3552 = vadd.f32 %v3410, %v3528
        %v3553 = vadd.f32 %v3411, %v3531
        %v3554 = vadd.f32 %v3412, %v3536
        %v3555 = vadd.f32 %v3413, %v3539
        %v3556 = vadd.f32 %v3414, %v3544
        %v3557 = vadd.f32 %v3415, %v3547
        %vm3558 = vcmp.ge.f32.partialorder %v3550, 0.0
        %vm3559 = vcmp.ge.f32.partialorder %v3551, 0.0
        %vm3560 = vcmp.ge.f32.partialorder %v3552, 0.0
        %vm3561 = vcmp.ge.f32.partialorder %v3553, 0.0
        %vm3562 = vcmp.ge.f32.partialorder %v3554, 0.0
        %vm3563 = vcmp.ge.f32.partialorder %v3555, 0.0
        %vm3564 = vcmp.ge.f32.partialorder %v3556, 0.0
        %vm3565 = vcmp.ge.f32.partialorder %v3557, 0.0
        %v3566 = vmul.f32 %v3550, 0.2
        %v3567 = vmul.f32 %v3551, 0.2
        %v3568 = vmul.f32 %v3552, 0.2
        %v3569 = vmul.f32 %v3553, 0.2
        %v3570 = vmul.f32 %v3554, 0.2
        %v3571 = vmul.f32 %v3555, 0.2
        %v3572 = vmul.f32 %v3556, 0.2
        %v3573 = vmul.f32 %v3557, 0.2
        %v3574 = vsel %vm3558, %v3550, %v3566
        %v3575 = vsel %vm3559, %v3551, %v3567
        %v3576 = vsel %vm3560, %v3552, %v3568
        %v3577 = vsel %vm3561, %v3553, %v3569
        %v3578 = vsel %vm3562, %v3554, %v3570
        %v3579 = vsel %vm3563, %v3555, %v3571
        %v3580 = vsel %vm3564, %v3556, %v3572
        %v3581 = vsel %vm3565, %v3557, %v3573
        %v3582 = vpack.c.bf16 %v3575, %v3574
        %v3583 = vpack.c.bf16 %v3577, %v3576
        %v3584 = vpack.c.bf16 %v3579, %v3578
        %v3585 = vpack.c.bf16 %v3581, %v3580
        %3586 = vst [vmem:[%s486] sm:$0xff] %v3582
        %3587 = vst [vmem:[#allocation4 + $0x8] sm:$0xff] %v3583
        %3588 = vst [vmem:[%s486 + $0x8] sm:$0xff] %v3584
        %3589 = vst [vmem:[#allocation4 + $0x10] sm:$0xff] %v3585
        %v3590 = vld [vmem:[%s9] sm:$0x1]
        %v3592 = vlaneseq
        %v3593 = vshrl.u32 %v3592, 7
        %v3594 = vsub.s32 0, %v3593
        %v3595 = vrot.slane %v3590, %v3594
        %v3597 = vld [vmem:[#allocation4] sm:$0xff]
        %v3598 = vld [vmem:[#allocation4 + $0x8] sm:$0xff]
        %v3599 = vld [vmem:[#allocation14] sm:$0xf]
        %v3600 = vld [vmem:[#allocation14 + $0x4] sm:$0xf]
        %v3601 = vld [vmem:[#allocation14 + $0x8] sm:$0xf]
        %v3602 = vld [vmem:[#allocation14 + $0xc] sm:$0xf]
        %v3603 = vld [vmem:[#allocation14 + $0x10] sm:$0xf]
        %v3604 = vld [vmem:[#allocation14 + $0x14] sm:$0xf]
        %v3605 = vld [vmem:[#allocation14 + $0x18] sm:$0xf]
        %v3606 = vld [vmem:[#allocation14 + $0x1c] sm:$0xf]
        %v3607 = vld [vmem:[#allocation14 + $0x20] sm:$0xf]
        %v3608 = vld [vmem:[#allocation14 + $0x24] sm:$0xf]
        %v3609 = vld [vmem:[#allocation14 + $0x28] sm:$0xf]
        %v3610 = vld [vmem:[#allocation14 + $0x2c] sm:$0xf]
        %v3611 = vld [vmem:[#allocation14 + $0x30] sm:$0xf]
        %v3612 = vld [vmem:[#allocation14 + $0x34] sm:$0xf]
        %v3613 = vld [vmem:[#allocation14 + $0x38] sm:$0xf]
        %v3614 = vld [vmem:[#allocation14 + $0x3c] sm:$0xf]
        %v3631 = vunpack.c.l.b16 %v3599
        %v3632 = vunpack.c.l.b16 %v3600
        %v3633 = vunpack.c.l.b16 %v3601
        %v3634 = vunpack.c.l.b16 %v3602
        %v3635 = vunpack.c.l.b16 %v3603
        %v3636 = vunpack.c.l.b16 %v3604
        %v3637 = vunpack.c.l.b16 %v3605
        %v3638 = vunpack.c.l.b16 %v3606
        %v3639 = vunpack.c.l.b16 %v3607
        %v3640 = vunpack.c.l.b16 %v3608
        %v3641 = vunpack.c.l.b16 %v3609
        %v3642 = vunpack.c.l.b16 %v3610
        %v3643 = vunpack.c.l.b16 %v3611
        %v3644 = vunpack.c.l.b16 %v3612
        %v3645 = vunpack.c.l.b16 %v3613
        %v3646 = vunpack.c.l.b16 %v3614
        %v3647 = vpack.c.b16 %v3632, %v3631
        %v3648 = vpack.c.b16 %v3634, %v3633
        %v3649 = vpack.c.b16 %v3636, %v3635
        %v3650 = vpack.c.b16 %v3638, %v3637
        %v3651 = vpack.c.b16 %v3640, %v3639
        %v3652 = vpack.c.b16 %v3642, %v3641
        %v3653 = vpack.c.b16 %v3644, %v3643
        %v3654 = vpack.c.b16 %v3646, %v3645
        %3663 = vmatprep.subr.bf16.mxu0 0
        %3664 = vmatpush1.bf16.msra.mxu0 %v3647
        %3665 = vmatprep.subr.bf16.mxu0 0
        %3666 = vmatpush1.bf16.msra.mxu0 %v3648
        %3667 = vmatprep.subr.bf16.mxu0 0
        %3668 = vmatpush1.bf16.msra.mxu0 %v3649
        %3669 = vmatprep.subr.bf16.mxu0 0
        %3670 = vmatpush1.bf16.msra.mxu0 %v3650
        %3671 = vmatprep.subr.bf16.mxu0 0
        %3672 = vmatpush1.bf16.msra.mxu0 %v3651
        %3673 = vmatprep.subr.bf16.mxu0 0
        %3674 = vmatpush1.bf16.msra.mxu0 %v3652
        %3675 = vmatprep.subr.bf16.mxu0 0
        %3676 = vmatpush1.bf16.msra.mxu0 %v3653
        %3677 = vmatprep.subr.bf16.mxu0 0
        %3678 = vmatpush1.bf16.msra.mxu0 %v3654
        %3679 = vmatprep.subr.bf16.mxu0 0
        %3680 = vmatpush1.bf16.msra.mxu0 0
        %3681 = vmatprep.subr.bf16.mxu0 0
        %3682 = vmatpush1.bf16.msra.mxu0 0
        %3683 = vmatprep.subr.bf16.mxu0 0
        %3684 = vmatpush1.bf16.msra.mxu0 0
        %3685 = vmatprep.subr.bf16.mxu0 0
        %3686 = vmatpush1.bf16.msra.mxu0 0
        %3687 = vmatprep.subr.bf16.mxu0 0
        %3688 = vmatpush1.bf16.msra.mxu0 0
        %3689 = vmatprep.subr.bf16.mxu0 0
        %3690 = vmatpush1.bf16.msra.mxu0 0
        %3691 = vmatprep.subr.bf16.mxu0 0
        %3692 = vmatpush1.bf16.msra.mxu0 0
        %3693 = vmatprep.subr.bf16.mxu0 0
        %3694 = vmatpush1.bf16.msra.mxu0 0
        %3695 = vmatprep.mubr.bf16.mxu0 0
        %3696 = vmatmul.mubr.bf16.gmra.mrb[0].mxu0 %v3597
        %v3697 = vpop.f32.mrb[0].mxu0
        %v3698 = vadd.f32 0.0, %v3697
        %v3699 = vpop.f32.mrb[0].mxu0
        %v3700 = vpop.f32.mrb[0].mxu0
        %v3701 = vadd.f32 0.0, %v3700
        %v3702 = vpop.f32.mrb[0].mxu0
        %3703 = vmatprep.mubr.bf16.mxu0 0
        %3704 = vmatmul.mubr.bf16.gmra.mrb[0].mxu0 %v3598
        %v3705 = vpop.f32.mrb[0].mxu0
        %v3706 = vadd.f32 0.0, %v3705
        %v3707 = vpop.f32.mrb[0].mxu0
        %v3708 = vpop.f32.mrb[0].mxu0
        %v3709 = vadd.f32 0.0, %v3708
        %v3710 = vpop.f32.mrb[0].mxu0
        %3711 = vdwg.mxu0
        %v3712 = vadd.f32 %v3595, %v3698
        %v3713 = vadd.f32 %v3595, %v3701
        %v3714 = vadd.f32 %v3595, %v3706
        %v3715 = vadd.f32 %v3595, %v3709
        %v3716 = vld [vmem:[%s486] sm:$0xff]
        %v3717 = vld [vmem:[%s486 + $0x8] sm:$0xff]
        %s3718 = scalar_lea.vmem [#allocation14], 64
        %v3719 = vld [vmem:[%s3718] sm:$0xf]
        %v3720 = vld [vmem:[%s3718 + $0x4] sm:$0xf]
        %v3721 = vld [vmem:[%s3718 + $0x8] sm:$0xf]
        %v3722 = vld [vmem:[%s3718 + $0xc] sm:$0xf]
        %v3723 = vld [vmem:[%s3718 + $0x10] sm:$0xf]
        %v3724 = vld [vmem:[%s3718 + $0x14] sm:$0xf]
        %v3725 = vld [vmem:[%s3718 + $0x18] sm:$0xf]
        %v3726 = vld [vmem:[%s3718 + $0x1c] sm:$0xf]
        %v3727 = vld [vmem:[%s3718 + $0x20] sm:$0xf]
        %v3728 = vld [vmem:[%s3718 + $0x24] sm:$0xf]
        %v3729 = vld [vmem:[%s3718 + $0x28] sm:$0xf]
        %v3730 = vld [vmem:[%s3718 + $0x2c] sm:$0xf]
        %v3731 = vld [vmem:[%s3718 + $0x30] sm:$0xf]
        %v3732 = vld [vmem:[%s3718 + $0x34] sm:$0xf]
        %v3733 = vld [vmem:[%s3718 + $0x38] sm:$0xf]
        %v3734 = vld [vmem:[%s3718 + $0x3c] sm:$0xf]
        %v3751 = vunpack.c.l.b16 %v3719
        %v3752 = vunpack.c.l.b16 %v3720
        %v3753 = vunpack.c.l.b16 %v3721
        %v3754 = vunpack.c.l.b16 %v3722
        %v3755 = vunpack.c.l.b16 %v3723
        %v3756 = vunpack.c.l.b16 %v3724
        %v3757 = vunpack.c.l.b16 %v3725
        %v3758 = vunpack.c.l.b16 %v3726
        %v3759 = vunpack.c.l.b16 %v3727
        %v3760 = vunpack.c.l.b16 %v3728
        %v3761 = vunpack.c.l.b16 %v3729
        %v3762 = vunpack.c.l.b16 %v3730
        %v3763 = vunpack.c.l.b16 %v3731
        %v3764 = vunpack.c.l.b16 %v3732
        %v3765 = vunpack.c.l.b16 %v3733
        %v3766 = vunpack.c.l.b16 %v3734
        %v3767 = vpack.c.b16 %v3752, %v3751
        %v3768 = vpack.c.b16 %v3754, %v3753
        %v3769 = vpack.c.b16 %v3756, %v3755
        %v3770 = vpack.c.b16 %v3758, %v3757
        %v3771 = vpack.c.b16 %v3760, %v3759
        %v3772 = vpack.c.b16 %v3762, %v3761
        %v3773 = vpack.c.b16 %v3764, %v3763
        %v3774 = vpack.c.b16 %v3766, %v3765
        %3783 = vmatprep.subr.bf16.mxu0 0
        %3784 = vmatpush1.bf16.msra.mxu0 %v3767
        %3785 = vmatprep.subr.bf16.mxu0 0
        %3786 = vmatpush1.bf16.msra.mxu0 %v3768
        %3787 = vmatprep.subr.bf16.mxu0 0
        %3788 = vmatpush1.bf16.msra.mxu0 %v3769
        %3789 = vmatprep.subr.bf16.mxu0 0
        %3790 = vmatpush1.bf16.msra.mxu0 %v3770
        %3791 = vmatprep.subr.bf16.mxu0 0
        %3792 = vmatpush1.bf16.msra.mxu0 %v3771
        %3793 = vmatprep.subr.bf16.mxu0 0
        %3794 = vmatpush1.bf16.msra.mxu0 %v3772
        %3795 = vmatprep.subr.bf16.mxu0 0
        %3796 = vmatpush1.bf16.msra.mxu0 %v3773
        %3797 = vmatprep.subr.bf16.mxu0 0
        %3798 = vmatpush1.bf16.msra.mxu0 %v3774
        %3799 = vmatprep.subr.bf16.mxu0 0
        %3800 = vmatpush1.bf16.msra.mxu0 0
        %3801 = vmatprep.subr.bf16.mxu0 0
        %3802 = vmatpush1.bf16.msra.mxu0 0
        %3803 = vmatprep.subr.bf16.mxu0 0
        %3804 = vmatpush1.bf16.msra.mxu0 0
        %3805 = vmatprep.subr.bf16.mxu0 0
        %3806 = vmatpush1.bf16.msra.mxu0 0
        %3807 = vmatprep.subr.bf16.mxu0 0
        %3808 = vmatpush1.bf16.msra.mxu0 0
        %3809 = vmatprep.subr.bf16.mxu0 0
        %3810 = vmatpush1.bf16.msra.mxu0 0
        %3811 = vmatprep.subr.bf16.mxu0 0
        %3812 = vmatpush1.bf16.msra.mxu0 0
        %3813 = vmatprep.subr.bf16.mxu0 0
        %3814 = vmatpush1.bf16.msra.mxu0 0
        %3815 = vmatprep.mubr.bf16.mxu0 0
        %3816 = vmatmul.mubr.bf16.gmra.mrb[0].mxu0 %v3716
        %v3817 = vpop.f32.mrb[0].mxu0
        %v3818 = vadd.f32 0.0, %v3817
        %v3819 = vpop.f32.mrb[0].mxu0
        %v3820 = vpop.f32.mrb[0].mxu0
        %v3821 = vadd.f32 0.0, %v3820
        %v3822 = vpop.f32.mrb[0].mxu0
        %3823 = vmatprep.mubr.bf16.mxu0 0
        %3824 = vmatmul.mubr.bf16.gmra.mrb[0].mxu0 %v3717
        %v3825 = vpop.f32.mrb[0].mxu0
        %v3826 = vadd.f32 0.0, %v3825
        %v3827 = vpop.f32.mrb[0].mxu0
        %v3828 = vpop.f32.mrb[0].mxu0
        %v3829 = vadd.f32 0.0, %v3828
        %v3830 = vpop.f32.mrb[0].mxu0
        %3831 = vdwg.mxu0
        %v3832 = vadd.f32 %v3712, %v3818
        %v3833 = vadd.f32 %v3713, %v3821
        %v3834 = vadd.f32 %v3714, %v3826
        %v3835 = vadd.f32 %v3715, %v3829
        %v3836 = vld [vmem:[#allocation4 + $0x8] sm:$0xff]
        %v3837 = vld [vmem:[#allocation4 + $0x10] sm:$0xff]
        %s3838 = scalar_lea.vmem [#allocation14], 128
        %v3839 = vld [vmem:[%s3838] sm:$0xf]
        %v3840 = vld [vmem:[%s3838 + $0x4] sm:$0xf]
        %v3841 = vld [vmem:[%s3838 + $0x8] sm:$0xf]
        %v3842 = vld [vmem:[%s3838 + $0xc] sm:$0xf]
        %v3843 = vld [vmem:[%s3838 + $0x10] sm:$0xf]
        %v3844 = vld [vmem:[%s3838 + $0x14] sm:$0xf]
        %v3845 = vld [vmem:[%s3838 + $0x18] sm:$0xf]
        %v3846 = vld [vmem:[%s3838 + $0x1c] sm:$0xf]
        %v3847 = vld [vmem:[%s3838 + $0x20] sm:$0xf]
        %v3848 = vld [vmem:[%s3838 + $0x24] sm:$0xf]
        %v3849 = vld [vmem:[%s3838 + $0x28] sm:$0xf]
        %v3850 = vld [vmem:[%s3838 + $0x2c] sm:$0xf]
        %v3851 = vld [vmem:[%s3838 + $0x30] sm:$0xf]
        %v3852 = vld [vmem:[%s3838 + $0x34] sm:$0xf]
        %v3853 = vld [vmem:[%s3838 + $0x38] sm:$0xf]
        %v3854 = vld [vmem:[%s3838 + $0x3c] sm:$0xf]
        %v3871 = vunpack.c.l.b16 %v3839
        %v3872 = vunpack.c.l.b16 %v3840
        %v3873 = vunpack.c.l.b16 %v3841
        %v3874 = vunpack.c.l.b16 %v3842
        %v3875 = vunpack.c.l.b16 %v3843
        %v3876 = vunpack.c.l.b16 %v3844
        %v3877 = vunpack.c.l.b16 %v3845
        %v3878 = vunpack.c.l.b16 %v3846
        %v3879 = vunpack.c.l.b16 %v3847
        %v3880 = vunpack.c.l.b16 %v3848
        %v3881 = vunpack.c.l.b16 %v3849
        %v3882 = vunpack.c.l.b16 %v3850
        %v3883 = vunpack.c.l.b16 %v3851
        %v3884 = vunpack.c.l.b16 %v3852
        %v3885 = vunpack.c.l.b16 %v3853
        %v3886 = vunpack.c.l.b16 %v3854
        %v3887 = vpack.c.b16 %v3872, %v3871
        %v3888 = vpack.c.b16 %v3874, %v3873
        %v3889 = vpack.c.b16 %v3876, %v3875
        %v3890 = vpack.c.b16 %v3878, %v3877
        %v3891 = vpack.c.b16 %v3880, %v3879
        %v3892 = vpack.c.b16 %v3882, %v3881
        %v3893 = vpack.c.b16 %v3884, %v3883
        %v3894 = vpack.c.b16 %v3886, %v3885
        %3903 = vmatprep.subr.bf16.mxu0 0
        %3904 = vmatpush1.bf16.msra.mxu0 %v3887
        %3905 = vmatprep.subr.bf16.mxu0 0
        %3906 = vmatpush1.bf16.msra.mxu0 %v3888
        %3907 = vmatprep.subr.bf16.mxu0 0
        %3908 = vmatpush1.bf16.msra.mxu0 %v3889
        %3909 = vmatprep.subr.bf16.mxu0 0
        %3910 = vmatpush1.bf16.msra.mxu0 %v3890
        %3911 = vmatprep.subr.bf16.mxu0 0
        %3912 = vmatpush1.bf16.msra.mxu0 %v3891
        %3913 = vmatprep.subr.bf16.mxu0 0
        %3914 = vmatpush1.bf16.msra.mxu0 %v3892
        %3915 = vmatprep.subr.bf16.mxu0 0
        %3916 = vmatpush1.bf16.msra.mxu0 %v3893
        %3917 = vmatprep.subr.bf16.mxu0 0
        %3918 = vmatpush1.bf16.msra.mxu0 %v3894
        %3919 = vmatprep.subr.bf16.mxu0 0
        %3920 = vmatpush1.bf16.msra.mxu0 0
        %3921 = vmatprep.subr.bf16.mxu0 0
        %3922 = vmatpush1.bf16.msra.mxu0 0
        %3923 = vmatprep.subr.bf16.mxu0 0
        %3924 = vmatpush1.bf16.msra.mxu0 0
        %3925 = vmatprep.subr.bf16.mxu0 0
        %3926 = vmatpush1.bf16.msra.mxu0 0
        %3927 = vmatprep.subr.bf16.mxu0 0
        %3928 = vmatpush1.bf16.msra.mxu0 0
        %3929 = vmatprep.subr.bf16.mxu0 0
        %3930 = vmatpush1.bf16.msra.mxu0 0
        %3931 = vmatprep.subr.bf16.mxu0 0
        %3932 = vmatpush1.bf16.msra.mxu0 0
        %3933 = vmatprep.subr.bf16.mxu0 0
        %3934 = vmatpush1.bf16.msra.mxu0 0
        %3935 = vmatprep.mubr.bf16.mxu0 0
        %3936 = vmatmul.mubr.bf16.gmra.mrb[0].mxu0 %v3836
        %v3937 = vpop.f32.mrb[0].mxu0
        %v3938 = vadd.f32 0.0, %v3937
        %v3939 = vpop.f32.mrb[0].mxu0
        %v3940 = vpop.f32.mrb[0].mxu0
        %v3941 = vadd.f32 0.0, %v3940
        %v3942 = vpop.f32.mrb[0].mxu0
        %3943 = vmatprep.mubr.bf16.mxu0 0
        %3944 = vmatmul.mubr.bf16.gmra.mrb[0].mxu0 %v3837
        %v3945 = vpop.f32.mrb[0].mxu0
        %v3946 = vadd.f32 0.0, %v3945
        %v3947 = vpop.f32.mrb[0].mxu0
        %v3948 = vpop.f32.mrb[0].mxu0
        %v3949 = vadd.f32 0.0, %v3948
        %v3950 = vpop.f32.mrb[0].mxu0
        %3951 = vdwg.mxu0
        %v3952 = vadd.f32 %v3832, %v3938
        %v3953 = vadd.f32 %v3833, %v3941
        %v3954 = vadd.f32 %v3834, %v3946
        %v3955 = vadd.f32 %v3835, %v3949
        %v3956 = vld [vmem:[%s486 + $0x8] sm:$0xff]
        %v3957 = vld [vmem:[%s486 + $0x10] sm:$0xff]
        %s3958 = scalar_lea.vmem [#allocation14], 192
        %v3959 = vld [vmem:[%s3958] sm:$0xf]
        %v3960 = vld [vmem:[%s3958 + $0x4] sm:$0xf]
        %v3961 = vld [vmem:[%s3958 + $0x8] sm:$0xf]
        %v3962 = vld [vmem:[%s3958 + $0xc] sm:$0xf]
        %v3963 = vld [vmem:[%s3958 + $0x10] sm:$0xf]
        %v3964 = vld [vmem:[%s3958 + $0x14] sm:$0xf]
        %v3965 = vld [vmem:[%s3958 + $0x18] sm:$0xf]
        %v3966 = vld [vmem:[%s3958 + $0x1c] sm:$0xf]
        %v3967 = vld [vmem:[%s3958 + $0x20] sm:$0xf]
        %v3968 = vld [vmem:[%s3958 + $0x24] sm:$0xf]
        %v3969 = vld [vmem:[%s3958 + $0x28] sm:$0xf]
        %v3970 = vld [vmem:[%s3958 + $0x2c] sm:$0xf]
        %v3971 = vld [vmem:[%s3958 + $0x30] sm:$0xf]
        %v3972 = vld [vmem:[%s3958 + $0x34] sm:$0xf]
        %v3973 = vld [vmem:[%s3958 + $0x38] sm:$0xf]
        %v3974 = vld [vmem:[%s3958 + $0x3c] sm:$0xf]
        %v3991 = vunpack.c.l.b16 %v3959
        %v3992 = vunpack.c.l.b16 %v3960
        %v3993 = vunpack.c.l.b16 %v3961
        %v3994 = vunpack.c.l.b16 %v3962
        %v3995 = vunpack.c.l.b16 %v3963
        %v3996 = vunpack.c.l.b16 %v3964
        %v3997 = vunpack.c.l.b16 %v3965
        %v3998 = vunpack.c.l.b16 %v3966
        %v3999 = vunpack.c.l.b16 %v3967
        %v4000 = vunpack.c.l.b16 %v3968
        %v4001 = vunpack.c.l.b16 %v3969
        %v4002 = vunpack.c.l.b16 %v3970
        %v4003 = vunpack.c.l.b16 %v3971
        %v4004 = vunpack.c.l.b16 %v3972
        %v4005 = vunpack.c.l.b16 %v3973
        %v4006 = vunpack.c.l.b16 %v3974
        %v4007 = vpack.c.b16 %v3992, %v3991
        %v4008 = vpack.c.b16 %v3994, %v3993
        %v4009 = vpack.c.b16 %v3996, %v3995
        %v4010 = vpack.c.b16 %v3998, %v3997
        %v4011 = vpack.c.b16 %v4000, %v3999
        %v4012 = vpack.c.b16 %v4002, %v4001
        %v4013 = vpack.c.b16 %v4004, %v4003
        %v4014 = vpack.c.b16 %v4006, %v4005
        %4023 = vmatprep.subr.bf16.mxu0 0
        %4024 = vmatpush1.bf16.msra.mxu0 %v4007
        %4025 = vmatprep.subr.bf16.mxu0 0
        %4026 = vmatpush1.bf16.msra.mxu0 %v4008
        %4027 = vmatprep.subr.bf16.mxu0 0
        %4028 = vmatpush1.bf16.msra.mxu0 %v4009
        %4029 = vmatprep.subr.bf16.mxu0 0
        %4030 = vmatpush1.bf16.msra.mxu0 %v4010
        %4031 = vmatprep.subr.bf16.mxu0 0
        %4032 = vmatpush1.bf16.msra.mxu0 %v4011
        %4033 = vmatprep.subr.bf16.mxu0 0
        %4034 = vmatpush1.bf16.msra.mxu0 %v4012
        %4035 = vmatprep.subr.bf16.mxu0 0
        %4036 = vmatpush1.bf16.msra.mxu0 %v4013
        %4037 = vmatprep.subr.bf16.mxu0 0
        %4038 = vmatpush1.bf16.msra.mxu0 %v4014
        %4039 = vmatprep.subr.bf16.mxu0 0
        %4040 = vmatpush1.bf16.msra.mxu0 0
        %4041 = vmatprep.subr.bf16.mxu0 0
        %4042 = vmatpush1.bf16.msra.mxu0 0
        %4043 = vmatprep.subr.bf16.mxu0 0
        %4044 = vmatpush1.bf16.msra.mxu0 0
        %4045 = vmatprep.subr.bf16.mxu0 0
        %4046 = vmatpush1.bf16.msra.mxu0 0
        %4047 = vmatprep.subr.bf16.mxu0 0
        %4048 = vmatpush1.bf16.msra.mxu0 0
        %4049 = vmatprep.subr.bf16.mxu0 0
        %4050 = vmatpush1.bf16.msra.mxu0 0
        %4051 = vmatprep.subr.bf16.mxu0 0
        %4052 = vmatpush1.bf16.msra.mxu0 0
        %4053 = vmatprep.subr.bf16.mxu0 0
        %4054 = vmatpush1.bf16.msra.mxu0 0
        %4055 = vmatprep.mubr.bf16.mxu0 0
        %4056 = vmatmul.mubr.bf16.gmra.mrb[0].mxu0 %v3956
        %v4057 = vpop.f32.mrb[0].mxu0
        %v4058 = vadd.f32 0.0, %v4057
        %v4059 = vpop.f32.mrb[0].mxu0
        %v4060 = vpop.f32.mrb[0].mxu0
        %v4061 = vadd.f32 0.0, %v4060
        %v4062 = vpop.f32.mrb[0].mxu0
        %4063 = vmatprep.mubr.bf16.mxu0 0
        %4064 = vmatmul.mubr.bf16.gmra.mrb[0].mxu0 %v3957
        %v4065 = vpop.f32.mrb[0].mxu0
        %v4066 = vadd.f32 0.0, %v4065
        %v4067 = vpop.f32.mrb[0].mxu0
        %v4068 = vpop.f32.mrb[0].mxu0
        %v4069 = vadd.f32 0.0, %v4068
        %v4070 = vpop.f32.mrb[0].mxu0
        %4071 = vdwg.mxu0
        %v4072 = vadd.f32 %v3952, %v4058
        %v4073 = vadd.f32 %v3953, %v4061
        %v4074 = vadd.f32 %v3954, %v4066
        %v4075 = vadd.f32 %v3955, %v4069
        %vm4076 = vcmp.ge.f32.partialorder %v4072, 0.0
        %vm4077 = vcmp.ge.f32.partialorder %v4073, 0.0
        %vm4078 = vcmp.ge.f32.partialorder %v4074, 0.0
        %vm4079 = vcmp.ge.f32.partialorder %v4075, 0.0
        %v4080 = vmul.f32 %v4072, 0.2
        %v4081 = vmul.f32 %v4073, 0.2
        %v4082 = vmul.f32 %v4074, 0.2
        %v4083 = vmul.f32 %v4075, 0.2
        %v4084 = vsel %vm4076, %v4072, %v4080
        %v4085 = vsel %vm4077, %v4073, %v4081
        %v4086 = vsel %vm4078, %v4074, %v4082
        %v4087 = vsel %vm4079, %v4075, %v4083
        %v4088 = vpack.c.bf16 %v4085, %v4084
        %v4089 = vpack.c.bf16 %v4087, %v4086
        %4090 = vst [vmem:[%s489] sm:$0xff] %v4088
        %4091 = vst [vmem:[#allocation5 + $0x8] sm:$0xff] %v4089
        %v4092 = vld [vmem:[%s10] sm:$0x1]
        %v4094 = vlaneseq
        %v4095 = vshrl.u32 %v4094, 7
        %v4096 = vsub.s32 0, %v4095
        %v4097 = vrot.slane %v4092, %v4096
        %v4099 = vld [vmem:[#allocation5] sm:$0xff]
        %v4100 = vld [vmem:[#allocation15] sm:$0xf]
        %v4101 = vld [vmem:[#allocation15 + $0x4] sm:$0xf]
        %v4102 = vld [vmem:[#allocation15 + $0x8] sm:$0xf]
        %v4103 = vld [vmem:[#allocation15 + $0xc] sm:$0xf]
        %v4104 = vld [vmem:[#allocation15 + $0x10] sm:$0xf]
        %v4105 = vld [vmem:[#allocation15 + $0x14] sm:$0xf]
        %v4106 = vld [vmem:[#allocation15 + $0x18] sm:$0xf]
        %v4107 = vld [vmem:[#allocation15 + $0x1c] sm:$0xf]
        %v4108 = vld [vmem:[#allocation15 + $0x20] sm:$0xf]
        %v4109 = vld [vmem:[#allocation15 + $0x24] sm:$0xf]
        %v4110 = vld [vmem:[#allocation15 + $0x28] sm:$0xf]
        %v4111 = vld [vmem:[#allocation15 + $0x2c] sm:$0xf]
        %v4112 = vld [vmem:[#allocation15 + $0x30] sm:$0xf]
        %v4113 = vld [vmem:[#allocation15 + $0x34] sm:$0xf]
        %v4114 = vld [vmem:[#allocation15 + $0x38] sm:$0xf]
        %v4115 = vld [vmem:[#allocation15 + $0x3c] sm:$0xf]
        %v4132 = vunpack.c.l.b16 %v4100
        %v4133 = vunpack.c.l.b16 %v4101
        %v4134 = vunpack.c.l.b16 %v4102
        %v4135 = vunpack.c.l.b16 %v4103
        %v4136 = vunpack.c.l.b16 %v4104
        %v4137 = vunpack.c.l.b16 %v4105
        %v4138 = vunpack.c.l.b16 %v4106
        %v4139 = vunpack.c.l.b16 %v4107
        %v4140 = vunpack.c.l.b16 %v4108
        %v4141 = vunpack.c.l.b16 %v4109
        %v4142 = vunpack.c.l.b16 %v4110
        %v4143 = vunpack.c.l.b16 %v4111
        %v4144 = vunpack.c.l.b16 %v4112
        %v4145 = vunpack.c.l.b16 %v4113
        %v4146 = vunpack.c.l.b16 %v4114
        %v4147 = vunpack.c.l.b16 %v4115
        %v4148 = vpack.c.b16 %v4133, %v4132
        %v4149 = vpack.c.b16 %v4135, %v4134
        %v4150 = vpack.c.b16 %v4137, %v4136
        %v4151 = vpack.c.b16 %v4139, %v4138
        %v4152 = vpack.c.b16 %v4141, %v4140
        %v4153 = vpack.c.b16 %v4143, %v4142
        %v4154 = vpack.c.b16 %v4145, %v4144
        %v4155 = vpack.c.b16 %v4147, %v4146
        %4164 = vmatprep.subr.bf16.mxu0 0
        %4165 = vmatpush1.bf16.msra.mxu0 %v4148
        %4166 = vmatprep.subr.bf16.mxu0 0
        %4167 = vmatpush1.bf16.msra.mxu0 %v4149
        %4168 = vmatprep.subr.bf16.mxu0 0
        %4169 = vmatpush1.bf16.msra.mxu0 %v4150
        %4170 = vmatprep.subr.bf16.mxu0 0
        %4171 = vmatpush1.bf16.msra.mxu0 %v4151
        %4172 = vmatprep.subr.bf16.mxu0 0
        %4173 = vmatpush1.bf16.msra.mxu0 %v4152
        %4174 = vmatprep.subr.bf16.mxu0 0
        %4175 = vmatpush1.bf16.msra.mxu0 %v4153
        %4176 = vmatprep.subr.bf16.mxu0 0
        %4177 = vmatpush1.bf16.msra.mxu0 %v4154
        %4178 = vmatprep.subr.bf16.mxu0 0
        %4179 = vmatpush1.bf16.msra.mxu0 %v4155
        %4180 = vmatprep.subr.bf16.mxu0 0
        %4181 = vmatpush1.bf16.msra.mxu0 0
        %4182 = vmatprep.subr.bf16.mxu0 0
        %4183 = vmatpush1.bf16.msra.mxu0 0
        %4184 = vmatprep.subr.bf16.mxu0 0
        %4185 = vmatpush1.bf16.msra.mxu0 0
        %4186 = vmatprep.subr.bf16.mxu0 0
        %4187 = vmatpush1.bf16.msra.mxu0 0
        %4188 = vmatprep.subr.bf16.mxu0 0
        %4189 = vmatpush1.bf16.msra.mxu0 0
        %4190 = vmatprep.subr.bf16.mxu0 0
        %4191 = vmatpush1.bf16.msra.mxu0 0
        %4192 = vmatprep.subr.bf16.mxu0 0
        %4193 = vmatpush1.bf16.msra.mxu0 0
        %4194 = vmatprep.subr.bf16.mxu0 0
        %4195 = vmatpush1.bf16.msra.mxu0 0
        %4196 = vmatprep.mubr.bf16.mxu0 0
        %4197 = vmatmul.mubr.bf16.gmra.mrb[0].mxu0 %v4099
        %v4198 = vpop.f32.mrb[0].mxu0
        %v4199 = vadd.f32 0.0, %v4198
        %v4200 = vpop.f32.mrb[0].mxu0
        %v4201 = vpop.f32.mrb[0].mxu0
        %v4202 = vadd.f32 0.0, %v4201
        %v4203 = vpop.f32.mrb[0].mxu0
        %4204 = vdwg.mxu0
        %v4205 = vadd.f32 %v4097, %v4199
        %v4206 = vadd.f32 %v4097, %v4202
        %v4207 = vld [vmem:[%s489] sm:$0xff]
        %s4208 = scalar_lea.vmem [#allocation15], 64
        %v4209 = vld [vmem:[%s4208] sm:$0xf]
        %v4210 = vld [vmem:[%s4208 + $0x4] sm:$0xf]
        %v4211 = vld [vmem:[%s4208 + $0x8] sm:$0xf]
        %v4212 = vld [vmem:[%s4208 + $0xc] sm:$0xf]
        %v4213 = vld [vmem:[%s4208 + $0x10] sm:$0xf]
        %v4214 = vld [vmem:[%s4208 + $0x14] sm:$0xf]
        %v4215 = vld [vmem:[%s4208 + $0x18] sm:$0xf]
        %v4216 = vld [vmem:[%s4208 + $0x1c] sm:$0xf]
        %v4217 = vld [vmem:[%s4208 + $0x20] sm:$0xf]
        %v4218 = vld [vmem:[%s4208 + $0x24] sm:$0xf]
        %v4219 = vld [vmem:[%s4208 + $0x28] sm:$0xf]
        %v4220 = vld [vmem:[%s4208 + $0x2c] sm:$0xf]
        %v4221 = vld [vmem:[%s4208 + $0x30] sm:$0xf]
        %v4222 = vld [vmem:[%s4208 + $0x34] sm:$0xf]
        %v4223 = vld [vmem:[%s4208 + $0x38] sm:$0xf]
        %v4224 = vld [vmem:[%s4208 + $0x3c] sm:$0xf]
        %v4241 = vunpack.c.l.b16 %v4209
        %v4242 = vunpack.c.l.b16 %v4210
        %v4243 = vunpack.c.l.b16 %v4211
        %v4244 = vunpack.c.l.b16 %v4212
        %v4245 = vunpack.c.l.b16 %v4213
        %v4246 = vunpack.c.l.b16 %v4214
        %v4247 = vunpack.c.l.b16 %v4215
        %v4248 = vunpack.c.l.b16 %v4216
        %v4249 = vunpack.c.l.b16 %v4217
        %v4250 = vunpack.c.l.b16 %v4218
        %v4251 = vunpack.c.l.b16 %v4219
        %v4252 = vunpack.c.l.b16 %v4220
        %v4253 = vunpack.c.l.b16 %v4221
        %v4254 = vunpack.c.l.b16 %v4222
        %v4255 = vunpack.c.l.b16 %v4223
        %v4256 = vunpack.c.l.b16 %v4224
        %v4257 = vpack.c.b16 %v4242, %v4241
        %v4258 = vpack.c.b16 %v4244, %v4243
        %v4259 = vpack.c.b16 %v4246, %v4245
        %v4260 = vpack.c.b16 %v4248, %v4247
        %v4261 = vpack.c.b16 %v4250, %v4249
        %v4262 = vpack.c.b16 %v4252, %v4251
        %v4263 = vpack.c.b16 %v4254, %v4253
        %v4264 = vpack.c.b16 %v4256, %v4255
        %4273 = vmatprep.subr.bf16.mxu0 0
        %4274 = vmatpush1.bf16.msra.mxu0 %v4257
        %4275 = vmatprep.subr.bf16.mxu0 0
        %4276 = vmatpush1.bf16.msra.mxu0 %v4258
        %4277 = vmatprep.subr.bf16.mxu0 0
        %4278 = vmatpush1.bf16.msra.mxu0 %v4259
        %4279 = vmatprep.subr.bf16.mxu0 0
        %4280 = vmatpush1.bf16.msra.mxu0 %v4260
        %4281 = vmatprep.subr.bf16.mxu0 0
        %4282 = vmatpush1.bf16.msra.mxu0 %v4261
        %4283 = vmatprep.subr.bf16.mxu0 0
        %4284 = vmatpush1.bf16.msra.mxu0 %v4262
        %4285 = vmatprep.subr.bf16.mxu0 0
        %4286 = vmatpush1.bf16.msra.mxu0 %v4263
        %4287 = vmatprep.subr.bf16.mxu0 0
        %4288 = vmatpush1.bf16.msra.mxu0 %v4264
        %4289 = vmatprep.subr.bf16.mxu0 0
        %4290 = vmatpush1.bf16.msra.mxu0 0
        %4291 = vmatprep.subr.bf16.mxu0 0
        %4292 = vmatpush1.bf16.msra.mxu0 0
        %4293 = vmatprep.subr.bf16.mxu0 0
        %4294 = vmatpush1.bf16.msra.mxu0 0
        %4295 = vmatprep.subr.bf16.mxu0 0
        %4296 = vmatpush1.bf16.msra.mxu0 0
        %4297 = vmatprep.subr.bf16.mxu0 0
        %4298 = vmatpush1.bf16.msra.mxu0 0
        %4299 = vmatprep.subr.bf16.mxu0 0
        %4300 = vmatpush1.bf16.msra.mxu0 0
        %4301 = vmatprep.subr.bf16.mxu0 0
        %4302 = vmatpush1.bf16.msra.mxu0 0
        %4303 = vmatprep.subr.bf16.mxu0 0
        %4304 = vmatpush1.bf16.msra.mxu0 0
        %4305 = vmatprep.mubr.bf16.mxu0 0
        %4306 = vmatmul.mubr.bf16.gmra.mrb[0].mxu0 %v4207
        %v4307 = vpop.f32.mrb[0].mxu0
        %v4308 = vadd.f32 0.0, %v4307
        %v4309 = vpop.f32.mrb[0].mxu0
        %v4310 = vpop.f32.mrb[0].mxu0
        %v4311 = vadd.f32 0.0, %v4310
        %v4312 = vpop.f32.mrb[0].mxu0
        %4313 = vdwg.mxu0
        %v4314 = vadd.f32 %v4205, %v4308
        %v4315 = vadd.f32 %v4206, %v4311
        %v4316 = vld [vmem:[#allocation5 + $0x8] sm:$0xff]
        %s4317 = scalar_lea.vmem [#allocation15], 128
        %v4318 = vld [vmem:[%s4317] sm:$0xf]
        %v4319 = vld [vmem:[%s4317 + $0x4] sm:$0xf]
        %v4320 = vld [vmem:[%s4317 + $0x8] sm:$0xf]
        %v4321 = vld [vmem:[%s4317 + $0xc] sm:$0xf]
        %v4322 = vld [vmem:[%s4317 + $0x10] sm:$0xf]
        %v4323 = vld [vmem:[%s4317 + $0x14] sm:$0xf]
        %v4324 = vld [vmem:[%s4317 + $0x18] sm:$0xf]
        %v4325 = vld [vmem:[%s4317 + $0x1c] sm:$0xf]
        %v4326 = vld [vmem:[%s4317 + $0x20] sm:$0xf]
        %v4327 = vld [vmem:[%s4317 + $0x24] sm:$0xf]
        %v4328 = vld [vmem:[%s4317 + $0x28] sm:$0xf]
        %v4329 = vld [vmem:[%s4317 + $0x2c] sm:$0xf]
        %v4330 = vld [vmem:[%s4317 + $0x30] sm:$0xf]
        %v4331 = vld [vmem:[%s4317 + $0x34] sm:$0xf]
        %v4332 = vld [vmem:[%s4317 + $0x38] sm:$0xf]
        %v4333 = vld [vmem:[%s4317 + $0x3c] sm:$0xf]
        %v4350 = vunpack.c.l.b16 %v4318
        %v4351 = vunpack.c.l.b16 %v4319
        %v4352 = vunpack.c.l.b16 %v4320
        %v4353 = vunpack.c.l.b16 %v4321
        %v4354 = vunpack.c.l.b16 %v4322
        %v4355 = vunpack.c.l.b16 %v4323
        %v4356 = vunpack.c.l.b16 %v4324
        %v4357 = vunpack.c.l.b16 %v4325
        %v4358 = vunpack.c.l.b16 %v4326
        %v4359 = vunpack.c.l.b16 %v4327
        %v4360 = vunpack.c.l.b16 %v4328
        %v4361 = vunpack.c.l.b16 %v4329
        %v4362 = vunpack.c.l.b16 %v4330
        %v4363 = vunpack.c.l.b16 %v4331
        %v4364 = vunpack.c.l.b16 %v4332
        %v4365 = vunpack.c.l.b16 %v4333
        %v4366 = vpack.c.b16 %v4351, %v4350
        %v4367 = vpack.c.b16 %v4353, %v4352
        %v4368 = vpack.c.b16 %v4355, %v4354
        %v4369 = vpack.c.b16 %v4357, %v4356
        %v4370 = vpack.c.b16 %v4359, %v4358
        %v4371 = vpack.c.b16 %v4361, %v4360
        %v4372 = vpack.c.b16 %v4363, %v4362
        %v4373 = vpack.c.b16 %v4365, %v4364
        %4382 = vmatprep.subr.bf16.mxu0 0
        %4383 = vmatpush1.bf16.msra.mxu0 %v4366
        %4384 = vmatprep.subr.bf16.mxu0 0
        %4385 = vmatpush1.bf16.msra.mxu0 %v4367
        %4386 = vmatprep.subr.bf16.mxu0 0
        %4387 = vmatpush1.bf16.msra.mxu0 %v4368
        %4388 = vmatprep.subr.bf16.mxu0 0
        %4389 = vmatpush1.bf16.msra.mxu0 %v4369
        %4390 = vmatprep.subr.bf16.mxu0 0
        %4391 = vmatpush1.bf16.msra.mxu0 %v4370
        %4392 = vmatprep.subr.bf16.mxu0 0
        %4393 = vmatpush1.bf16.msra.mxu0 %v4371
        %4394 = vmatprep.subr.bf16.mxu0 0
        %4395 = vmatpush1.bf16.msra.mxu0 %v4372
        %4396 = vmatprep.subr.bf16.mxu0 0
        %4397 = vmatpush1.bf16.msra.mxu0 %v4373
        %4398 = vmatprep.subr.bf16.mxu0 0
        %4399 = vmatpush1.bf16.msra.mxu0 0
        %4400 = vmatprep.subr.bf16.mxu0 0
        %4401 = vmatpush1.bf16.msra.mxu0 0
        %4402 = vmatprep.subr.bf16.mxu0 0
        %4403 = vmatpush1.bf16.msra.mxu0 0
        %4404 = vmatprep.subr.bf16.mxu0 0
        %4405 = vmatpush1.bf16.msra.mxu0 0
        %4406 = vmatprep.subr.bf16.mxu0 0
        %4407 = vmatpush1.bf16.msra.mxu0 0
        %4408 = vmatprep.subr.bf16.mxu0 0
        %4409 = vmatpush1.bf16.msra.mxu0 0
        %4410 = vmatprep.subr.bf16.mxu0 0
        %4411 = vmatpush1.bf16.msra.mxu0 0
        %4412 = vmatprep.subr.bf16.mxu0 0
        %4413 = vmatpush1.bf16.msra.mxu0 0
        %4414 = vmatprep.mubr.bf16.mxu0 0
        %4415 = vmatmul.mubr.bf16.gmra.mrb[0].mxu0 %v4316
        %v4416 = vpop.f32.mrb[0].mxu0
        %v4417 = vadd.f32 0.0, %v4416
        %v4418 = vpop.f32.mrb[0].mxu0
        %v4419 = vpop.f32.mrb[0].mxu0
        %v4420 = vadd.f32 0.0, %v4419
        %v4421 = vpop.f32.mrb[0].mxu0
        %4422 = vdwg.mxu0
        %v4423 = vadd.f32 %v4314, %v4417
        %v4424 = vadd.f32 %v4315, %v4420
        %v4425 = vld [vmem:[%s489 + $0x8] sm:$0xff]
        %s4426 = scalar_lea.vmem [#allocation15], 192
        %v4427 = vld [vmem:[%s4426] sm:$0xf]
        %v4428 = vld [vmem:[%s4426 + $0x4] sm:$0xf]
        %v4429 = vld [vmem:[%s4426 + $0x8] sm:$0xf]
        %v4430 = vld [vmem:[%s4426 + $0xc] sm:$0xf]
        %v4431 = vld [vmem:[%s4426 + $0x10] sm:$0xf]
        %v4432 = vld [vmem:[%s4426 + $0x14] sm:$0xf]
        %v4433 = vld [vmem:[%s4426 + $0x18] sm:$0xf]
        %v4434 = vld [vmem:[%s4426 + $0x1c] sm:$0xf]
        %v4435 = vld [vmem:[%s4426 + $0x20] sm:$0xf]
        %v4436 = vld [vmem:[%s4426 + $0x24] sm:$0xf]
        %v4437 = vld [vmem:[%s4426 + $0x28] sm:$0xf]
        %v4438 = vld [vmem:[%s4426 + $0x2c] sm:$0xf]
        %v4439 = vld [vmem:[%s4426 + $0x30] sm:$0xf]
        %v4440 = vld [vmem:[%s4426 + $0x34] sm:$0xf]
        %v4441 = vld [vmem:[%s4426 + $0x38] sm:$0xf]
        %v4442 = vld [vmem:[%s4426 + $0x3c] sm:$0xf]
        %v4459 = vunpack.c.l.b16 %v4427
        %v4460 = vunpack.c.l.b16 %v4428
        %v4461 = vunpack.c.l.b16 %v4429
        %v4462 = vunpack.c.l.b16 %v4430
        %v4463 = vunpack.c.l.b16 %v4431
        %v4464 = vunpack.c.l.b16 %v4432
        %v4465 = vunpack.c.l.b16 %v4433
        %v4466 = vunpack.c.l.b16 %v4434
        %v4467 = vunpack.c.l.b16 %v4435
        %v4468 = vunpack.c.l.b16 %v4436
        %v4469 = vunpack.c.l.b16 %v4437
        %v4470 = vunpack.c.l.b16 %v4438
        %v4471 = vunpack.c.l.b16 %v4439
        %v4472 = vunpack.c.l.b16 %v4440
        %v4473 = vunpack.c.l.b16 %v4441
        %v4474 = vunpack.c.l.b16 %v4442
        %v4475 = vpack.c.b16 %v4460, %v4459
        %v4476 = vpack.c.b16 %v4462, %v4461
        %v4477 = vpack.c.b16 %v4464, %v4463
        %v4478 = vpack.c.b16 %v4466, %v4465
        %v4479 = vpack.c.b16 %v4468, %v4467
        %v4480 = vpack.c.b16 %v4470, %v4469
        %v4481 = vpack.c.b16 %v4472, %v4471
        %v4482 = vpack.c.b16 %v4474, %v4473
        %4491 = vmatprep.subr.bf16.mxu0 0
        %4492 = vmatpush1.bf16.msra.mxu0 %v4475
        %4493 = vmatprep.subr.bf16.mxu0 0
        %4494 = vmatpush1.bf16.msra.mxu0 %v4476
        %4495 = vmatprep.subr.bf16.mxu0 0
        %4496 = vmatpush1.bf16.msra.mxu0 %v4477
        %4497 = vmatprep.subr.bf16.mxu0 0
        %4498 = vmatpush1.bf16.msra.mxu0 %v4478
        %4499 = vmatprep.subr.bf16.mxu0 0
        %4500 = vmatpush1.bf16.msra.mxu0 %v4479
        %4501 = vmatprep.subr.bf16.mxu0 0
        %4502 = vmatpush1.bf16.msra.mxu0 %v4480
        %4503 = vmatprep.subr.bf16.mxu0 0
        %4504 = vmatpush1.bf16.msra.mxu0 %v4481
        %4505 = vmatprep.subr.bf16.mxu0 0
        %4506 = vmatpush1.bf16.msra.mxu0 %v4482
        %4507 = vmatprep.subr.bf16.mxu0 0
        %4508 = vmatpush1.bf16.msra.mxu0 0
        %4509 = vmatprep.subr.bf16.mxu0 0
        %4510 = vmatpush1.bf16.msra.mxu0 0
        %4511 = vmatprep.subr.bf16.mxu0 0
        %4512 = vmatpush1.bf16.msra.mxu0 0
        %4513 = vmatprep.subr.bf16.mxu0 0
        %4514 = vmatpush1.bf16.msra.mxu0 0
        %4515 = vmatprep.subr.bf16.mxu0 0
        %4516 = vmatpush1.bf16.msra.mxu0 0
        %4517 = vmatprep.subr.bf16.mxu0 0
        %4518 = vmatpush1.bf16.msra.mxu0 0
        %4519 = vmatprep.subr.bf16.mxu0 0
        %4520 = vmatpush1.bf16.msra.mxu0 0
        %4521 = vmatprep.subr.bf16.mxu0 0
        %4522 = vmatpush1.bf16.msra.mxu0 0
        %4523 = vmatprep.mubr.bf16.mxu0 0
        %4524 = vmatmul.mubr.bf16.gmra.mrb[0].mxu0 %v4425
        %v4525 = vpop.f32.mrb[0].mxu0
        %v4526 = vadd.f32 0.0, %v4525
        %v4527 = vpop.f32.mrb[0].mxu0
        %v4528 = vpop.f32.mrb[0].mxu0
        %v4529 = vadd.f32 0.0, %v4528
        %v4530 = vpop.f32.mrb[0].mxu0
        %4531 = vdwg.mxu0
        %v4532 = vadd.f32 %v4423, %v4526
        %v4533 = vadd.f32 %v4424, %v4529
        %4534 = vst [vmem:[%s477] sm:$0xff] %v4532
        %4535 = vst [vmem:[%s477 + $0x8] sm:$0xff] %v4533
        %s4536 = sand.u32 %s275, 1
        %s4537 = scalar_lea.sflag [#allocation8], %s4536
        %s4538 = sand.u32 %s275, 1
        %s4539 = smul.addr %s4538, 16
        %s4540 = scalar_lea.vmem [#allocation17], %s4539
        // Predicated region
        $region89: #{tpu_custom_call.1} parent=63 // pred_check
          %p4541 = pneg %p285
        $region90: #{tpu_custom_call.1} parent=63 // pred_check_branch
          %4543 = sbr.rel (%p4541) target = $region92
        $region91: #{tpu_custom_call.1} parent=63 // pred_region
          %s4545 = ssub.s32 256, 256
          %4546 = vsyncadd %s4537, %s4545
          %s4547 = smul.addr %s31, 2
          %s4548 = smul.addr %s4547, 128
          %s4549 = scalar_lea.hbm %s11, %s4548
          %s4550 = sshll.u32 %s4540, 4
          %s4551 = int_to_ptr.vmem [resolvable:$true] %s4550
          %4556 = dma.vmem_to_hbm [thread:$0]  %s4551, 256, %s4549, %s4537, 128, 128, 8
        $region92: #{tpu_custom_call.1} parent=63 // pred_fallthru
          _
      $region64: #{tpu_custom_call.1} parent=5 // pred_fallthru
        _
      %p4557 = scmp.le.s32.totalorder 2, %s26
      // Predicated region
      $region93: #{tpu_custom_call.1} parent=5 // pred_check
        %p4558 = pneg %p4557
      $region94: #{tpu_custom_call.1} parent=5 // pred_check_branch
        %4560 = sbr.rel (%p4558) target = $region96
      $region95: #{tpu_custom_call.1} parent=5 // pred_region
        %s4561 = ssub.s32 %s26, 2
        // Predicated region
        $region97: #{tpu_custom_call.1} parent=95 // pred_check
          %p4562 = pneg %p291
        $region98: #{tpu_custom_call.1} parent=95 // pred_check_branch
          %4564 = sbr.rel (%p4562) target = $region100
        $region99: #{tpu_custom_call.1} parent=95 // pred_region
          %s4565 = sand.u32 %s276, 1
          %s4566 = scalar_lea.sflag [#allocation8], %s4565
          %s4567 = sand.u32 %s276, 1
          %s4568 = smul.addr %s4567, 16
          %s4569 = scalar_lea.vmem [#allocation17], %s4568
          %4570 = dma.done %s4566, 256
        $region100: #{tpu_custom_call.1} parent=95 // pred_fallthru
          _
      $region96: #{tpu_custom_call.1} parent=5 // pred_fallthru
        _
    $region6: #{tpu_custom_call.1} parent=1 // loop_footer
      %s30 = sadd.s32 1, %s26
    $region7: #{tpu_custom_call.1} parent=1 // loop_footer_branch
      %25 = sbr.rel target = $region3
    $region8: #{tpu_custom_call.1} parent=1 // loop_exit
      _
    %4571 = vsyncpa [#allocation7], 1
    %s4572 = scalar_lea.sflag [#allocation7], 1
    %4573 = vsyncpa %s4572, 1
    %4574 = vsyncpa [#allocation10], 1
    %4575 = vsyncpa [#allocation13], 1
    %4576 = vsyncpa [#allocation16], 1
    %4577 = vsyncpa [#allocation8], 1
    %s4578 = scalar_lea.sflag [#allocation8], 1
    %4579 = vsyncpa %s4578, 1

</llo_original>
